<compile_context>
chip_gen: v7x
topology: tpu7x:2x2x1
jax: 0.10.0
libtpu: 0.0.40
codegen_flags: <defaults>
</compile_context>

<pallas_src>
import functools

import jax
import jax.numpy as jnp
from jax import lax
from jax.experimental import pallas as pl
from jax.experimental.pallas import tpu as pltpu


def _layer_norm_2d(z, eps=1e-6):
    # F.layer_norm(x, x.size()[1:], eps=1e-6): normalize over BOTH (S, E) dims per batch
    # element, no affine params, biased variance.  Two-pass (center first) statistics to
    # avoid catastrophic cancellation when the residual stream has a large mean.
    mu = jnp.mean(z)
    zc = z - mu
    var = jnp.mean(zc * zc)
    return zc * lax.rsqrt(var + eps)


def transformer_layer_kernel(x_ref, wqkv_ref, bqkv_ref, wo_ref, bo_ref,
                             w1_ref, b1_ref, w2_ref, b2_ref, o_ref,
                             *, num_heads, causal, mm_dtype, approx_recip,
                             q_tile, kv_tile, f_chunk):
    S, E = x_ref.shape
    dh = E // num_heads
    scale = 1.0 / float(dh) ** 0.5

    # Read x once; single cast to the matmul dtype, single f32 copy for the residual.
    x_raw = x_ref[...]
    x_f32 = x_raw.astype(jnp.float32)
    xm = x_raw.astype(mm_dtype)

    # ---------------- fused QKV projection: one (S,E)@(E,3E) MXU matmul ----------------
    qkv = jnp.dot(xm, wqkv_ref[...],
                  preferred_element_type=jnp.float32) + bqkv_ref[...]      # (S, 3E) f32

    def split_heads(z2):                                    # (S, E) -> (H, S, dh)
        # Static lane slices stacked along a NEW leading (major) axis.
        # TODO(synk): for dh not a multiple of 128 these slices are not lane-aligned; if
        # the lowered MLIR shows per-head XLU copies/transposes on k in 'hqd,hkd->hqk',
        # build k directly in (H, dh, S) layout here (or prefer dh=128 heads).
        return jnp.stack(
            [z2[:, h * dh:(h + 1) * dh] for h in range(num_heads)], axis=0)

    q_heads = split_heads(qkv[:, :E] * scale).astype(mm_dtype)             # (H, S, dh)
    k_heads = split_heads(qkv[:, E:2 * E]).astype(mm_dtype)                # (H, S, dh)
    v_heads = split_heads(qkv[:, 2 * E:]).astype(mm_dtype)                 # (H, S, dh)

    # ---------------- flash-style attention over query / key-value tiles --------------
    # Bounded activation residency: only (H, q_tile, kv_tile) scores live at any time.
    # Loop trip counts are static (trace-time), so all slices below are static.
    n_q = S // q_tile
    n_kv = S // kv_tile
    attn_rows = []
    for qi in range(n_q):
        q_t = q_heads[:, qi * q_tile:(qi + 1) * q_tile, :]                 # (H, Tq, dh)
        m_i = jnp.full((num_heads, q_tile, 1), -jnp.inf, jnp.float32)
        l_i = jnp.zeros((num_heads, q_tile, 1), jnp.float32)
        acc = jnp.zeros((num_heads, q_tile, dh), jnp.float32)
        # Causal: skip key tiles that are entirely in the future for this query tile.
        kv_hi = (-(-((qi + 1) * q_tile) // kv_tile)) if causal else n_kv
        for ki in range(kv_hi):
            k_t = k_heads[:, ki * kv_tile:(ki + 1) * kv_tile, :]           # (H, Tk, dh)
            v_t = v_heads[:, ki * kv_tile:(ki + 1) * kv_tile, :]
            s = jnp.einsum("hqd,hkd->hqk", q_t, k_t,
                           preferred_element_type=jnp.float32)             # (H,Tq,Tk) f32
            if causal and (ki + 1) * kv_tile - 1 > qi * q_tile:
                # Only tiles that cross the diagonal need masking.
                row = lax.broadcasted_iota(jnp.int32, (q_tile, kv_tile), 0) + qi * q_tile
                col = lax.broadcasted_iota(jnp.int32, (q_tile, kv_tile), 1) + ki * kv_tile
                s = jnp.where((col > row)[None, :, :], -jnp.inf, s)
            m_new = jnp.maximum(m_i, jnp.max(s, axis=-1, keepdims=True))
            alpha = jnp.exp(m_i - m_new)          # f32 exp (v5e EUP has no bf16 path)
            p = jnp.exp(s - m_new)                # f32
            l_i = alpha * l_i + jnp.sum(p, axis=-1, keepdims=True)
            acc = alpha * acc + jnp.einsum("hqk,hkd->hqd", p.astype(mm_dtype), v_t,
                                           preferred_element_type=jnp.float32)
            m_i = m_new
        out_t = acc * pl.reciprocal(l_i, approx=approx_recip)              # (H, Tq, dh)
        attn_rows.append(
            jnp.concatenate([out_t[h] for h in range(num_heads)], axis=-1))  # (Tq, E)
    attn = attn_rows[0] if n_q == 1 else jnp.concatenate(attn_rows, axis=0)  # (S, E)

    # Single (S,E)@(E,E) output projection.
    attn = jnp.dot(attn.astype(mm_dtype), wo_ref[...],
                   preferred_element_type=jnp.float32) + bo_ref[...]
    # TODO(synk): nn.MultiheadAttention dropout(p=0.1) is train-mode only; this kernel
    # implements the deterministic (eval) forward path.  key_padding_mask unsupported.

    # ---------------- residual + LayerNorm over the whole (S, E) tile -----------------
    x1 = _layer_norm_2d(x_f32 + attn)

    # ---------------- feed-forward, chunked over F (no full (S, F) intermediate) ------
    x1m = x1.astype(mm_dtype)
    F = w1_ref.shape[1]
    ff = None
    for c in range(F // f_chunk):
        lo, hi = c * f_chunk, (c + 1) * f_chunk
        h1 = jnp.dot(x1m, w1_ref[:, lo:hi],
                     preferred_element_type=jnp.float32) + b1_ref[:, lo:hi]
        h1 = jnp.maximum(h1, 0.0).astype(mm_dtype)                         # (S, f_chunk)
        part = jnp.dot(h1, w2_ref[lo:hi, :], preferred_element_type=jnp.float32)
        ff = part if ff is None else ff + part
    ff = ff + b2_ref[...]

    o_ref[...] = _layer_norm_2d(x1 + ff).astype(o_ref.dtype)


def prepare_params(params, *, precise=False):
    """One-time weight preprocessing: transpose to (in, out) and cast to matmul dtype.

    Call ONCE and reuse across steps; this hoists the per-call transpose+cast pass over
    the weights out of the hot path (pure overhead for a per-layer, per-step kernel).
    """
    mm_dtype = jnp.float32 if precise else jnp.bfloat16
    return dict(
        wqkv_t=jnp.asarray(params["in_proj_weight"]).T.astype(mm_dtype),   # (E, 3E)
        bqkv=jnp.asarray(params["in_proj_bias"]).astype(jnp.float32)[None, :],
        wo_t=jnp.asarray(params["out_proj_weight"]).T.astype(mm_dtype),    # (E, E)
        bo=jnp.asarray(params["out_proj_bias"]).astype(jnp.float32)[None, :],
        w1_t=jnp.asarray(params["w1"]).T.astype(mm_dtype),                 # (E, F)
        b1=jnp.asarray(params["b1"]).astype(jnp.float32)[None, :],
        w2_t=jnp.asarray(params["w2"]).T.astype(mm_dtype),                 # (F, E)
        b2=jnp.asarray(params["b2"]).astype(jnp.float32)[None, :],
    )


def _physical_vmem_bytes():
    # Generation-aware physical VMEM (128 MiB on v5e/v6e, 64 MiB per core on v7x).
    try:
        return int(pltpu.get_tpu_info().vmem_capacity_bytes)
    except Exception:
        return 64 * 1024 * 1024   # conservative: valid on every generation


def _fit_tile(n, desired):
    # Largest tile <= desired that divides n (keeps the static tiling loops exact).
    if n <= desired:
        return n
    if n % desired == 0:
        return desired
    for t in range(desired, 0, -1):
        if n % t == 0:
            return t
    return n


def _vmem_limit_bytes(S, E, F, H, q_tile, kv_tile, f_chunk, mm_dtype, x_dtype):
    itm = jnp.dtype(mm_dtype).itemsize
    dh = E // H
    weights = (3 * E * E + E * E + E * F + F * E) * itm + (3 * E + 2 * E + F) * 4
    acts = (S * E * (4 + itm)                      # x (f32 residual + matmul copy)
            + S * 3 * E * 4                        # fused qkv (f32)
            + 3 * S * E * itm                      # q/k/v head-split copies
            + 2 * H * q_tile * kv_tile * 4         # per-tile scores + probs
            + H * q_tile * (dh + 2) * 4            # flash accumulators (acc, m, l)
            + 3 * S * E * 4                        # attn, x1, ff (f32)
            + S * f_chunk * (4 + itm))             # FFN chunk intermediate
    io = 2 * 2 * S * E * jnp.dtype(x_dtype).itemsize  # double-buffered x / out blocks
    need = weights + acts + io
    cap = int(0.85 * _physical_vmem_bytes())       # leave Mosaic scratch headroom
    return int(min(max(2 * need, 32 * 1024 * 1024), cap))


def transformer_layer(x, prep, *, num_heads, causal=False,
                      q_tile=256, kv_tile=512, f_chunk=512):
    # TODO(synk): key_padding_mask is not implemented (module default is None).
    B, S, E = x.shape
    F = prep["w1_t"].shape[1]
    mm_dtype = prep["wqkv_t"].dtype
    precise = mm_dtype == jnp.dtype(jnp.float32)

    # 256-aligned tiles where the shapes allow (v6e/v7x MXU is 2x256x256); the tiny demo
    # shapes collapse each loop to a single iteration.
    q_tile = _fit_tile(S, q_tile)
    kv_tile = _fit_tile(S, kv_tile)
    f_chunk = _fit_tile(F, f_chunk)

    kernel = functools.partial(
        transformer_layer_kernel, num_heads=num_heads, causal=causal,
        mm_dtype=mm_dtype, approx_recip=not precise,
        q_tile=q_tile, kv_tile=kv_tile, f_chunk=f_chunk)

    weight_args = (prep["wqkv_t"], prep["bqkv"], prep["wo_t"], prep["bo"],
                   prep["w1_t"], prep["b1"], prep["w2_t"], prep["b2"])

    vmem_limit = _vmem_limit_bytes(S, E, F, num_heads, q_tile, kv_tile, f_chunk,
                                   mm_dtype, x.dtype)

    def call(single_buffer_weights):
        def const_spec(a):
            # Constant index map across the grid: single-buffer to avoid duplicating
            # multi-MiB weight blocks in VMEM (the data never changes between steps).
            kw = {"pipeline_mode": pl.Buffered(1)} if single_buffer_weights else {}
            return pl.BlockSpec(a.shape, lambda b, n=a.ndim: (0,) * n, **kw)

        # NOTE: the x / out blocks keep the full (S, E) slab resident because the
        # module's LayerNorm normalizes over BOTH S and E per batch element; a query-
        # tile grid axis would require a cross-tile LN reduction (see TODO at top).
        return pl.pallas_call(
            kernel,
            out_shape=jax.ShapeDtypeStruct((B, S, E), x.dtype),
            grid_spec=pltpu.PrefetchScalarGridSpec(
                num_scalar_prefetch=0,
                grid=(B,),
                in_specs=[pl.BlockSpec((None, S, E), lambda b: (b, 0, 0))]
                + [const_spec(w) for w in weight_args],
                out_specs=pl.BlockSpec((None, S, E), lambda b: (b, 0, 0)),
            ),
            compiler_params=pltpu.CompilerParams(
                dimension_semantics=("parallel",),
                vmem_limit_bytes=vmem_limit,
            ),
        )(x, *weight_args)

    try:
        return call(True)
    except Exception:
        # TODO(synk): drop fallback once pipeline_mode=pl.Buffered(1) is guaranteed on
        # all deployed jax builds (the fallback is semantically identical, just 2x the
        # weight VMEM residency).
        return call(False)


def reference(x, params, *, num_heads, causal=False):
    # Pure-JAX mirror of the PyTorch forward (eval mode) for correctness checking.
    B, S, E = x.shape
    dh = E // num_heads
    qkv = x @ params["in_proj_weight"].T + params["in_proj_bias"]
    q, k, v = jnp.split(qkv, 3, axis=-1)
    q = q.reshape(B, S, num_heads, dh).transpose(0, 2, 1, 3) / jnp.sqrt(dh)
    k = k.reshape(B, S, num_heads, dh).transpose(0, 2, 1, 3)
    v = v.reshape(B, S, num_heads, dh).transpose(0, 2, 1, 3)
    s = jnp.einsum("bhqd,bhkd->bhqk", q, k)
    if causal:
        mask = jnp.triu(jnp.ones((S, S), bool), 1)
        s = jnp.where(mask, -jnp.inf, s)
    p = jax.nn.softmax(s, axis=-1)
    attn = jnp.einsum("bhqk,bhkd->bhqd", p, v).transpose(0, 2, 1, 3).reshape(B, S, E)
    attn = attn @ params["out_proj_weight"].T + params["out_proj_bias"]

    def ln(z):
        mu = jnp.mean(z, axis=(1, 2), keepdims=True)
        var = jnp.mean((z - mu) ** 2, axis=(1, 2), keepdims=True)
        return (z - mu) / jnp.sqrt(var + 1e-6)

    x1 = ln(x + attn)
    h1 = jax.nn.relu(x1 @ params["w1"].T + params["b1"])
    ff = h1 @ params["w2"].T + params["b2"]
    return ln(x1 + ff)


if __name__ == "__main__":
    B, S, E, H, FF = 2, 8, 32, 4, 64

    key = jax.random.PRNGKey(0)
    ks = jax.random.split(key, 9)
    params = {
        "in_proj_weight": 0.1 * jax.random.normal(ks[0], (3 * E, E), jnp.float32),
        "in_proj_bias": 0.1 * jax.random.normal(ks[1], (3 * E,), jnp.float32),
        "out_proj_weight": 0.1 * jax.random.normal(ks[2], (E, E), jnp.float32),
        "out_proj_bias": 0.1 * jax.random.normal(ks[3], (E,), jnp.float32),
        "w1": 0.1 * jax.random.normal(ks[4], (FF, E), jnp.float32),
        "b1": 0.1 * jax.random.normal(ks[5], (FF,), jnp.float32),
        "w2": 0.1 * jax.random.normal(ks[6], (E, FF), jnp.float32),
        "b2": 0.1 * jax.random.normal(ks[7], (E,), jnp.float32),
    }
    x = jax.random.normal(ks[8], (B, S, E), jnp.float32)

    ref_nc = reference(x, params, num_heads=H, causal=False)
    ref_c = reference(x, params, num_heads=H, causal=True)

    # Weight preprocessing is done ONCE and reused across all calls below.
    prep_hi = prepare_params(params, precise=True)
    prep_fast = prepare_params(params, precise=False)

    # High-precision (f32) path, default (single-tile) flash path, non-causal.
    out_hi = jax.block_until_ready(
        transformer_layer(x, prep_hi, num_heads=H, causal=False))
    assert out_hi.shape == (B, S, E)
    err_hi = float(jnp.max(jnp.abs(out_hi - ref_nc)))
    assert jnp.allclose(out_hi, ref_nc, rtol=1e-4, atol=1e-4), f"max abs err {err_hi}"

    # Causal + explicitly small tiles: exercises the flash q/kv tiling (with causal
    # tile-skipping) and the FFN F-chunking loops.
    out_hi_c = jax.block_until_ready(
        transformer_layer(x, prep_hi, num_heads=H, causal=True,
                          q_tile=4, kv_tile=4, f_chunk=32))
    err_hi_c = float(jnp.max(jnp.abs(out_hi_c - ref_c)))
    assert jnp.allclose(out_hi_c, ref_c, rtol=1e-4, atol=1e-4), f"max abs err {err_hi_c}"

    # Non-causal with the same explicit tiling.
    out_hi_t = jax.block_until_ready(
        transformer_layer(x, prep_hi, num_heads=H, causal=False,
                          q_tile=4, kv_tile=4, f_chunk=32))
    err_hi_t = float(jnp.max(jnp.abs(out_hi_t - ref_nc)))
    assert jnp.allclose(out_hi_t, ref_nc, rtol=1e-4, atol=1e-4), f"max abs err {err_hi_t}"

    # Fast path (default): bf16 MXU operands + approx reciprocal, looser tolerance.
    out_fast = jax.block_until_ready(
        transformer_layer(x, prep_fast, num_heads=H, causal=False))
    err_fast = float(jnp.max(jnp.abs(out_fast - ref_nc)))
    assert jnp.allclose(out_fast, ref_nc, rtol=5e-2, atol=5e-2), f"max abs err {err_fast}"

    print("KERNEL_OK")
</pallas_src>

<mosaic_0001>
module attributes {stable_mosaic.version = 11 : i64} {
  func.func @transformer_layer_kernel(%arg0: i32, %arg1: memref<1x8x32xf32, #tpu.memory_space<vmem>>, %arg2: memref<32x96xf32, #tpu.memory_space<vmem>>, %arg3: memref<1x96xf32, #tpu.memory_space<vmem>>, %arg4: memref<32x32xf32, #tpu.memory_space<vmem>>, %arg5: memref<1x32xf32, #tpu.memory_space<vmem>>, %arg6: memref<32x64xf32, #tpu.memory_space<vmem>>, %arg7: memref<1x64xf32, #tpu.memory_space<vmem>>, %arg8: memref<64x32xf32, #tpu.memory_space<vmem>>, %arg9: memref<1x32xf32, #tpu.memory_space<vmem>>, %arg10: memref<1x8x32xf32, #tpu.memory_space<vmem>>) attributes {dimension_semantics = [#tpu.dimension_semantics<parallel>], iteration_bounds = array<i64: 2>, scalar_prefetch = 0 : i64, scratch_operands = 0 : i64, tpu.core_type = #tpu.core_type<tc>, window_params = [{transform_indices = @transform_0, window_bounds = array<i64: 1, 8, 32>}, {pipeline_mode = #tpu.pipeline_mode<synchronous>, transform_indices = @transform_1, window_bounds = array<i64: 32, 96>}, {pipeline_mode = #tpu.pipeline_mode<synchronous>, transform_indices = @transform_2, window_bounds = array<i64: 1, 96>}, {pipeline_mode = #tpu.pipeline_mode<synchronous>, transform_indices = @transform_3, window_bounds = array<i64: 32, 32>}, {pipeline_mode = #tpu.pipeline_mode<synchronous>, transform_indices = @transform_4, window_bounds = array<i64: 1, 32>}, {pipeline_mode = #tpu.pipeline_mode<synchronous>, transform_indices = @transform_5, window_bounds = array<i64: 32, 64>}, {pipeline_mode = #tpu.pipeline_mode<synchronous>, transform_indices = @transform_6, window_bounds = array<i64: 1, 64>}, {pipeline_mode = #tpu.pipeline_mode<synchronous>, transform_indices = @transform_7, window_bounds = array<i64: 64, 32>}, {pipeline_mode = #tpu.pipeline_mode<synchronous>, transform_indices = @transform_8, window_bounds = array<i64: 1, 32>}, {transform_indices = @transform_9, window_bounds = array<i64: 1, 8, 32>}]} {
    %c0 = arith.constant 0 : index
    %c0_0 = arith.constant 0 : index
    %c0_1 = arith.constant 0 : index
    %0 = vector.load %arg1[%c0, %c0_0, %c0_1] : memref<1x8x32xf32, #tpu.memory_space<vmem>>, vector<1x8x32xf32>
    %1 = vector.shape_cast %0 : vector<1x8x32xf32> to vector<8x32xf32>
    %c0_2 = arith.constant 0 : index
    %c0_3 = arith.constant 0 : index
    %2 = vector.load %arg2[%c0_2, %c0_3] : memref<32x96xf32, #tpu.memory_space<vmem>>, vector<32x96xf32>
    %cst = arith.constant dense<0.000000e+00> : vector<8x96xf32>
    %3 = tpu.matmul %1, %2, %cst {dimension_numbers = #tpu.dot_dimension_numbers<[1], [0], [0], [1], [0, 0, 1, 1], [], []>} : vector<8x32xf32>, vector<32x96xf32>, vector<8x96xf32> -> vector<8x96xf32>
    %c0_4 = arith.constant 0 : index
    %c0_5 = arith.constant 0 : index
    %4 = vector.load %arg3[%c0_4, %c0_5] : memref<1x96xf32, #tpu.memory_space<vmem>>, vector<1x96xf32>
    %5 = vector.broadcast %4 : vector<1x96xf32> to vector<8x96xf32>
    %6 = arith.addf %3, %5 : vector<8x96xf32>
    %7 = vector.extract_strided_slice %6 {offsets = [0, 0], sizes = [8, 32], strides = [1, 1]} : vector<8x96xf32> to vector<8x32xf32>
    %cst_6 = arith.constant 0.353553385 : f32
    %8 = vector.broadcast %cst_6 : f32 to vector<8x32xf32>
    %9 = arith.mulf %7, %8 : vector<8x32xf32>
    %10 = vector.extract_strided_slice %9 {offsets = [0, 0], sizes = [8, 8], strides = [1, 1]} : vector<8x32xf32> to vector<8x8xf32>
    %11 = vector.extract_strided_slice %9 {offsets = [0, 8], sizes = [8, 8], strides = [1, 1]} : vector<8x32xf32> to vector<8x8xf32>
    %12 = vector.extract_strided_slice %9 {offsets = [0, 16], sizes = [8, 8], strides = [1, 1]} : vector<8x32xf32> to vector<8x8xf32>
    %13 = vector.extract_strided_slice %9 {offsets = [0, 24], sizes = [8, 8], strides = [1, 1]} : vector<8x32xf32> to vector<8x8xf32>
    %14 = vector.shape_cast %10 : vector<8x8xf32> to vector<1x8x8xf32>
    %15 = vector.shape_cast %11 : vector<8x8xf32> to vector<1x8x8xf32>
    %16 = vector.shape_cast %12 : vector<8x8xf32> to vector<1x8x8xf32>
    %17 = vector.shape_cast %13 : vector<8x8xf32> to vector<1x8x8xf32>
    %18 = tpu.concatenate %14, %15, %16, %17 in 0 : vector<1x8x8xf32>, vector<1x8x8xf32>, vector<1x8x8xf32>, vector<1x8x8xf32> -> vector<4x8x8xf32>
    %19 = vector.extract_strided_slice %6 {offsets = [0, 32], sizes = [8, 32], strides = [1, 1]} : vector<8x96xf32> to vector<8x32xf32>
    %20 = vector.extract_strided_slice %19 {offsets = [0, 0], sizes = [8, 8], strides = [1, 1]} : vector<8x32xf32> to vector<8x8xf32>
    %21 = vector.extract_strided_slice %19 {offsets = [0, 8], sizes = [8, 8], strides = [1, 1]} : vector<8x32xf32> to vector<8x8xf32>
    %22 = vector.extract_strided_slice %19 {offsets = [0, 16], sizes = [8, 8], strides = [1, 1]} : vector<8x32xf32> to vector<8x8xf32>
    %23 = vector.extract_strided_slice %19 {offsets = [0, 24], sizes = [8, 8], strides = [1, 1]} : vector<8x32xf32> to vector<8x8xf32>
    %24 = vector.shape_cast %20 : vector<8x8xf32> to vector<1x8x8xf32>
    %25 = vector.shape_cast %21 : vector<8x8xf32> to vector<1x8x8xf32>
    %26 = vector.shape_cast %22 : vector<8x8xf32> to vector<1x8x8xf32>
    %27 = vector.shape_cast %23 : vector<8x8xf32> to vector<1x8x8xf32>
    %28 = tpu.concatenate %24, %25, %26, %27 in 0 : vector<1x8x8xf32>, vector<1x8x8xf32>, vector<1x8x8xf32>, vector<1x8x8xf32> -> vector<4x8x8xf32>
    %29 = vector.extract_strided_slice %6 {offsets = [0, 64], sizes = [8, 32], strides = [1, 1]} : vector<8x96xf32> to vector<8x32xf32>
    %30 = vector.extract_strided_slice %29 {offsets = [0, 0], sizes = [8, 8], strides = [1, 1]} : vector<8x32xf32> to vector<8x8xf32>
    %31 = vector.extract_strided_slice %29 {offsets = [0, 8], sizes = [8, 8], strides = [1, 1]} : vector<8x32xf32> to vector<8x8xf32>
    %32 = vector.extract_strided_slice %29 {offsets = [0, 16], sizes = [8, 8], strides = [1, 1]} : vector<8x32xf32> to vector<8x8xf32>
    %33 = vector.extract_strided_slice %29 {offsets = [0, 24], sizes = [8, 8], strides = [1, 1]} : vector<8x32xf32> to vector<8x8xf32>
    %34 = vector.shape_cast %30 : vector<8x8xf32> to vector<1x8x8xf32>
    %35 = vector.shape_cast %31 : vector<8x8xf32> to vector<1x8x8xf32>
    %36 = vector.shape_cast %32 : vector<8x8xf32> to vector<1x8x8xf32>
    %37 = vector.shape_cast %33 : vector<8x8xf32> to vector<1x8x8xf32>
    %38 = tpu.concatenate %34, %35, %36, %37 in 0 : vector<1x8x8xf32>, vector<1x8x8xf32>, vector<1x8x8xf32>, vector<1x8x8xf32> -> vector<4x8x8xf32>
    %cst_7 = arith.constant 0xFF800000 : f32
    %39 = vector.broadcast %cst_7 : f32 to vector<4x8x1xf32>
    %cst_8 = arith.constant 0.000000e+00 : f32
    %40 = vector.broadcast %cst_8 : f32 to vector<4x8x1xf32>
    %cst_9 = arith.constant 0.000000e+00 : f32
    %41 = vector.broadcast %cst_9 : f32 to vector<4x8x8xf32>
    "tpu.trace_start"() <{level = 10 : i32, message = "hqd,hkd->hqk"}> : () -> ()
    %cst_10 = arith.constant dense<0.000000e+00> : vector<4x8x8xf32>
    %42 = tpu.matmul %18, %28, %cst_10 {dimension_numbers = #tpu.dot_dimension_numbers<[2], [2], [1], [1], [0, 0, 0, 1, 1, 1], [0], [0]>} : vector<4x8x8xf32>, vector<4x8x8xf32>, vector<4x8x8xf32> -> vector<4x8x8xf32>
    "tpu.trace_stop"() : () -> ()
    %cst_11 = arith.constant dense<0xFF800000> : vector<4x8xf32>
    %43 = vector.multi_reduction <maximumf>, %42, %cst_11 [2] : vector<4x8x8xf32> to vector<4x8xf32>
    %44 = vector.shape_cast %43 : vector<4x8xf32> to vector<4x8x1xf32>
    %45 = arith.maximumf %39, %44 : vector<4x8x1xf32>
    %46 = arith.subf %39, %45 : vector<4x8x1xf32>
    %47 = math.exp %46 : vector<4x8x1xf32>
    %48 = vector.broadcast %45 : vector<4x8x1xf32> to vector<4x8x8xf32>
    %49 = arith.subf %42, %48 : vector<4x8x8xf32>
    %50 = math.exp %49 : vector<4x8x8xf32>
    %51 = arith.mulf %47, %40 : vector<4x8x1xf32>
    %cst_12 = arith.constant dense<0.000000e+00> : vector<4x8xf32>
    %52 = vector.multi_reduction <add>, %50, %cst_12 [2] : vector<4x8x8xf32> to vector<4x8xf32>
    %53 = vector.shape_cast %52 : vector<4x8xf32> to vector<4x8x1xf32>
    %54 = arith.addf %51, %53 : vector<4x8x1xf32>
    %55 = vector.broadcast %47 : vector<4x8x1xf32> to vector<4x8x8xf32>
    %56 = arith.mulf %55, %41 : vector<4x8x8xf32>
    "tpu.trace_start"() <{level = 10 : i32, message = "hqk,hkd->hqd"}> : () -> ()
    %cst_13 = arith.constant dense<0.000000e+00> : vector<4x8x8xf32>
    %57 = tpu.matmul %50, %38, %cst_13 {dimension_numbers = #tpu.dot_dimension_numbers<[2], [1], [1], [2], [0, 0, 0, 1, 1, 2], [0], [0]>} : vector<4x8x8xf32>, vector<4x8x8xf32>, vector<4x8x8xf32> -> vector<4x8x8xf32>
    "tpu.trace_stop"() : () -> ()
    %58 = arith.addf %56, %57 : vector<4x8x8xf32>
    %59 = tpu.reciprocal %54 : vector<4x8x1xf32> -> vector<4x8x1xf32>
    %60 = vector.broadcast %59 : vector<4x8x1xf32> to vector<4x8x8xf32>
    %61 = arith.mulf %58, %60 : vector<4x8x8xf32>
    %62 = vector.extract_strided_slice %61 {offsets = [0, 0, 0], sizes = [1, 8, 8], strides = [1, 1, 1]} : vector<4x8x8xf32> to vector<1x8x8xf32>
    %63 = vector.shape_cast %62 : vector<1x8x8xf32> to vector<8x8xf32>
    %64 = vector.extract_strided_slice %61 {offsets = [1, 0, 0], sizes = [1, 8, 8], strides = [1, 1, 1]} : vector<4x8x8xf32> to vector<1x8x8xf32>
    %65 = vector.shape_cast %64 : vector<1x8x8xf32> to vector<8x8xf32>
    %66 = vector.extract_strided_slice %61 {offsets = [2, 0, 0], sizes = [1, 8, 8], strides = [1, 1, 1]} : vector<4x8x8xf32> to vector<1x8x8xf32>
    %67 = vector.shape_cast %66 : vector<1x8x8xf32> to vector<8x8xf32>
    %68 = vector.extract_strided_slice %61 {offsets = [3, 0, 0], sizes = [1, 8, 8], strides = [1, 1, 1]} : vector<4x8x8xf32> to vector<1x8x8xf32>
    %69 = vector.shape_cast %68 : vector<1x8x8xf32> to vector<8x8xf32>
    %70 = tpu.concatenate %63, %65, %67, %69 in 1 : vector<8x8xf32>, vector<8x8xf32>, vector<8x8xf32>, vector<8x8xf32> -> vector<8x32xf32>
    %c0_14 = arith.constant 0 : index
    %c0_15 = arith.constant 0 : index
    %71 = vector.load %arg4[%c0_14, %c0_15] : memref<32x32xf32, #tpu.memory_space<vmem>>, vector<32x32xf32>
    %cst_16 = arith.constant dense<0.000000e+00> : vector<8x32xf32>
    %72 = tpu.matmul %70, %71, %cst_16 {dimension_numbers = #tpu.dot_dimension_numbers<[1], [0], [0], [1], [0, 0, 1, 1], [], []>} : vector<8x32xf32>, vector<32x32xf32>, vector<8x32xf32> -> vector<8x32xf32>
    %c0_17 = arith.constant 0 : index
    %c0_18 = arith.constant 0 : index
    %73 = vector.load %arg5[%c0_17, %c0_18] : memref<1x32xf32, #tpu.memory_space<vmem>>, vector<1x32xf32>
    %74 = vector.broadcast %73 : vector<1x32xf32> to vector<8x32xf32>
    %75 = arith.addf %72, %74 : vector<8x32xf32>
    %76 = arith.addf %1, %75 : vector<8x32xf32>
    %77 = vector.shape_cast %76 : vector<8x32xf32> to vector<1x8x32xf32>
    %cst_19 = arith.constant dense<0.000000e+00> : vector<1xf32>
    %78 = vector.multi_reduction <add>, %77, %cst_19 [1, 2] : vector<1x8x32xf32> to vector<1xf32>
    %79 = vector.shape_cast %78 : vector<1xf32> to vector<1x1x1xf32>
    %80 = vector.extract %79[0, 0, 0] : f32 from vector<1x1x1xf32>
    %cst_20 = arith.constant 2.560000e+02 : f32
    %81 = arith.divf %80, %cst_20 : f32
    %82 = vector.broadcast %81 : f32 to vector<8x32xf32>
    %83 = arith.subf %76, %82 : vector<8x32xf32>
    %84 = arith.mulf %83, %83 : vector<8x32xf32>
    %85 = vector.shape_cast %84 : vector<8x32xf32> to vector<1x8x32xf32>
    %cst_21 = arith.constant dense<0.000000e+00> : vector<1xf32>
    %86 = vector.multi_reduction <add>, %85, %cst_21 [1, 2] : vector<1x8x32xf32> to vector<1xf32>
    %87 = vector.shape_cast %86 : vector<1xf32> to vector<1x1x1xf32>
    %88 = vector.extract %87[0, 0, 0] : f32 from vector<1x1x1xf32>
    %cst_22 = arith.constant 2.560000e+02 : f32
    %89 = arith.divf %88, %cst_22 : f32
    %cst_23 = arith.constant 9.99999997E-7 : f32
    %90 = arith.addf %89, %cst_23 : f32
    %91 = math.rsqrt %90 : f32
    %92 = vector.broadcast %91 : f32 to vector<8x32xf32>
    %93 = arith.mulf %83, %92 : vector<8x32xf32>
    %c0_24 = arith.constant 0 : index
    %c0_25 = arith.constant 0 : index
    %94 = vector.load %arg6[%c0_24, %c0_25] : memref<32x64xf32, #tpu.memory_space<vmem>>, vector<32x64xf32>
    %cst_26 = arith.constant dense<0.000000e+00> : vector<8x64xf32>
    %95 = tpu.matmul %93, %94, %cst_26 {dimension_numbers = #tpu.dot_dimension_numbers<[1], [0], [0], [1], [0, 0, 1, 1], [], []>} : vector<8x32xf32>, vector<32x64xf32>, vector<8x64xf32> -> vector<8x64xf32>
    %c0_27 = arith.constant 0 : index
    %c0_28 = arith.constant 0 : index
    %96 = vector.load %arg7[%c0_27, %c0_28] : memref<1x64xf32, #tpu.memory_space<vmem>>, vector<1x64xf32>
    %97 = vector.broadcast %96 : vector<1x64xf32> to vector<8x64xf32>
    %98 = arith.addf %95, %97 : vector<8x64xf32>
    %cst_29 = arith.constant 0.000000e+00 : f32
    %99 = vector.broadcast %cst_29 : f32 to vector<8x64xf32>
    %100 = arith.maximumf %98, %99 : vector<8x64xf32>
    %c0_30 = arith.constant 0 : index
    %c0_31 = arith.constant 0 : index
    %101 = vector.load %arg8[%c0_30, %c0_31] : memref<64x32xf32, #tpu.memory_space<vmem>>, vector<64x32xf32>
    %cst_32 = arith.constant dense<0.000000e+00> : vector<8x32xf32>
    %102 = tpu.matmul %100, %101, %cst_32 {dimension_numbers = #tpu.dot_dimension_numbers<[1], [0], [0], [1], [0, 0, 1, 1], [], []>} : vector<8x64xf32>, vector<64x32xf32>, vector<8x32xf32> -> vector<8x32xf32>
    %c0_33 = arith.constant 0 : index
    %c0_34 = arith.constant 0 : index
    %103 = vector.load %arg9[%c0_33, %c0_34] : memref<1x32xf32, #tpu.memory_space<vmem>>, vector<1x32xf32>
    %104 = vector.broadcast %103 : vector<1x32xf32> to vector<8x32xf32>
    %105 = arith.addf %102, %104 : vector<8x32xf32>
    %106 = arith.addf %93, %105 : vector<8x32xf32>
    %107 = vector.shape_cast %106 : vector<8x32xf32> to vector<1x8x32xf32>
    %cst_35 = arith.constant dense<0.000000e+00> : vector<1xf32>
    %108 = vector.multi_reduction <add>, %107, %cst_35 [1, 2] : vector<1x8x32xf32> to vector<1xf32>
    %109 = vector.shape_cast %108 : vector<1xf32> to vector<1x1x1xf32>
    %110 = vector.extract %109[0, 0, 0] : f32 from vector<1x1x1xf32>
    %cst_36 = arith.constant 2.560000e+02 : f32
    %111 = arith.divf %110, %cst_36 : f32
    %112 = vector.broadcast %111 : f32 to vector<8x32xf32>
    %113 = arith.subf %106, %112 : vector<8x32xf32>
    %114 = arith.mulf %113, %113 : vector<8x32xf32>
    %115 = vector.shape_cast %114 : vector<8x32xf32> to vector<1x8x32xf32>
    %cst_37 = arith.constant dense<0.000000e+00> : vector<1xf32>
    %116 = vector.multi_reduction <add>, %115, %cst_37 [1, 2] : vector<1x8x32xf32> to vector<1xf32>
    %117 = vector.shape_cast %116 : vector<1xf32> to vector<1x1x1xf32>
    %118 = vector.extract %117[0, 0, 0] : f32 from vector<1x1x1xf32>
    %cst_38 = arith.constant 2.560000e+02 : f32
    %119 = arith.divf %118, %cst_38 : f32
    %cst_39 = arith.constant 9.99999997E-7 : f32
    %120 = arith.addf %119, %cst_39 : f32
    %121 = math.rsqrt %120 : f32
    %122 = vector.broadcast %121 : f32 to vector<8x32xf32>
    %123 = arith.mulf %113, %122 : vector<8x32xf32>
    %c0_40 = arith.constant 0 : index
    %c0_41 = arith.constant 0 : index
    %c0_42 = arith.constant 0 : index
    %124 = vector.load %arg10[%c0_40, %c0_41, %c0_42] : memref<1x8x32xf32, #tpu.memory_space<vmem>>, vector<1x8x32xf32>
    %125 = vector.shape_cast %124 : vector<1x8x32xf32> to vector<8x32xf32>
    %126 = vector.shape_cast %123 : vector<8x32xf32> to vector<1x8x32xf32>
    tpu.vector_store %arg10[%c0_40, %c0_41, %c0_42], %126 {strides = array<i32>} : memref<1x8x32xf32, #tpu.memory_space<vmem>>, vector<1x8x32xf32>,
    return
  }
  func.func @transform_0(%arg0: i32) -> (i32, i32, i32) {
    %c0_i32 = arith.constant 0 : i32
    %c0_i32_0 = arith.constant 0 : i32
    %c0_i32_1 = arith.constant 0 : i32
    return %arg0, %c0_i32, %c0_i32_0 : i32, i32, i32
  }
  func.func @transform_1(%arg0: i32) -> (i32, i32) {
    %c0_i32 = arith.constant 0 : i32
    %c0_i32_0 = arith.constant 0 : i32
    %c0_i32_1 = arith.constant 0 : i32
    return %c0_i32, %c0_i32_0 : i32, i32
  }
  func.func @transform_2(%arg0: i32) -> (i32, i32) {
    %c0_i32 = arith.constant 0 : i32
    %c0_i32_0 = arith.constant 0 : i32
    %c0_i32_1 = arith.constant 0 : i32
    return %c0_i32, %c0_i32_0 : i32, i32
  }
  func.func @transform_3(%arg0: i32) -> (i32, i32) {
    %c0_i32 = arith.constant 0 : i32
    %c0_i32_0 = arith.constant 0 : i32
    %c0_i32_1 = arith.constant 0 : i32
    return %c0_i32, %c0_i32_0 : i32, i32
  }
  func.func @transform_4(%arg0: i32) -> (i32, i32) {
    %c0_i32 = arith.constant 0 : i32
    %c0_i32_0 = arith.constant 0 : i32
    %c0_i32_1 = arith.constant 0 : i32
    return %c0_i32, %c0_i32_0 : i32, i32
  }
  func.func @transform_5(%arg0: i32) -> (i32, i32) {
    %c0_i32 = arith.constant 0 : i32
    %c0_i32_0 = arith.constant 0 : i32
    %c0_i32_1 = arith.constant 0 : i32
    return %c0_i32, %c0_i32_0 : i32, i32
  }
  func.func @transform_6(%arg0: i32) -> (i32, i32) {
    %c0_i32 = arith.constant 0 : i32
    %c0_i32_0 = arith.constant 0 : i32
    %c0_i32_1 = arith.constant 0 : i32
    return %c0_i32, %c0_i32_0 : i32, i32
  }
  func.func @transform_7(%arg0: i32) -> (i32, i32) {
    %c0_i32 = arith.constant 0 : i32
    %c0_i32_0 = arith.constant 0 : i32
    %c0_i32_1 = arith.constant 0 : i32
    return %c0_i32, %c0_i32_0 : i32, i32
  }
  func.func @transform_8(%arg0: i32) -> (i32, i32) {
    %c0_i32 = arith.constant 0 : i32
    %c0_i32_0 = arith.constant 0 : i32
    %c0_i32_1 = arith.constant 0 : i32
    return %c0_i32, %c0_i32_0 : i32, i32
  }
  func.func @transform_9(%arg0: i32) -> (i32, i32, i32) {
    %c0_i32 = arith.constant 0 : i32
    %c0_i32_0 = arith.constant 0 : i32
    %c0_i32_1 = arith.constant 0 : i32
    return %arg0, %c0_i32, %c0_i32_0 : i32, i32, i32
  }
}

module attributes {stable_mosaic.version = 11 : i64} {
  func.func @transformer_layer_kernel(%arg0: i32, %arg1: memref<1x8x32xf32, #tpu.memory_space<vmem>>, %arg2: memref<32x96xf32, #tpu.memory_space<vmem>>, %arg3: memref<1x96xf32, #tpu.memory_space<vmem>>, %arg4: memref<32x32xf32, #tpu.memory_space<vmem>>, %arg5: memref<1x32xf32, #tpu.memory_space<vmem>>, %arg6: memref<32x64xf32, #tpu.memory_space<vmem>>, %arg7: memref<1x64xf32, #tpu.memory_space<vmem>>, %arg8: memref<64x32xf32, #tpu.memory_space<vmem>>, %arg9: memref<1x32xf32, #tpu.memory_space<vmem>>, %arg10: memref<1x8x32xf32, #tpu.memory_space<vmem>>) attributes {dimension_semantics = [#tpu.dimension_semantics<parallel>], iteration_bounds = array<i64: 2>, scalar_prefetch = 0 : i64, scratch_operands = 0 : i64, tpu.core_type = #tpu.core_type<tc>, window_params = [{transform_indices = @transform_0, window_bounds = array<i64: 1, 8, 32>}, {pipeline_mode = #tpu.pipeline_mode<synchronous>, transform_indices = @transform_1, window_bounds = array<i64: 32, 96>}, {pipeline_mode = #tpu.pipeline_mode<synchronous>, transform_indices = @transform_2, window_bounds = array<i64: 1, 96>}, {pipeline_mode = #tpu.pipeline_mode<synchronous>, transform_indices = @transform_3, window_bounds = array<i64: 32, 32>}, {pipeline_mode = #tpu.pipeline_mode<synchronous>, transform_indices = @transform_4, window_bounds = array<i64: 1, 32>}, {pipeline_mode = #tpu.pipeline_mode<synchronous>, transform_indices = @transform_5, window_bounds = array<i64: 32, 64>}, {pipeline_mode = #tpu.pipeline_mode<synchronous>, transform_indices = @transform_6, window_bounds = array<i64: 1, 64>}, {pipeline_mode = #tpu.pipeline_mode<synchronous>, transform_indices = @transform_7, window_bounds = array<i64: 64, 32>}, {pipeline_mode = #tpu.pipeline_mode<synchronous>, transform_indices = @transform_8, window_bounds = array<i64: 1, 32>}, {transform_indices = @transform_9, window_bounds = array<i64: 1, 8, 32>}]} {
    %c0 = arith.constant 0 : index
    %c0_0 = arith.constant 0 : index
    %c0_1 = arith.constant 0 : index
    %0 = vector.load %arg1[%c0, %c0_0, %c0_1] : memref<1x8x32xf32, #tpu.memory_space<vmem>>, vector<1x8x32xf32>
    %1 = vector.shape_cast %0 : vector<1x8x32xf32> to vector<8x32xf32>
    %c0_2 = arith.constant 0 : index
    %c0_3 = arith.constant 0 : index
    %2 = vector.load %arg2[%c0_2, %c0_3] : memref<32x96xf32, #tpu.memory_space<vmem>>, vector<32x96xf32>
    %cst = arith.constant dense<0.000000e+00> : vector<8x96xf32>
    %3 = tpu.matmul %1, %2, %cst {dimension_numbers = #tpu.dot_dimension_numbers<[1], [0], [0], [1], [0, 0, 1, 1], [], []>} : vector<8x32xf32>, vector<32x96xf32>, vector<8x96xf32> -> vector<8x96xf32>
    %c0_4 = arith.constant 0 : index
    %c0_5 = arith.constant 0 : index
    %4 = vector.load %arg3[%c0_4, %c0_5] : memref<1x96xf32, #tpu.memory_space<vmem>>, vector<1x96xf32>
    %5 = vector.broadcast %4 : vector<1x96xf32> to vector<8x96xf32>
    %6 = arith.addf %3, %5 : vector<8x96xf32>
    %7 = vector.extract_strided_slice %6 {offsets = [0, 0], sizes = [8, 32], strides = [1, 1]} : vector<8x96xf32> to vector<8x32xf32>
    %cst_6 = arith.constant 0.353553385 : f32
    %8 = vector.broadcast %cst_6 : f32 to vector<8x32xf32>
    %9 = arith.mulf %7, %8 : vector<8x32xf32>
    %10 = vector.extract_strided_slice %9 {offsets = [0, 0], sizes = [8, 8], strides = [1, 1]} : vector<8x32xf32> to vector<8x8xf32>
    %11 = vector.extract_strided_slice %9 {offsets = [0, 8], sizes = [8, 8], strides = [1, 1]} : vector<8x32xf32> to vector<8x8xf32>
    %12 = vector.extract_strided_slice %9 {offsets = [0, 16], sizes = [8, 8], strides = [1, 1]} : vector<8x32xf32> to vector<8x8xf32>
    %13 = vector.extract_strided_slice %9 {offsets = [0, 24], sizes = [8, 8], strides = [1, 1]} : vector<8x32xf32> to vector<8x8xf32>
    %14 = vector.shape_cast %10 : vector<8x8xf32> to vector<1x8x8xf32>
    %15 = vector.shape_cast %11 : vector<8x8xf32> to vector<1x8x8xf32>
    %16 = vector.shape_cast %12 : vector<8x8xf32> to vector<1x8x8xf32>
    %17 = vector.shape_cast %13 : vector<8x8xf32> to vector<1x8x8xf32>
    %18 = tpu.concatenate %14, %15, %16, %17 in 0 : vector<1x8x8xf32>, vector<1x8x8xf32>, vector<1x8x8xf32>, vector<1x8x8xf32> -> vector<4x8x8xf32>
    %19 = vector.extract_strided_slice %6 {offsets = [0, 32], sizes = [8, 32], strides = [1, 1]} : vector<8x96xf32> to vector<8x32xf32>
    %20 = vector.extract_strided_slice %19 {offsets = [0, 0], sizes = [8, 8], strides = [1, 1]} : vector<8x32xf32> to vector<8x8xf32>
    %21 = vector.extract_strided_slice %19 {offsets = [0, 8], sizes = [8, 8], strides = [1, 1]} : vector<8x32xf32> to vector<8x8xf32>
    %22 = vector.extract_strided_slice %19 {offsets = [0, 16], sizes = [8, 8], strides = [1, 1]} : vector<8x32xf32> to vector<8x8xf32>
    %23 = vector.extract_strided_slice %19 {offsets = [0, 24], sizes = [8, 8], strides = [1, 1]} : vector<8x32xf32> to vector<8x8xf32>
    %24 = vector.shape_cast %20 : vector<8x8xf32> to vector<1x8x8xf32>
    %25 = vector.shape_cast %21 : vector<8x8xf32> to vector<1x8x8xf32>
    %26 = vector.shape_cast %22 : vector<8x8xf32> to vector<1x8x8xf32>
    %27 = vector.shape_cast %23 : vector<8x8xf32> to vector<1x8x8xf32>
    %28 = tpu.concatenate %24, %25, %26, %27 in 0 : vector<1x8x8xf32>, vector<1x8x8xf32>, vector<1x8x8xf32>, vector<1x8x8xf32> -> vector<4x8x8xf32>
    %29 = vector.extract_strided_slice %6 {offsets = [0, 64], sizes = [8, 32], strides = [1, 1]} : vector<8x96xf32> to vector<8x32xf32>
    %30 = vector.extract_strided_slice %29 {offsets = [0, 0], sizes = [8, 8], strides = [1, 1]} : vector<8x32xf32> to vector<8x8xf32>
    %31 = vector.extract_strided_slice %29 {offsets = [0, 8], sizes = [8, 8], strides = [1, 1]} : vector<8x32xf32> to vector<8x8xf32>
    %32 = vector.extract_strided_slice %29 {offsets = [0, 16], sizes = [8, 8], strides = [1, 1]} : vector<8x32xf32> to vector<8x8xf32>
    %33 = vector.extract_strided_slice %29 {offsets = [0, 24], sizes = [8, 8], strides = [1, 1]} : vector<8x32xf32> to vector<8x8xf32>
    %34 = vector.shape_cast %30 : vector<8x8xf32> to vector<1x8x8xf32>
    %35 = vector.shape_cast %31 : vector<8x8xf32> to vector<1x8x8xf32>
    %36 = vector.shape_cast %32 : vector<8x8xf32> to vector<1x8x8xf32>
    %37 = vector.shape_cast %33 : vector<8x8xf32> to vector<1x8x8xf32>
    %38 = tpu.concatenate %34, %35, %36, %37 in 0 : vector<1x8x8xf32>, vector<1x8x8xf32>, vector<1x8x8xf32>, vector<1x8x8xf32> -> vector<4x8x8xf32>
    %cst_7 = arith.constant 0xFF800000 : f32
    %39 = vector.broadcast %cst_7 : f32 to vector<4x8x1xf32>
    %cst_8 = arith.constant 0.000000e+00 : f32
    %40 = vector.broadcast %cst_8 : f32 to vector<4x8x1xf32>
    %cst_9 = arith.constant 0.000000e+00 : f32
    %41 = vector.broadcast %cst_9 : f32 to vector<4x8x8xf32>
    "tpu.trace_start"() <{level = 10 : i32, message = "hqd,hkd->hqk"}> : () -> ()
    %cst_10 = arith.constant dense<0.000000e+00> : vector<4x8x8xf32>
    %42 = tpu.matmul %18, %28, %cst_10 {dimension_numbers = #tpu.dot_dimension_numbers<[2], [2], [1], [1], [0, 0, 0, 1, 1, 1], [0], [0]>} : vector<4x8x8xf32>, vector<4x8x8xf32>, vector<4x8x8xf32> -> vector<4x8x8xf32>
    "tpu.trace_stop"() : () -> ()
    %cst_11 = arith.constant dense<0xFF800000> : vector<4x8xf32>
    %43 = vector.multi_reduction <maximumf>, %42, %cst_11 [2] : vector<4x8x8xf32> to vector<4x8xf32>
    %44 = vector.shape_cast %43 : vector<4x8xf32> to vector<4x8x1xf32>
    %45 = arith.maximumf %39, %44 : vector<4x8x1xf32>
    %46 = arith.subf %39, %45 : vector<4x8x1xf32>
    %47 = math.exp %46 : vector<4x8x1xf32>
    %48 = vector.broadcast %45 : vector<4x8x1xf32> to vector<4x8x8xf32>
    %49 = arith.subf %42, %48 : vector<4x8x8xf32>
    %50 = math.exp %49 : vector<4x8x8xf32>
    %51 = arith.mulf %47, %40 : vector<4x8x1xf32>
    %cst_12 = arith.constant dense<0.000000e+00> : vector<4x8xf32>
    %52 = vector.multi_reduction <add>, %50, %cst_12 [2] : vector<4x8x8xf32> to vector<4x8xf32>
    %53 = vector.shape_cast %52 : vector<4x8xf32> to vector<4x8x1xf32>
    %54 = arith.addf %51, %53 : vector<4x8x1xf32>
    %55 = vector.broadcast %47 : vector<4x8x1xf32> to vector<4x8x8xf32>
    %56 = arith.mulf %55, %41 : vector<4x8x8xf32>
    "tpu.trace_start"() <{level = 10 : i32, message = "hqk,hkd->hqd"}> : () -> ()
    %cst_13 = arith.constant dense<0.000000e+00> : vector<4x8x8xf32>
    %57 = tpu.matmul %50, %38, %cst_13 {dimension_numbers = #tpu.dot_dimension_numbers<[2], [1], [1], [2], [0, 0, 0, 1, 1, 2], [0], [0]>} : vector<4x8x8xf32>, vector<4x8x8xf32>, vector<4x8x8xf32> -> vector<4x8x8xf32>
    "tpu.trace_stop"() : () -> ()
    %58 = arith.addf %56, %57 : vector<4x8x8xf32>
    %59 = tpu.reciprocal %54 : vector<4x8x1xf32> -> vector<4x8x1xf32>
    %60 = vector.broadcast %59 : vector<4x8x1xf32> to vector<4x8x8xf32>
    %61 = arith.mulf %58, %60 : vector<4x8x8xf32>
    %62 = vector.extract_strided_slice %61 {offsets = [0, 0, 0], sizes = [1, 8, 8], strides = [1, 1, 1]} : vector<4x8x8xf32> to vector<1x8x8xf32>
    %63 = vector.shape_cast %62 : vector<1x8x8xf32> to vector<8x8xf32>
    %64 = vector.extract_strided_slice %61 {offsets = [1, 0, 0], sizes = [1, 8, 8], strides = [1, 1, 1]} : vector<4x8x8xf32> to vector<1x8x8xf32>
    %65 = vector.shape_cast %64 : vector<1x8x8xf32> to vector<8x8xf32>
    %66 = vector.extract_strided_slice %61 {offsets = [2, 0, 0], sizes = [1, 8, 8], strides = [1, 1, 1]} : vector<4x8x8xf32> to vector<1x8x8xf32>
    %67 = vector.shape_cast %66 : vector<1x8x8xf32> to vector<8x8xf32>
    %68 = vector.extract_strided_slice %61 {offsets = [3, 0, 0], sizes = [1, 8, 8], strides = [1, 1, 1]} : vector<4x8x8xf32> to vector<1x8x8xf32>
    %69 = vector.shape_cast %68 : vector<1x8x8xf32> to vector<8x8xf32>
    %70 = tpu.concatenate %63, %65, %67, %69 in 1 : vector<8x8xf32>, vector<8x8xf32>, vector<8x8xf32>, vector<8x8xf32> -> vector<8x32xf32>
    %c0_14 = arith.constant 0 : index
    %c0_15 = arith.constant 0 : index
    %71 = vector.load %arg4[%c0_14, %c0_15] : memref<32x32xf32, #tpu.memory_space<vmem>>, vector<32x32xf32>
    %cst_16 = arith.constant dense<0.000000e+00> : vector<8x32xf32>
    %72 = tpu.matmul %70, %71, %cst_16 {dimension_numbers = #tpu.dot_dimension_numbers<[1], [0], [0], [1], [0, 0, 1, 1], [], []>} : vector<8x32xf32>, vector<32x32xf32>, vector<8x32xf32> -> vector<8x32xf32>
    %c0_17 = arith.constant 0 : index
    %c0_18 = arith.constant 0 : index
    %73 = vector.load %arg5[%c0_17, %c0_18] : memref<1x32xf32, #tpu.memory_space<vmem>>, vector<1x32xf32>
    %74 = vector.broadcast %73 : vector<1x32xf32> to vector<8x32xf32>
    %75 = arith.addf %72, %74 : vector<8x32xf32>
    %76 = arith.addf %1, %75 : vector<8x32xf32>
    %77 = vector.shape_cast %76 : vector<8x32xf32> to vector<1x8x32xf32>
    %cst_19 = arith.constant dense<0.000000e+00> : vector<1xf32>
    %78 = vector.multi_reduction <add>, %77, %cst_19 [1, 2] : vector<1x8x32xf32> to vector<1xf32>
    %79 = vector.shape_cast %78 : vector<1xf32> to vector<1x1x1xf32>
    %80 = vector.extract %79[0, 0, 0] : f32 from vector<1x1x1xf32>
    %cst_20 = arith.constant 2.560000e+02 : f32
    %81 = arith.divf %80, %cst_20 : f32
    %82 = vector.broadcast %81 : f32 to vector<8x32xf32>
    %83 = arith.subf %76, %82 : vector<8x32xf32>
    %84 = arith.mulf %83, %83 : vector<8x32xf32>
    %85 = vector.shape_cast %84 : vector<8x32xf32> to vector<1x8x32xf32>
    %cst_21 = arith.constant dense<0.000000e+00> : vector<1xf32>
    %86 = vector.multi_reduction <add>, %85, %cst_21 [1, 2] : vector<1x8x32xf32> to vector<1xf32>
    %87 = vector.shape_cast %86 : vector<1xf32> to vector<1x1x1xf32>
    %88 = vector.extract %87[0, 0, 0] : f32 from vector<1x1x1xf32>
    %cst_22 = arith.constant 2.560000e+02 : f32
    %89 = arith.divf %88, %cst_22 : f32
    %cst_23 = arith.constant 9.99999997E-7 : f32
    %90 = arith.addf %89, %cst_23 : f32
    %91 = math.rsqrt %90 : f32
    %92 = vector.broadcast %91 : f32 to vector<8x32xf32>
    %93 = arith.mulf %83, %92 : vector<8x32xf32>
    %c0_24 = arith.constant 0 : index
    %c0_25 = arith.constant 0 : index
    %94 = vector.load %arg6[%c0_24, %c0_25] : memref<32x64xf32, #tpu.memory_space<vmem>>, vector<32x64xf32>
    %cst_26 = arith.constant dense<0.000000e+00> : vector<8x64xf32>
    %95 = tpu.matmul %93, %94, %cst_26 {dimension_numbers = #tpu.dot_dimension_numbers<[1], [0], [0], [1], [0, 0, 1, 1], [], []>} : vector<8x32xf32>, vector<32x64xf32>, vector<8x64xf32> -> vector<8x64xf32>
    %c0_27 = arith.constant 0 : index
    %c0_28 = arith.constant 0 : index
    %96 = vector.load %arg7[%c0_27, %c0_28] : memref<1x64xf32, #tpu.memory_space<vmem>>, vector<1x64xf32>
    %97 = vector.broadcast %96 : vector<1x64xf32> to vector<8x64xf32>
    %98 = arith.addf %95, %97 : vector<8x64xf32>
    %cst_29 = arith.constant 0.000000e+00 : f32
    %99 = vector.broadcast %cst_29 : f32 to vector<8x64xf32>
    %100 = arith.maximumf %98, %99 : vector<8x64xf32>
    %c0_30 = arith.constant 0 : index
    %c0_31 = arith.constant 0 : index
    %101 = vector.load %arg8[%c0_30, %c0_31] : memref<64x32xf32, #tpu.memory_space<vmem>>, vector<64x32xf32>
    %cst_32 = arith.constant dense<0.000000e+00> : vector<8x32xf32>
    %102 = tpu.matmul %100, %101, %cst_32 {dimension_numbers = #tpu.dot_dimension_numbers<[1], [0], [0], [1], [0, 0, 1, 1], [], []>} : vector<8x64xf32>, vector<64x32xf32>, vector<8x32xf32> -> vector<8x32xf32>
    %c0_33 = arith.constant 0 : index
    %c0_34 = arith.constant 0 : index
    %103 = vector.load %arg9[%c0_33, %c0_34] : memref<1x32xf32, #tpu.memory_space<vmem>>, vector<1x32xf32>
    %104 = vector.broadcast %103 : vector<1x32xf32> to vector<8x32xf32>
    %105 = arith.addf %102, %104 : vector<8x32xf32>
    %106 = arith.addf %93, %105 : vector<8x32xf32>
    %107 = vector.shape_cast %106 : vector<8x32xf32> to vector<1x8x32xf32>
    %cst_35 = arith.constant dense<0.000000e+00> : vector<1xf32>
    %108 = vector.multi_reduction <add>, %107, %cst_35 [1, 2] : vector<1x8x32xf32> to vector<1xf32>
    %109 = vector.shape_cast %108 : vector<1xf32> to vector<1x1x1xf32>
    %110 = vector.extract %109[0, 0, 0] : f32 from vector<1x1x1xf32>
    %cst_36 = arith.constant 2.560000e+02 : f32
    %111 = arith.divf %110, %cst_36 : f32
    %112 = vector.broadcast %111 : f32 to vector<8x32xf32>
    %113 = arith.subf %106, %112 : vector<8x32xf32>
    %114 = arith.mulf %113, %113 : vector<8x32xf32>
    %115 = vector.shape_cast %114 : vector<8x32xf32> to vector<1x8x32xf32>
    %cst_37 = arith.constant dense<0.000000e+00> : vector<1xf32>
    %116 = vector.multi_reduction <add>, %115, %cst_37 [1, 2] : vector<1x8x32xf32> to vector<1xf32>
    %117 = vector.shape_cast %116 : vector<1xf32> to vector<1x1x1xf32>
    %118 = vector.extract %117[0, 0, 0] : f32 from vector<1x1x1xf32>
    %cst_38 = arith.constant 2.560000e+02 : f32
    %119 = arith.divf %118, %cst_38 : f32
    %cst_39 = arith.constant 9.99999997E-7 : f32
    %120 = arith.addf %119, %cst_39 : f32
    %121 = math.rsqrt %120 : f32
    %122 = vector.broadcast %121 : f32 to vector<8x32xf32>
    %123 = arith.mulf %113, %122 : vector<8x32xf32>
    %c0_40 = arith.constant 0 : index
    %c0_41 = arith.constant 0 : index
    %c0_42 = arith.constant 0 : index
    %124 = vector.load %arg10[%c0_40, %c0_41, %c0_42] : memref<1x8x32xf32, #tpu.memory_space<vmem>>, vector<1x8x32xf32>
    %125 = vector.shape_cast %124 : vector<1x8x32xf32> to vector<8x32xf32>
    %126 = vector.shape_cast %123 : vector<8x32xf32> to vector<1x8x32xf32>
    tpu.vector_store %arg10[%c0_40, %c0_41, %c0_42], %126 {strides = array<i32>} : memref<1x8x32xf32, #tpu.memory_space<vmem>>, vector<1x8x32xf32>,
    return
  }
  func.func @transform_0(%arg0: i32) -> (i32, i32, i32) {
    %c0_i32 = arith.constant 0 : i32
    %c0_i32_0 = arith.constant 0 : i32
    %c0_i32_1 = arith.constant 0 : i32
    return %arg0, %c0_i32, %c0_i32_0 : i32, i32, i32
  }
  func.func @transform_1(%arg0: i32) -> (i32, i32) {
    %c0_i32 = arith.constant 0 : i32
    %c0_i32_0 = arith.constant 0 : i32
    %c0_i32_1 = arith.constant 0 : i32
    return %c0_i32, %c0_i32_0 : i32, i32
  }
  func.func @transform_2(%arg0: i32) -> (i32, i32) {
    %c0_i32 = arith.constant 0 : i32
    %c0_i32_0 = arith.constant 0 : i32
    %c0_i32_1 = arith.constant 0 : i32
    return %c0_i32, %c0_i32_0 : i32, i32
  }
  func.func @transform_3(%arg0: i32) -> (i32, i32) {
    %c0_i32 = arith.constant 0 : i32
    %c0_i32_0 = arith.constant 0 : i32
    %c0_i32_1 = arith.constant 0 : i32
    return %c0_i32, %c0_i32_0 : i32, i32
  }
  func.func @transform_4(%arg0: i32) -> (i32, i32) {
    %c0_i32 = arith.constant 0 : i32
    %c0_i32_0 = arith.constant 0 : i32
    %c0_i32_1 = arith.constant 0 : i32
    return %c0_i32, %c0_i32_0 : i32, i32
  }
  func.func @transform_5(%arg0: i32) -> (i32, i32) {
    %c0_i32 = arith.constant 0 : i32
    %c0_i32_0 = arith.constant 0 : i32
    %c0_i32_1 = arith.constant 0 : i32
    return %c0_i32, %c0_i32_0 : i32, i32
  }
  func.func @transform_6(%arg0: i32) -> (i32, i32) {
    %c0_i32 = arith.constant 0 : i32
    %c0_i32_0 = arith.constant 0 : i32
    %c0_i32_1 = arith.constant 0 : i32
    return %c0_i32, %c0_i32_0 : i32, i32
  }
  func.func @transform_7(%arg0: i32) -> (i32, i32) {
    %c0_i32 = arith.constant 0 : i32
    %c0_i32_0 = arith.constant 0 : i32
    %c0_i32_1 = arith.constant 0 : i32
    return %c0_i32, %c0_i32_0 : i32, i32
  }
  func.func @transform_8(%arg0: i32) -> (i32, i32) {
    %c0_i32 = arith.constant 0 : i32
    %c0_i32_0 = arith.constant 0 : i32
    %c0_i32_1 = arith.constant 0 : i32
    return %c0_i32, %c0_i32_0 : i32, i32
  }
  func.func @transform_9(%arg0: i32) -> (i32, i32, i32) {
    %c0_i32 = arith.constant 0 : i32
    %c0_i32_0 = arith.constant 0 : i32
    %c0_i32_1 = arith.constant 0 : i32
    return %arg0, %c0_i32, %c0_i32_0 : i32, i32, i32
  }
}

</mosaic_0001>

<llo_original>
// kernel: tpu_custom_call.1
$region0: #{tpu_custom_call.1}
  #allocation0 [shape = 'u32[]', space=smem, size = 0x4, offset = 0x4, fixed_abs, tag = 'smem constant byte address 0x4 - core index']
  #allocation1 [shape = 'u32[144,128]{1,0:T(1,128)}', space=vmem, size = 0x12000, scoped, tag = 'internal scratch']
  %s0 = inlined_call_operand.hbm [shape: f32[2,8,32], index: 0, kind: input, shape index: {}]
  %s1 = inlined_call_operand.vmem [shape: f32[32,96], index: 1, kind: input, shape index: {}]
  %s2 = inlined_call_operand.vmem [shape: f32[1,96], index: 2, kind: input, shape index: {}]
  %s3 = inlined_call_operand.vmem [shape: f32[32,32], index: 3, kind: input, shape index: {}]
  %s4 = inlined_call_operand.vmem [shape: f32[1,32], index: 4, kind: input, shape index: {}]
  %s5 = inlined_call_operand.vmem [shape: f32[32,64], index: 5, kind: input, shape index: {}]
  %s6 = inlined_call_operand.vmem [shape: f32[1,64], index: 6, kind: input, shape index: {}]
  %s7 = inlined_call_operand.vmem [shape: f32[64,32], index: 7, kind: input, shape index: {}]
  %s8 = inlined_call_operand.vmem [shape: f32[1,32], index: 8, kind: input, shape index: {}]
  %s9 = inlined_call_operand.hbm [shape: f32[2,8,32], index: 9, kind: output, shape index: {}]
  %s10 = sld [smem:[#allocation0]]
  $region73: #{tpu_custom_call.1} parent=0
    _
  %s12 = ssub.s32 1, %s10
  %s13 = scalar_select 0, %s12, %s10
  $region1: #{tpu_custom_call.1} parent=0
    #allocation2 [shape = 'u8[8192]{0}', space=vmem, size = 0x2000, scoped, tag = 'input window, operand 0']
    #allocation3 [shape = 's32[2]{0}', space=sflag, size = 0x8, scoped, tag = 'scoped memory for tpu_custom_call.1']
    #allocation4 [shape = 's32[2]{0}', space=sflag, size = 0x8, scoped, tag = 'scoped memory for tpu_custom_call.1']
    #allocation5 [shape = 'u8[8192]{0}', space=vmem, size = 0x2000, scoped, tag = 'output window, operand 0']
    %14 = vsyncpa [#allocation3], 0
    %s15 = scalar_lea.sflag [#allocation3], 1
    %16 = vsyncpa %s15, 0
    %17 = vsyncpa [#allocation4], 0
    %s18 = scalar_lea.sflag [#allocation4], 1
    %19 = vsyncpa %s18, 0
    loop: start=0, step=1, limit=4
    $region2: #{tpu_custom_call.1} parent=1 // loop_pre_header
      _
    $region3: #{tpu_custom_call.1} parent=1 // loop_header
      %s21 = sphi 0, %s25
      %p22 = scmp.ge.s32.totalorder %s21, 4
      %s31 = sphi 0, %s33
      %s34 = sphi 0, %s31
      %s35 = sphi 0, %s34
      %s51 = sphi 0, %s35
      %s55 = sphi 0, %s55
      %s57 = sphi 0, %s55
      %s58 = sphi 0, %s57
      %s72 = sphi 0, %s58
      %s76 = sphi 0, %s76
      %s78 = sphi 0, %s76
      %s79 = sphi 0, %s78
      %s93 = sphi 0, %s79
      %s97 = sphi 0, %s97
      %s99 = sphi 0, %s97
      %s100 = sphi 0, %s99
      %s114 = sphi 0, %s100
      %s118 = sphi 0, %s118
      %s120 = sphi 0, %s118
      %s121 = sphi 0, %s120
      %s135 = sphi 0, %s121
      %s139 = sphi 0, %s139
      %s141 = sphi 0, %s139
      %s142 = sphi 0, %s141
      %s156 = sphi 0, %s142
      %s160 = sphi 0, %s160
      %s162 = sphi 0, %s160
      %s163 = sphi 0, %s162
      %s177 = sphi 0, %s163
      %s181 = sphi 0, %s181
      %s183 = sphi 0, %s181
      %s184 = sphi 0, %s183
      %s198 = sphi 0, %s184
      %s202 = sphi 0, %s202
      %s204 = sphi 0, %s202
      %s205 = sphi 0, %s204
      %s219 = sphi 0, %s205
      %s225 = sphi 0, %s227
      %s228 = sphi 0, %s225
      %s229 = sphi 0, %s228
      %s245 = sphi 0, %s229
    $region4: #{tpu_custom_call.1} parent=1 // loop_header_branch
      %24 = sbr.rel (%p22) target = $region8
    $region5: #{tpu_custom_call.1} parent=1 // loop_body
      %s26 = ssub.s32 %s21, 1
      %s27 = ssub.s32 %s21, 2
      %s28 = sadd.s32 %s21, 1
      %s29 = ssub.s32 %s21, %s28
      %p30 = scmp.eq.s32.totalorder %s29, 0
      %s32 = sadd.s32 %s31, 1
      %s33 = scalar_select %p30, %s31, %s32
      %p36 = pneg %p30
      %p37 = scmp.eq.s32.totalorder %s21, 1
      %p38 = por %p36, %p37
      %p39 = scmp.ne.s32.totalorder %s31, %s34
      %p40 = scmp.eq.s32.totalorder %s21, 0
      %p41 = por %p39, %p40
      %p42 = scmp.ne.s32.totalorder %s31, %s34
      %p43 = scmp.eq.s32.totalorder %s26, 1
      %p44 = por %p42, %p43
      %p45 = scmp.ne.s32.totalorder %s34, %s35
      %p46 = scmp.eq.s32.totalorder %s26, 0
      %p47 = por %p45, %p46
      %p48 = scmp.ne.s32.totalorder %s34, %s35
      %p49 = scmp.eq.s32.totalorder %s27, 1
      %p50 = por %p48, %p49
      %p52 = scmp.ne.s32.totalorder %s35, %s51
      %p53 = scmp.eq.s32.totalorder %s27, 0
      %p54 = por %p52, %p53
      %s56 = sadd.s32 %s55, 1
      %p59 = scmp.eq.s32.totalorder %s21, 1
      %p60 = scmp.ne.s32.totalorder %s55, %s57
      %p61 = scmp.eq.s32.totalorder %s21, 0
      %p62 = por %p60, %p61
      %p63 = scmp.ne.s32.totalorder %s55, %s57
      %p64 = scmp.eq.s32.totalorder %s26, 1
      %p65 = por %p63, %p64
      %p66 = scmp.ne.s32.totalorder %s57, %s58
      %p67 = scmp.eq.s32.totalorder %s26, 0
      %p68 = por %p66, %p67
      %p69 = scmp.ne.s32.totalorder %s57, %s58
      %p70 = scmp.eq.s32.totalorder %s27, 1
      %p71 = por %p69, %p70
      %p73 = scmp.ne.s32.totalorder %s58, %s72
      %p74 = scmp.eq.s32.totalorder %s27, 0
      %p75 = por %p73, %p74
      %s77 = sadd.s32 %s76, 1
      %p80 = scmp.eq.s32.totalorder %s21, 1
      %p81 = scmp.ne.s32.totalorder %s76, %s78
      %p82 = scmp.eq.s32.totalorder %s21, 0
      %p83 = por %p81, %p82
      %p84 = scmp.ne.s32.totalorder %s76, %s78
      %p85 = scmp.eq.s32.totalorder %s26, 1
      %p86 = por %p84, %p85
      %p87 = scmp.ne.s32.totalorder %s78, %s79
      %p88 = scmp.eq.s32.totalorder %s26, 0
      %p89 = por %p87, %p88
      %p90 = scmp.ne.s32.totalorder %s78, %s79
      %p91 = scmp.eq.s32.totalorder %s27, 1
      %p92 = por %p90, %p91
      %p94 = scmp.ne.s32.totalorder %s79, %s93
      %p95 = scmp.eq.s32.totalorder %s27, 0
      %p96 = por %p94, %p95
      %s98 = sadd.s32 %s97, 1
      %p101 = scmp.eq.s32.totalorder %s21, 1
      %p102 = scmp.ne.s32.totalorder %s97, %s99
      %p103 = scmp.eq.s32.totalorder %s21, 0
      %p104 = por %p102, %p103
      %p105 = scmp.ne.s32.totalorder %s97, %s99
      %p106 = scmp.eq.s32.totalorder %s26, 1
      %p107 = por %p105, %p106
      %p108 = scmp.ne.s32.totalorder %s99, %s100
      %p109 = scmp.eq.s32.totalorder %s26, 0
      %p110 = por %p108, %p109
      %p111 = scmp.ne.s32.totalorder %s99, %s100
      %p112 = scmp.eq.s32.totalorder %s27, 1
      %p113 = por %p111, %p112
      %p115 = scmp.ne.s32.totalorder %s100, %s114
      %p116 = scmp.eq.s32.totalorder %s27, 0
      %p117 = por %p115, %p116
      %s119 = sadd.s32 %s118, 1
      %p122 = scmp.eq.s32.totalorder %s21, 1
      %p123 = scmp.ne.s32.totalorder %s118, %s120
      %p124 = scmp.eq.s32.totalorder %s21, 0
      %p125 = por %p123, %p124
      %p126 = scmp.ne.s32.totalorder %s118, %s120
      %p127 = scmp.eq.s32.totalorder %s26, 1
      %p128 = por %p126, %p127
      %p129 = scmp.ne.s32.totalorder %s120, %s121
      %p130 = scmp.eq.s32.totalorder %s26, 0
      %p131 = por %p129, %p130
      %p132 = scmp.ne.s32.totalorder %s120, %s121
      %p133 = scmp.eq.s32.totalorder %s27, 1
      %p134 = por %p132, %p133
      %p136 = scmp.ne.s32.totalorder %s121, %s135
      %p137 = scmp.eq.s32.totalorder %s27, 0
      %p138 = por %p136, %p137
      %s140 = sadd.s32 %s139, 1
      %p143 = scmp.eq.s32.totalorder %s21, 1
      %p144 = scmp.ne.s32.totalorder %s139, %s141
      %p145 = scmp.eq.s32.totalorder %s21, 0
      %p146 = por %p144, %p145
      %p147 = scmp.ne.s32.totalorder %s139, %s141
      %p148 = scmp.eq.s32.totalorder %s26, 1
      %p149 = por %p147, %p148
      %p150 = scmp.ne.s32.totalorder %s141, %s142
      %p151 = scmp.eq.s32.totalorder %s26, 0
      %p152 = por %p150, %p151
      %p153 = scmp.ne.s32.totalorder %s141, %s142
      %p154 = scmp.eq.s32.totalorder %s27, 1
      %p155 = por %p153, %p154
      %p157 = scmp.ne.s32.totalorder %s142, %s156
      %p158 = scmp.eq.s32.totalorder %s27, 0
      %p159 = por %p157, %p158
      %s161 = sadd.s32 %s160, 1
      %p164 = scmp.eq.s32.totalorder %s21, 1
      %p165 = scmp.ne.s32.totalorder %s160, %s162
      %p166 = scmp.eq.s32.totalorder %s21, 0
      %p167 = por %p165, %p166
      %p168 = scmp.ne.s32.totalorder %s160, %s162
      %p169 = scmp.eq.s32.totalorder %s26, 1
      %p170 = por %p168, %p169
      %p171 = scmp.ne.s32.totalorder %s162, %s163
      %p172 = scmp.eq.s32.totalorder %s26, 0
      %p173 = por %p171, %p172
      %p174 = scmp.ne.s32.totalorder %s162, %s163
      %p175 = scmp.eq.s32.totalorder %s27, 1
      %p176 = por %p174, %p175
      %p178 = scmp.ne.s32.totalorder %s163, %s177
      %p179 = scmp.eq.s32.totalorder %s27, 0
      %p180 = por %p178, %p179
      %s182 = sadd.s32 %s181, 1
      %p185 = scmp.eq.s32.totalorder %s21, 1
      %p186 = scmp.ne.s32.totalorder %s181, %s183
      %p187 = scmp.eq.s32.totalorder %s21, 0
      %p188 = por %p186, %p187
      %p189 = scmp.ne.s32.totalorder %s181, %s183
      %p190 = scmp.eq.s32.totalorder %s26, 1
      %p191 = por %p189, %p190
      %p192 = scmp.ne.s32.totalorder %s183, %s184
      %p193 = scmp.eq.s32.totalorder %s26, 0
      %p194 = por %p192, %p193
      %p195 = scmp.ne.s32.totalorder %s183, %s184
      %p196 = scmp.eq.s32.totalorder %s27, 1
      %p197 = por %p195, %p196
      %p199 = scmp.ne.s32.totalorder %s184, %s198
      %p200 = scmp.eq.s32.totalorder %s27, 0
      %p201 = por %p199, %p200
      %s203 = sadd.s32 %s202, 1
      %p206 = scmp.eq.s32.totalorder %s21, 1
      %p207 = scmp.ne.s32.totalorder %s202, %s204
      %p208 = scmp.eq.s32.totalorder %s21, 0
      %p209 = por %p207, %p208
      %p210 = scmp.ne.s32.totalorder %s202, %s204
      %p211 = scmp.eq.s32.totalorder %s26, 1
      %p212 = por %p210, %p211
      %p213 = scmp.ne.s32.totalorder %s204, %s205
      %p214 = scmp.eq.s32.totalorder %s26, 0
      %p215 = por %p213, %p214
      %p216 = scmp.ne.s32.totalorder %s204, %s205
      %p217 = scmp.eq.s32.totalorder %s27, 1
      %p218 = por %p216, %p217
      %p220 = scmp.ne.s32.totalorder %s205, %s219
      %p221 = scmp.eq.s32.totalorder %s27, 0
      %p222 = por %p220, %p221
      %s223 = ssub.s32 %s21, %s28
      %p224 = scmp.eq.s32.totalorder %s223, 0
      %s226 = sadd.s32 %s225, 1
      %s227 = scalar_select %p224, %s225, %s226
      %p230 = pneg %p224
      %p231 = scmp.eq.s32.totalorder %s21, 1
      %p232 = por %p230, %p231
      %p233 = scmp.ne.s32.totalorder %s225, %s228
      %p234 = scmp.eq.s32.totalorder %s21, 0
      %p235 = por %p233, %p234
      %p236 = scmp.ne.s32.totalorder %s225, %s228
      %p237 = scmp.eq.s32.totalorder %s26, 1
      %p238 = por %p236, %p237
      %p239 = scmp.ne.s32.totalorder %s228, %s229
      %p240 = scmp.eq.s32.totalorder %s26, 0
      %p241 = por %p239, %p240
      %p242 = scmp.ne.s32.totalorder %s228, %s229
      %p243 = scmp.eq.s32.totalorder %s27, 1
      %p244 = por %p242, %p243
      %p246 = scmp.ne.s32.totalorder %s229, %s245
      %p247 = scmp.eq.s32.totalorder %s27, 0
      %p248 = por %p246, %p247
      %p249 = scmp.le.s32.totalorder 1, %s21
      %p250 = scmp.lt.s32.totalorder %s21, 3
      %p251 = pnand %p249, %p250
      %p252 = pneg %p251
      // Predicated region
      $region9: #{tpu_custom_call.1} parent=5 // pred_check
        _
      $region10: #{tpu_custom_call.1} parent=5 // pred_check_branch
        %254 = sbr.rel (%p251) target = $region12
      $region11: #{tpu_custom_call.1} parent=5 // pred_region
        %s255 = ssub.s32 %s21, 1
        // Predicated region
        $region13: #{tpu_custom_call.1} parent=11 // pred_check
          %p256 = pneg %p68
        $region14: #{tpu_custom_call.1} parent=11 // pred_check_branch
          %258 = sbr.rel (%p256) target = $region16
        $region15: #{tpu_custom_call.1} parent=11 // pred_region
          _
        $region16: #{tpu_custom_call.1} parent=11 // pred_fallthru
          _
        // Predicated region
        $region17: #{tpu_custom_call.1} parent=11 // pred_check
          %p259 = pneg %p89
        $region18: #{tpu_custom_call.1} parent=11 // pred_check_branch
          %261 = sbr.rel (%p259) target = $region20
        $region19: #{tpu_custom_call.1} parent=11 // pred_region
          _
        $region20: #{tpu_custom_call.1} parent=11 // pred_fallthru
          _
        // Predicated region
        $region21: #{tpu_custom_call.1} parent=11 // pred_check
          %p262 = pneg %p110
        $region22: #{tpu_custom_call.1} parent=11 // pred_check_branch
          %264 = sbr.rel (%p262) target = $region24
        $region23: #{tpu_custom_call.1} parent=11 // pred_region
          _
        $region24: #{tpu_custom_call.1} parent=11 // pred_fallthru
          _
        // Predicated region
        $region25: #{tpu_custom_call.1} parent=11 // pred_check
          %p265 = pneg %p131
        $region26: #{tpu_custom_call.1} parent=11 // pred_check_branch
          %267 = sbr.rel (%p265) target = $region28
        $region27: #{tpu_custom_call.1} parent=11 // pred_region
          _
        $region28: #{tpu_custom_call.1} parent=11 // pred_fallthru
          _
        // Predicated region
        $region29: #{tpu_custom_call.1} parent=11 // pred_check
          %p268 = pneg %p152
        $region30: #{tpu_custom_call.1} parent=11 // pred_check_branch
          %270 = sbr.rel (%p268) target = $region32
        $region31: #{tpu_custom_call.1} parent=11 // pred_region
          _
        $region32: #{tpu_custom_call.1} parent=11 // pred_fallthru
          _
        // Predicated region
        $region33: #{tpu_custom_call.1} parent=11 // pred_check
          %p271 = pneg %p173
        $region34: #{tpu_custom_call.1} parent=11 // pred_check_branch
          %273 = sbr.rel (%p271) target = $region36
        $region35: #{tpu_custom_call.1} parent=11 // pred_region
          _
        $region36: #{tpu_custom_call.1} parent=11 // pred_fallthru
          _
        // Predicated region
        $region37: #{tpu_custom_call.1} parent=11 // pred_check
          %p274 = pneg %p194
        $region38: #{tpu_custom_call.1} parent=11 // pred_check_branch
          %276 = sbr.rel (%p274) target = $region40
        $region39: #{tpu_custom_call.1} parent=11 // pred_region
          _
        $region40: #{tpu_custom_call.1} parent=11 // pred_fallthru
          _
        // Predicated region
        $region41: #{tpu_custom_call.1} parent=11 // pred_check
          %p277 = pneg %p215
        $region42: #{tpu_custom_call.1} parent=11 // pred_check_branch
          %279 = sbr.rel (%p277) target = $region44
        $region43: #{tpu_custom_call.1} parent=11 // pred_region
          _
        $region44: #{tpu_custom_call.1} parent=11 // pred_fallthru
          _
      $region12: #{tpu_custom_call.1} parent=5 // pred_fallthru
        _
      %p280 = scmp.lt.s32.totalorder %s21, 2
      // Predicated region
      $region45: #{tpu_custom_call.1} parent=5 // pred_check
        %p281 = pneg %p280
      $region46: #{tpu_custom_call.1} parent=5 // pred_check_branch
        %283 = sbr.rel (%p281) target = $region48
      $region47: #{tpu_custom_call.1} parent=5 // pred_region
        // Predicated region
        $region49: #{tpu_custom_call.1} parent=47 // pred_check
          %p284 = pneg %p41
        $region50: #{tpu_custom_call.1} parent=47 // pred_check_branch
          %286 = sbr.rel (%p284) target = $region52
        $region51: #{tpu_custom_call.1} parent=47 // pred_region
          %s287 = sand.u32 %s31, 1
          %s288 = scalar_lea.sflag [#allocation3], %s287
          %s289 = sand.u32 %s31, 1
          %s290 = smul.addr %s289, 8
          %s291 = scalar_lea.vmem [#allocation2], %s290
          %s293 = ssub.s32 128, 128
          %294 = vsyncadd %s288, %s293
          %s295 = smul.addr %s21, 128
          %s296 = scalar_lea.hbm %s0, %s295
          %s298 = sshll.u32 %s291, 4
          %s299 = int_to_ptr.vmem [resolvable:$true] %s298
          %301 = dma.hbm_to_vmem [thread:$0]  %s296, 128, %s299, %s288
        $region52: #{tpu_custom_call.1} parent=47 // pred_fallthru
          _
      $region48: #{tpu_custom_call.1} parent=5 // pred_fallthru
        _
      %p302 = scmp.le.s32.totalorder 1, %s21
      %p303 = scmp.lt.s32.totalorder %s21, 3
      %p304 = pnand %p302, %p303
      %p305 = pneg %p304
      // Predicated region
      $region53: #{tpu_custom_call.1} parent=5 // pred_check
        _
      $region54: #{tpu_custom_call.1} parent=5 // pred_check_branch
        %307 = sbr.rel (%p304) target = $region56
      $region55: #{tpu_custom_call.1} parent=5 // pred_region
        %s308 = ssub.s32 %s21, 1
        %s309 = sand.u32 %s34, 1
        %s310 = scalar_lea.sflag [#allocation3], %s309
        %s311 = sand.u32 %s34, 1
        %s312 = smul.addr %s311, 8
        %s313 = scalar_lea.vmem [#allocation2], %s312
        // Predicated region
        $region57: #{tpu_custom_call.1} parent=55 // pred_check
          %p314 = pneg %p47
        $region58: #{tpu_custom_call.1} parent=55 // pred_check_branch
          %316 = sbr.rel (%p314) target = $region60
        $region59: #{tpu_custom_call.1} parent=55 // pred_region
          %317 = dma.done %s310, 128
        $region60: #{tpu_custom_call.1} parent=55 // pred_fallthru
          _
        %s318 = sand.u32 %s34, 1
        %s319 = scalar_lea.sflag [#allocation3], %s318
        %s320 = sand.u32 %s34, 1
        %s321 = smul.addr %s320, 8
        %s322 = scalar_lea.vmem [#allocation2], %s321
        %p323 = pneg %p47
        %p324 = pneg %p44
        %p325 = pneg %p68
        %p326 = pneg %p65
        %p327 = pneg %p89
        %p328 = pneg %p86
        %p329 = pneg %p110
        %p330 = pneg %p107
        %p331 = pneg %p131
        %p332 = pneg %p128
        %p333 = pneg %p152
        %p334 = pneg %p149
        %p335 = pneg %p173
        %p336 = pneg %p170
        %p337 = pneg %p194
        %p338 = pneg %p191
        %p339 = pneg %p215
        %p340 = pneg %p212
        %p341 = pneg %p241
        %p342 = pneg %p238
        %s343 = sand.u32 %s228, 1
        %s344 = scalar_lea.sflag [#allocation4], %s343
        %s345 = sand.u32 %s228, 1
        %s346 = smul.addr %s345, 8
        %s347 = scalar_lea.vmem [#allocation5], %s346
        %v348 = vld [vmem:[%s313] sm:$0xff]
        %v349 = vld [vmem:[%s1] sm:$0xff]
        %v350 = vld [vmem:[%s1 + $0x8] sm:$0xff]
        %v351 = vld [vmem:[%s1 + $0x10] sm:$0xff]
        %v352 = vld [vmem:[%s1 + $0x18] sm:$0xff]
        %v353 = vld [vmem:[%s2] sm:$0x1]
        %v355 = vlaneseq
        %v356 = vshrl.u32 %v355, 7
        %v357 = vsub.s32 0, %v356
        %v358 = vrot.slane %v353, %v357
        %vm360 = vcmask 261120
        %v362 = vsel %vm360, %v348, 0
        %364 = vmatprep.subr.mxu0 0.0
        %365 = vmatpush1.msra.mxu0 %v349
        %366 = vmatprep.subr.mxu0 0.0
        %367 = vmatpush1.msra.mxu0 %v350
        %368 = vmatprep.subr.mxu0 0.0
        %369 = vmatpush1.msra.mxu0 %v351
        %370 = vmatprep.subr.mxu0 0.0
        %371 = vmatpush1.msra.mxu0 %v352
        %372 = vmatprep.subr.mxu0 0.0
        %373 = vmatpush1.msra.mxu0 0.0
        %374 = vmatprep.subr.mxu0 0.0
        %375 = vmatpush1.msra.mxu0 0.0
        %376 = vmatprep.subr.mxu0 0.0
        %377 = vmatpush1.msra.mxu0 0.0
        %378 = vmatprep.subr.mxu0 0.0
        %379 = vmatpush1.msra.mxu0 0.0
        %380 = vmatprep.subr.mxu0 0.0
        %381 = vmatpush1.msra.mxu0 0.0
        %382 = vmatprep.subr.mxu0 0.0
        %383 = vmatpush1.msra.mxu0 0.0
        %384 = vmatprep.subr.mxu0 0.0
        %385 = vmatpush1.msra.mxu0 0.0
        %386 = vmatprep.subr.mxu0 0.0
        %387 = vmatpush1.msra.mxu0 0.0
        %388 = vmatprep.subr.mxu0 0.0
        %389 = vmatpush1.msra.mxu0 0.0
        %390 = vmatprep.subr.mxu0 0.0
        %391 = vmatpush1.msra.mxu0 0.0
        %392 = vmatprep.subr.mxu0 0.0
        %393 = vmatpush1.msra.mxu0 0.0
        %394 = vmatprep.subr.mxu0 0.0
        %395 = vmatpush1.msra.mxu0 0.0
        %396 = vmatprep.subr.mxu0 0.0
        %397 = vmatpush1.msra.mxu0 0.0
        %398 = vmatprep.subr.mxu0 0.0
        %399 = vmatpush1.msra.mxu0 0.0
        %400 = vmatprep.subr.mxu0 0.0
        %401 = vmatpush1.msra.mxu0 0.0
        %402 = vmatprep.subr.mxu0 0.0
        %403 = vmatpush1.msra.mxu0 0.0
        %404 = vmatprep.subr.mxu0 0.0
        %405 = vmatpush1.msra.mxu0 0.0
        %406 = vmatprep.subr.mxu0 0.0
        %407 = vmatpush1.msra.mxu0 0.0
        %408 = vmatprep.subr.mxu0 0.0
        %409 = vmatpush1.msra.mxu0 0.0
        %410 = vmatprep.subr.mxu0 0.0
        %411 = vmatpush1.msra.mxu0 0.0
        %412 = vmatprep.subr.mxu0 0.0
        %413 = vmatpush1.msra.mxu0 0.0
        %414 = vmatprep.subr.mxu0 0.0
        %415 = vmatpush1.msra.mxu0 0.0
        %416 = vmatprep.subr.mxu0 0.0
        %417 = vmatpush1.msra.mxu0 0.0
        %418 = vmatprep.subr.mxu0 0.0
        %419 = vmatpush1.msra.mxu0 0.0
        %420 = vmatprep.subr.mxu0 0.0
        %421 = vmatpush1.msra.mxu0 0.0
        %422 = vmatprep.subr.mxu0 0.0
        %423 = vmatpush1.msra.mxu0 0.0
        %424 = vmatprep.subr.mxu0 0.0
        %425 = vmatpush1.msra.mxu0 0.0
        %426 = vmatprep.subr.mxu0 0.0
        %427 = vmatpush1.msra.mxu0 0.0
        %428 = vmatprep.mubr.f32.mxu0 0.0
        %429 = vmatmul.mubr.f32.gmra.mrb[0].mxu0 %v362
        %v430 = vpop.f32.mrb[0].mxu0
        %v431 = vadd.f32 %v358, %v430
        %v432 = vpop.f32.mrb[0].mxu0
        %433 = vdwg.mxu0
        %v434 = vmul.f32 %v431, 0.35355338
        %436 = vrot.lane.b32.xlu0 %v434, 120
        %v437 = vpop.permute.xlu0 %436
        %438 = vrot.lane.b32.xlu0 %v434, 112
        %v439 = vpop.permute.xlu0 %438
        %440 = vrot.lane.b32.xlu0 %v434, 104
        %v441 = vpop.permute.xlu0 %440
        %443 = vrot.lane.b32.xlu0 %v431, 120
        %v444 = vpop.permute.xlu0 %443
        %445 = vrot.lane.b32.xlu0 %v431, 112
        %v446 = vpop.permute.xlu0 %445
        %447 = vrot.lane.b32.xlu0 %v431, 104
        %v448 = vpop.permute.xlu0 %447
        %449 = vrot.lane.b32.xlu0 %v431, 96
        %v450 = vpop.permute.xlu0 %449
        %vm451 = vcmask 64512
        %v452 = vsel %vm451, %v434, 0
        %v454 = vsel %vm451, %v450, 0
        %456 = vmatprep.subr.mxu0 0.0
        %457 = vmatpush1.xpose.msra.mxu0 %v454
        %458 = vmatprep.subr.mxu0 0.0
        %459 = vmatpush1.xpose.msra.mxu0 0.0
        %460 = vmatprep.subr.mxu0 0.0
        %461 = vmatpush1.xpose.msra.mxu0 0.0
        %462 = vmatprep.subr.mxu0 0.0
        %463 = vmatpush1.xpose.msra.mxu0 0.0
        %464 = vmatprep.subr.mxu0 0.0
        %465 = vmatpush1.xpose.msra.mxu0 0.0
        %466 = vmatprep.subr.mxu0 0.0
        %467 = vmatpush1.xpose.msra.mxu0 0.0
        %468 = vmatprep.subr.mxu0 0.0
        %469 = vmatpush1.xpose.msra.mxu0 0.0
        %470 = vmatprep.subr.mxu0 0.0
        %471 = vmatpush1.xpose.msra.mxu0 0.0
        %472 = vmatprep.subr.mxu0 0.0
        %473 = vmatpush1.xpose.msra.mxu0 0.0
        %474 = vmatprep.subr.mxu0 0.0
        %475 = vmatpush1.xpose.msra.mxu0 0.0
        %476 = vmatprep.subr.mxu0 0.0
        %477 = vmatpush1.xpose.msra.mxu0 0.0
        %478 = vmatprep.subr.mxu0 0.0
        %479 = vmatpush1.xpose.msra.mxu0 0.0
        %480 = vmatprep.subr.mxu0 0.0
        %481 = vmatpush1.xpose.msra.mxu0 0.0
        %482 = vmatprep.subr.mxu0 0.0
        %483 = vmatpush1.xpose.msra.mxu0 0.0
        %484 = vmatprep.subr.mxu0 0.0
        %485 = vmatpush1.xpose.msra.mxu0 0.0
        %486 = vmatprep.subr.mxu0 0.0
        %487 = vmatpush1.xpose.msra.mxu0 0.0
        %488 = vmatprep.subr.mxu0 0.0
        %489 = vmatpush1.xpose.msra.mxu0 0.0
        %490 = vmatprep.subr.mxu0 0.0
        %491 = vmatpush1.xpose.msra.mxu0 0.0
        %492 = vmatprep.subr.mxu0 0.0
        %493 = vmatpush1.xpose.msra.mxu0 0.0
        %494 = vmatprep.subr.mxu0 0.0
        %495 = vmatpush1.xpose.msra.mxu0 0.0
        %496 = vmatprep.subr.mxu0 0.0
        %497 = vmatpush1.xpose.msra.mxu0 0.0
        %498 = vmatprep.subr.mxu0 0.0
        %499 = vmatpush1.xpose.msra.mxu0 0.0
        %500 = vmatprep.subr.mxu0 0.0
        %501 = vmatpush1.xpose.msra.mxu0 0.0
        %502 = vmatprep.subr.mxu0 0.0
        %503 = vmatpush1.xpose.msra.mxu0 0.0
        %504 = vmatprep.subr.mxu0 0.0
        %505 = vmatpush1.xpose.msra.mxu0 0.0
        %506 = vmatprep.subr.mxu0 0.0
        %507 = vmatpush1.xpose.msra.mxu0 0.0
        %508 = vmatprep.subr.mxu0 0.0
        %509 = vmatpush1.xpose.msra.mxu0 0.0
        %510 = vmatprep.subr.mxu0 0.0
        %511 = vmatpush1.xpose.msra.mxu0 0.0
        %512 = vmatprep.subr.mxu0 0.0
        %513 = vmatpush1.xpose.msra.mxu0 0.0
        %514 = vmatprep.subr.mxu0 0.0
        %515 = vmatpush1.xpose.msra.mxu0 0.0
        %516 = vmatprep.subr.mxu0 0.0
        %517 = vmatpush1.xpose.msra.mxu0 0.0
        %518 = vmatprep.subr.mxu0 0.0
        %519 = vmatpush1.xpose.msra.mxu0 0.0
        %520 = vmatprep.mubr.f32.mxu0 0.0
        %521 = vmatmul.mubr.f32.gmra.mrb[0].mxu0 %v452
        %v522 = vpop.f32.mrb[0].mxu0
        %v523 = vadd.f32 0.0, %v522
        %v524 = vpop.f32.mrb[0].mxu0
        %525 = vdwg.mxu0
        %526 = vrot.lane.b32.xlu0 %v444, 96
        %v527 = vpop.permute.xlu0 %526
        %v528 = vsel %vm451, %v437, 0
        %v530 = vsel %vm451, %v527, 0
        %532 = vmatprep.subr.mxu0 0.0
        %533 = vmatpush1.xpose.msra.mxu0 %v530
        %534 = vmatprep.subr.mxu0 0.0
        %535 = vmatpush1.xpose.msra.mxu0 0.0
        %536 = vmatprep.subr.mxu0 0.0
        %537 = vmatpush1.xpose.msra.mxu0 0.0
        %538 = vmatprep.subr.mxu0 0.0
        %539 = vmatpush1.xpose.msra.mxu0 0.0
        %540 = vmatprep.subr.mxu0 0.0
        %541 = vmatpush1.xpose.msra.mxu0 0.0
        %542 = vmatprep.subr.mxu0 0.0
        %543 = vmatpush1.xpose.msra.mxu0 0.0
        %544 = vmatprep.subr.mxu0 0.0
        %545 = vmatpush1.xpose.msra.mxu0 0.0
        %546 = vmatprep.subr.mxu0 0.0
        %547 = vmatpush1.xpose.msra.mxu0 0.0
        %548 = vmatprep.subr.mxu0 0.0
        %549 = vmatpush1.xpose.msra.mxu0 0.0
        %550 = vmatprep.subr.mxu0 0.0
        %551 = vmatpush1.xpose.msra.mxu0 0.0
        %552 = vmatprep.subr.mxu0 0.0
        %553 = vmatpush1.xpose.msra.mxu0 0.0
        %554 = vmatprep.subr.mxu0 0.0
        %555 = vmatpush1.xpose.msra.mxu0 0.0
        %556 = vmatprep.subr.mxu0 0.0
        %557 = vmatpush1.xpose.msra.mxu0 0.0
        %558 = vmatprep.subr.mxu0 0.0
        %559 = vmatpush1.xpose.msra.mxu0 0.0
        %560 = vmatprep.subr.mxu0 0.0
        %561 = vmatpush1.xpose.msra.mxu0 0.0
        %562 = vmatprep.subr.mxu0 0.0
        %563 = vmatpush1.xpose.msra.mxu0 0.0
        %564 = vmatprep.subr.mxu0 0.0
        %565 = vmatpush1.xpose.msra.mxu0 0.0
        %566 = vmatprep.subr.mxu0 0.0
        %567 = vmatpush1.xpose.msra.mxu0 0.0
        %568 = vmatprep.subr.mxu0 0.0
        %569 = vmatpush1.xpose.msra.mxu0 0.0
        %570 = vmatprep.subr.mxu0 0.0
        %571 = vmatpush1.xpose.msra.mxu0 0.0
        %572 = vmatprep.subr.mxu0 0.0
        %573 = vmatpush1.xpose.msra.mxu0 0.0
        %574 = vmatprep.subr.mxu0 0.0
        %575 = vmatpush1.xpose.msra.mxu0 0.0
        %576 = vmatprep.subr.mxu0 0.0
        %577 = vmatpush1.xpose.msra.mxu0 0.0
        %578 = vmatprep.subr.mxu0 0.0
        %579 = vmatpush1.xpose.msra.mxu0 0.0
        %580 = vmatprep.subr.mxu0 0.0
        %581 = vmatpush1.xpose.msra.mxu0 0.0
        %582 = vmatprep.subr.mxu0 0.0
        %583 = vmatpush1.xpose.msra.mxu0 0.0
        %584 = vmatprep.subr.mxu0 0.0
        %585 = vmatpush1.xpose.msra.mxu0 0.0
        %586 = vmatprep.subr.mxu0 0.0
        %587 = vmatpush1.xpose.msra.mxu0 0.0
        %588 = vmatprep.subr.mxu0 0.0
        %589 = vmatpush1.xpose.msra.mxu0 0.0
        %590 = vmatprep.subr.mxu0 0.0
        %591 = vmatpush1.xpose.msra.mxu0 0.0
        %592 = vmatprep.subr.mxu0 0.0
        %593 = vmatpush1.xpose.msra.mxu0 0.0
        %594 = vmatprep.subr.mxu0 0.0
        %595 = vmatpush1.xpose.msra.mxu0 0.0
        %596 = vmatprep.mubr.f32.mxu0 0.0
        %597 = vmatmul.mubr.f32.gmra.mrb[0].mxu0 %v528
        %v598 = vpop.f32.mrb[0].mxu0
        %v599 = vadd.f32 0.0, %v598
        %v600 = vpop.f32.mrb[0].mxu0
        %601 = vdwg.mxu0
        %602 = vrot.lane.b32.xlu0 %v446, 96
        %v603 = vpop.permute.xlu0 %602
        %v604 = vsel %vm451, %v439, 0
        %v606 = vsel %vm451, %v603, 0
        %608 = vmatprep.subr.mxu0 0.0
        %609 = vmatpush1.xpose.msra.mxu0 %v606
        %610 = vmatprep.subr.mxu0 0.0
        %611 = vmatpush1.xpose.msra.mxu0 0.0
        %612 = vmatprep.subr.mxu0 0.0
        %613 = vmatpush1.xpose.msra.mxu0 0.0
        %614 = vmatprep.subr.mxu0 0.0
        %615 = vmatpush1.xpose.msra.mxu0 0.0
        %616 = vmatprep.subr.mxu0 0.0
        %617 = vmatpush1.xpose.msra.mxu0 0.0
        %618 = vmatprep.subr.mxu0 0.0
        %619 = vmatpush1.xpose.msra.mxu0 0.0
        %620 = vmatprep.subr.mxu0 0.0
        %621 = vmatpush1.xpose.msra.mxu0 0.0
        %622 = vmatprep.subr.mxu0 0.0
        %623 = vmatpush1.xpose.msra.mxu0 0.0
        %624 = vmatprep.subr.mxu0 0.0
        %625 = vmatpush1.xpose.msra.mxu0 0.0
        %626 = vmatprep.subr.mxu0 0.0
        %627 = vmatpush1.xpose.msra.mxu0 0.0
        %628 = vmatprep.subr.mxu0 0.0
        %629 = vmatpush1.xpose.msra.mxu0 0.0
        %630 = vmatprep.subr.mxu0 0.0
        %631 = vmatpush1.xpose.msra.mxu0 0.0
        %632 = vmatprep.subr.mxu0 0.0
        %633 = vmatpush1.xpose.msra.mxu0 0.0
        %634 = vmatprep.subr.mxu0 0.0
        %635 = vmatpush1.xpose.msra.mxu0 0.0
        %636 = vmatprep.subr.mxu0 0.0
        %637 = vmatpush1.xpose.msra.mxu0 0.0
        %638 = vmatprep.subr.mxu0 0.0
        %639 = vmatpush1.xpose.msra.mxu0 0.0
        %640 = vmatprep.subr.mxu0 0.0
        %641 = vmatpush1.xpose.msra.mxu0 0.0
        %642 = vmatprep.subr.mxu0 0.0
        %643 = vmatpush1.xpose.msra.mxu0 0.0
        %644 = vmatprep.subr.mxu0 0.0
        %645 = vmatpush1.xpose.msra.mxu0 0.0
        %646 = vmatprep.subr.mxu0 0.0
        %647 = vmatpush1.xpose.msra.mxu0 0.0
        %648 = vmatprep.subr.mxu0 0.0
        %649 = vmatpush1.xpose.msra.mxu0 0.0
        %650 = vmatprep.subr.mxu0 0.0
        %651 = vmatpush1.xpose.msra.mxu0 0.0
        %652 = vmatprep.subr.mxu0 0.0
        %653 = vmatpush1.xpose.msra.mxu0 0.0
        %654 = vmatprep.subr.mxu0 0.0
        %655 = vmatpush1.xpose.msra.mxu0 0.0
        %656 = vmatprep.subr.mxu0 0.0
        %657 = vmatpush1.xpose.msra.mxu0 0.0
        %658 = vmatprep.subr.mxu0 0.0
        %659 = vmatpush1.xpose.msra.mxu0 0.0
        %660 = vmatprep.subr.mxu0 0.0
        %661 = vmatpush1.xpose.msra.mxu0 0.0
        %662 = vmatprep.subr.mxu0 0.0
        %663 = vmatpush1.xpose.msra.mxu0 0.0
        %664 = vmatprep.subr.mxu0 0.0
        %665 = vmatpush1.xpose.msra.mxu0 0.0
        %666 = vmatprep.subr.mxu0 0.0
        %667 = vmatpush1.xpose.msra.mxu0 0.0
        %668 = vmatprep.subr.mxu0 0.0
        %669 = vmatpush1.xpose.msra.mxu0 0.0
        %670 = vmatprep.subr.mxu0 0.0
        %671 = vmatpush1.xpose.msra.mxu0 0.0
        %672 = vmatprep.mubr.f32.mxu0 0.0
        %673 = vmatmul.mubr.f32.gmra.mrb[0].mxu0 %v604
        %v674 = vpop.f32.mrb[0].mxu0
        %v675 = vadd.f32 0.0, %v674
        %v676 = vpop.f32.mrb[0].mxu0
        %677 = vdwg.mxu0
        %678 = vrot.lane.b32.xlu0 %v448, 96
        %v679 = vpop.permute.xlu0 %678
        %v680 = vsel %vm451, %v441, 0
        %v682 = vsel %vm451, %v679, 0
        %684 = vmatprep.subr.mxu0 0.0
        %685 = vmatpush1.xpose.msra.mxu0 %v682
        %686 = vmatprep.subr.mxu0 0.0
        %687 = vmatpush1.xpose.msra.mxu0 0.0
        %688 = vmatprep.subr.mxu0 0.0
        %689 = vmatpush1.xpose.msra.mxu0 0.0
        %690 = vmatprep.subr.mxu0 0.0
        %691 = vmatpush1.xpose.msra.mxu0 0.0
        %692 = vmatprep.subr.mxu0 0.0
        %693 = vmatpush1.xpose.msra.mxu0 0.0
        %694 = vmatprep.subr.mxu0 0.0
        %695 = vmatpush1.xpose.msra.mxu0 0.0
        %696 = vmatprep.subr.mxu0 0.0
        %697 = vmatpush1.xpose.msra.mxu0 0.0
        %698 = vmatprep.subr.mxu0 0.0
        %699 = vmatpush1.xpose.msra.mxu0 0.0
        %700 = vmatprep.subr.mxu0 0.0
        %701 = vmatpush1.xpose.msra.mxu0 0.0
        %702 = vmatprep.subr.mxu0 0.0
        %703 = vmatpush1.xpose.msra.mxu0 0.0
        %704 = vmatprep.subr.mxu0 0.0
        %705 = vmatpush1.xpose.msra.mxu0 0.0
        %706 = vmatprep.subr.mxu0 0.0
        %707 = vmatpush1.xpose.msra.mxu0 0.0
        %708 = vmatprep.subr.mxu0 0.0
        %709 = vmatpush1.xpose.msra.mxu0 0.0
        %710 = vmatprep.subr.mxu0 0.0
        %711 = vmatpush1.xpose.msra.mxu0 0.0
        %712 = vmatprep.subr.mxu0 0.0
        %713 = vmatpush1.xpose.msra.mxu0 0.0
        %714 = vmatprep.subr.mxu0 0.0
        %715 = vmatpush1.xpose.msra.mxu0 0.0
        %716 = vmatprep.subr.mxu0 0.0
        %717 = vmatpush1.xpose.msra.mxu0 0.0
        %718 = vmatprep.subr.mxu0 0.0
        %719 = vmatpush1.xpose.msra.mxu0 0.0
        %720 = vmatprep.subr.mxu0 0.0
        %721 = vmatpush1.xpose.msra.mxu0 0.0
        %722 = vmatprep.subr.mxu0 0.0
        %723 = vmatpush1.xpose.msra.mxu0 0.0
        %724 = vmatprep.subr.mxu0 0.0
        %725 = vmatpush1.xpose.msra.mxu0 0.0
        %726 = vmatprep.subr.mxu0 0.0
        %727 = vmatpush1.xpose.msra.mxu0 0.0
        %728 = vmatprep.subr.mxu0 0.0
        %729 = vmatpush1.xpose.msra.mxu0 0.0
        %730 = vmatprep.subr.mxu0 0.0
        %731 = vmatpush1.xpose.msra.mxu0 0.0
        %732 = vmatprep.subr.mxu0 0.0
        %733 = vmatpush1.xpose.msra.mxu0 0.0
        %734 = vmatprep.subr.mxu0 0.0
        %735 = vmatpush1.xpose.msra.mxu0 0.0
        %736 = vmatprep.subr.mxu0 0.0
        %737 = vmatpush1.xpose.msra.mxu0 0.0
        %738 = vmatprep.subr.mxu0 0.0
        %739 = vmatpush1.xpose.msra.mxu0 0.0
        %740 = vmatprep.subr.mxu0 0.0
        %741 = vmatpush1.xpose.msra.mxu0 0.0
        %742 = vmatprep.subr.mxu0 0.0
        %743 = vmatpush1.xpose.msra.mxu0 0.0
        %744 = vmatprep.subr.mxu0 0.0
        %745 = vmatpush1.xpose.msra.mxu0 0.0
        %746 = vmatprep.subr.mxu0 0.0
        %747 = vmatpush1.xpose.msra.mxu0 0.0
        %748 = vmatprep.mubr.f32.mxu0 0.0
        %749 = vmatmul.mubr.f32.gmra.mrb[0].mxu0 %v680
        %v750 = vpop.f32.mrb[0].mxu0
        %v751 = vadd.f32 0.0, %v750
        %v752 = vpop.f32.mrb[0].mxu0
        %753 = vdwg.mxu0
        %v754 = vsel %vm451, %v523, -inf
        %755 = vmax.xlane.f32.xlu0 %v754
        %v756 = vpop.xlane.xlu0 %755
        %v757 = vsel %vm451, %v599, -inf
        %758 = vmax.xlane.f32.xlu0 %v757
        %v759 = vpop.xlane.xlu0 %758
        %v760 = vsel %vm451, %v675, -inf
        %761 = vmax.xlane.f32.xlu0 %v760
        %v762 = vpop.xlane.xlu0 %761
        %v763 = vsel %vm451, %v751, -inf
        %764 = vmax.xlane.f32.xlu0 %v763
        %v765 = vpop.xlane.xlu0 %764
        %v766 = vsub.f32 -inf, %v756
        %v767 = vsub.f32 -inf, %v759
        %v768 = vsub.f32 -inf, %v762
        %v769 = vsub.f32 -inf, %v765
        %v770 = vmul.f32 %v766, 1.442695
        %v771 = vpow.pop %v770
        %v772 = vmul.f32 %v767, 1.442695
        %v773 = vpow.pop %v772
        %v774 = vmul.f32 %v768, 1.442695
        %v775 = vpow.pop %v774
        %v776 = vmul.f32 %v769, 1.442695
        %v777 = vpow.pop %v776
        %v778 = vsub.f32 %v523, %v756
        %v779 = vsub.f32 %v599, %v759
        %v780 = vsub.f32 %v675, %v762
        %v781 = vsub.f32 %v751, %v765
        %v782 = vmul.f32 %v778, 1.442695
        %v783 = vpow.pop %v782
        %v784 = vmul.f32 %v779, 1.442695
        %v785 = vpow.pop %v784
        %v786 = vmul.f32 %v780, 1.442695
        %v787 = vpow.pop %v786
        %v788 = vmul.f32 %v781, 1.442695
        %v789 = vpow.pop %v788
        %v790 = vmul.f32 %v771, 0.0
        %v791 = vmul.f32 %v773, 0.0
        %v792 = vmul.f32 %v775, 0.0
        %v793 = vmul.f32 %v777, 0.0
        %v794 = vsel %vm451, %v783, 0.0
        %795 = vadd.xlane.f32.xlu0 %v794
        %v796 = vpop.xlane.xlu0 %795
        %v797 = vsel %vm451, %v785, 0.0
        %798 = vadd.xlane.f32.xlu0 %v797
        %v799 = vpop.xlane.xlu0 %798
        %v800 = vsel %vm451, %v787, 0.0
        %801 = vadd.xlane.f32.xlu0 %v800
        %v802 = vpop.xlane.xlu0 %801
        %v803 = vsel %vm451, %v789, 0.0
        %804 = vadd.xlane.f32.xlu0 %v803
        %v805 = vpop.xlane.xlu0 %804
        %v806 = vadd.f32 %v790, %v796
        %v807 = vadd.f32 %v791, %v799
        %v808 = vadd.f32 %v792, %v802
        %v809 = vadd.f32 %v793, %v805
        %810 = vrot.lane.b32.xlu0 %v431, 64
        %v811 = vpop.permute.xlu0 %810
        %v814 = vsel %vm451, %v783, 0
        %816 = vmatprep.subr.mxu0 0.0
        %817 = vmatpush1.msra.mxu0 %v811
        %818 = vmatprep.subr.mxu0 0.0
        %819 = vmatpush1.msra.mxu0 0.0
        %820 = vmatprep.subr.mxu0 0.0
        %821 = vmatpush1.msra.mxu0 0.0
        %822 = vmatprep.subr.mxu0 0.0
        %823 = vmatpush1.msra.mxu0 0.0
        %824 = vmatprep.subr.mxu0 0.0
        %825 = vmatpush1.msra.mxu0 0.0
        %826 = vmatprep.subr.mxu0 0.0
        %827 = vmatpush1.msra.mxu0 0.0
        %828 = vmatprep.subr.mxu0 0.0
        %829 = vmatpush1.msra.mxu0 0.0
        %830 = vmatprep.subr.mxu0 0.0
        %831 = vmatpush1.msra.mxu0 0.0
        %832 = vmatprep.subr.mxu0 0.0
        %833 = vmatpush1.msra.mxu0 0.0
        %834 = vmatprep.subr.mxu0 0.0
        %835 = vmatpush1.msra.mxu0 0.0
        %836 = vmatprep.subr.mxu0 0.0
        %837 = vmatpush1.msra.mxu0 0.0
        %838 = vmatprep.subr.mxu0 0.0
        %839 = vmatpush1.msra.mxu0 0.0
        %840 = vmatprep.subr.mxu0 0.0
        %841 = vmatpush1.msra.mxu0 0.0
        %842 = vmatprep.subr.mxu0 0.0
        %843 = vmatpush1.msra.mxu0 0.0
        %844 = vmatprep.subr.mxu0 0.0
        %845 = vmatpush1.msra.mxu0 0.0
        %846 = vmatprep.subr.mxu0 0.0
        %847 = vmatpush1.msra.mxu0 0.0
        %848 = vmatprep.subr.mxu0 0.0
        %849 = vmatpush1.msra.mxu0 0.0
        %850 = vmatprep.subr.mxu0 0.0
        %851 = vmatpush1.msra.mxu0 0.0
        %852 = vmatprep.subr.mxu0 0.0
        %853 = vmatpush1.msra.mxu0 0.0
        %854 = vmatprep.subr.mxu0 0.0
        %855 = vmatpush1.msra.mxu0 0.0
        %856 = vmatprep.subr.mxu0 0.0
        %857 = vmatpush1.msra.mxu0 0.0
        %858 = vmatprep.subr.mxu0 0.0
        %859 = vmatpush1.msra.mxu0 0.0
        %860 = vmatprep.subr.mxu0 0.0
        %861 = vmatpush1.msra.mxu0 0.0
        %862 = vmatprep.subr.mxu0 0.0
        %863 = vmatpush1.msra.mxu0 0.0
        %864 = vmatprep.subr.mxu0 0.0
        %865 = vmatpush1.msra.mxu0 0.0
        %866 = vmatprep.subr.mxu0 0.0
        %867 = vmatpush1.msra.mxu0 0.0
        %868 = vmatprep.subr.mxu0 0.0
        %869 = vmatpush1.msra.mxu0 0.0
        %870 = vmatprep.subr.mxu0 0.0
        %871 = vmatpush1.msra.mxu0 0.0
        %872 = vmatprep.subr.mxu0 0.0
        %873 = vmatpush1.msra.mxu0 0.0
        %874 = vmatprep.subr.mxu0 0.0
        %875 = vmatpush1.msra.mxu0 0.0
        %876 = vmatprep.subr.mxu0 0.0
        %877 = vmatpush1.msra.mxu0 0.0
        %878 = vmatprep.subr.mxu0 0.0
        %879 = vmatpush1.msra.mxu0 0.0
        %880 = vmatprep.mubr.f32.mxu0 0.0
        %881 = vmatmul.mubr.f32.gmra.mrb[0].mxu0 %v814
        %v882 = vpop.f32.mrb[0].mxu0
        %v883 = vadd.f32 0.0, %v882
        %v884 = vpop.f32.mrb[0].mxu0
        %885 = vdwg.mxu0
        %886 = vrot.lane.b32.xlu0 %v444, 64
        %v887 = vpop.permute.xlu0 %886
        %v890 = vsel %vm451, %v785, 0
        %892 = vmatprep.subr.mxu0 0.0
        %893 = vmatpush1.msra.mxu0 %v887
        %894 = vmatprep.subr.mxu0 0.0
        %895 = vmatpush1.msra.mxu0 0.0
        %896 = vmatprep.subr.mxu0 0.0
        %897 = vmatpush1.msra.mxu0 0.0
        %898 = vmatprep.subr.mxu0 0.0
        %899 = vmatpush1.msra.mxu0 0.0
        %900 = vmatprep.subr.mxu0 0.0
        %901 = vmatpush1.msra.mxu0 0.0
        %902 = vmatprep.subr.mxu0 0.0
        %903 = vmatpush1.msra.mxu0 0.0
        %904 = vmatprep.subr.mxu0 0.0
        %905 = vmatpush1.msra.mxu0 0.0
        %906 = vmatprep.subr.mxu0 0.0
        %907 = vmatpush1.msra.mxu0 0.0
        %908 = vmatprep.subr.mxu0 0.0
        %909 = vmatpush1.msra.mxu0 0.0
        %910 = vmatprep.subr.mxu0 0.0
        %911 = vmatpush1.msra.mxu0 0.0
        %912 = vmatprep.subr.mxu0 0.0
        %913 = vmatpush1.msra.mxu0 0.0
        %914 = vmatprep.subr.mxu0 0.0
        %915 = vmatpush1.msra.mxu0 0.0
        %916 = vmatprep.subr.mxu0 0.0
        %917 = vmatpush1.msra.mxu0 0.0
        %918 = vmatprep.subr.mxu0 0.0
        %919 = vmatpush1.msra.mxu0 0.0
        %920 = vmatprep.subr.mxu0 0.0
        %921 = vmatpush1.msra.mxu0 0.0
        %922 = vmatprep.subr.mxu0 0.0
        %923 = vmatpush1.msra.mxu0 0.0
        %924 = vmatprep.subr.mxu0 0.0
        %925 = vmatpush1.msra.mxu0 0.0
        %926 = vmatprep.subr.mxu0 0.0
        %927 = vmatpush1.msra.mxu0 0.0
        %928 = vmatprep.subr.mxu0 0.0
        %929 = vmatpush1.msra.mxu0 0.0
        %930 = vmatprep.subr.mxu0 0.0
        %931 = vmatpush1.msra.mxu0 0.0
        %932 = vmatprep.subr.mxu0 0.0
        %933 = vmatpush1.msra.mxu0 0.0
        %934 = vmatprep.subr.mxu0 0.0
        %935 = vmatpush1.msra.mxu0 0.0
        %936 = vmatprep.subr.mxu0 0.0
        %937 = vmatpush1.msra.mxu0 0.0
        %938 = vmatprep.subr.mxu0 0.0
        %939 = vmatpush1.msra.mxu0 0.0
        %940 = vmatprep.subr.mxu0 0.0
        %941 = vmatpush1.msra.mxu0 0.0
        %942 = vmatprep.subr.mxu0 0.0
        %943 = vmatpush1.msra.mxu0 0.0
        %944 = vmatprep.subr.mxu0 0.0
        %945 = vmatpush1.msra.mxu0 0.0
        %946 = vmatprep.subr.mxu0 0.0
        %947 = vmatpush1.msra.mxu0 0.0
        %948 = vmatprep.subr.mxu0 0.0
        %949 = vmatpush1.msra.mxu0 0.0
        %950 = vmatprep.subr.mxu0 0.0
        %951 = vmatpush1.msra.mxu0 0.0
        %952 = vmatprep.subr.mxu0 0.0
        %953 = vmatpush1.msra.mxu0 0.0
        %954 = vmatprep.subr.mxu0 0.0
        %955 = vmatpush1.msra.mxu0 0.0
        %956 = vmatprep.mubr.f32.mxu0 0.0
        %957 = vmatmul.mubr.f32.gmra.mrb[0].mxu0 %v890
        %v958 = vpop.f32.mrb[0].mxu0
        %v959 = vadd.f32 0.0, %v958
        %v960 = vpop.f32.mrb[0].mxu0
        %961 = vdwg.mxu0
        %962 = vrot.lane.b32.xlu0 %v446, 64
        %v963 = vpop.permute.xlu0 %962
        %v966 = vsel %vm451, %v787, 0
        %968 = vmatprep.subr.mxu0 0.0
        %969 = vmatpush1.msra.mxu0 %v963
        %970 = vmatprep.subr.mxu0 0.0
        %971 = vmatpush1.msra.mxu0 0.0
        %972 = vmatprep.subr.mxu0 0.0
        %973 = vmatpush1.msra.mxu0 0.0
        %974 = vmatprep.subr.mxu0 0.0
        %975 = vmatpush1.msra.mxu0 0.0
        %976 = vmatprep.subr.mxu0 0.0
        %977 = vmatpush1.msra.mxu0 0.0
        %978 = vmatprep.subr.mxu0 0.0
        %979 = vmatpush1.msra.mxu0 0.0
        %980 = vmatprep.subr.mxu0 0.0
        %981 = vmatpush1.msra.mxu0 0.0
        %982 = vmatprep.subr.mxu0 0.0
        %983 = vmatpush1.msra.mxu0 0.0
        %984 = vmatprep.subr.mxu0 0.0
        %985 = vmatpush1.msra.mxu0 0.0
        %986 = vmatprep.subr.mxu0 0.0
        %987 = vmatpush1.msra.mxu0 0.0
        %988 = vmatprep.subr.mxu0 0.0
        %989 = vmatpush1.msra.mxu0 0.0
        %990 = vmatprep.subr.mxu0 0.0
        %991 = vmatpush1.msra.mxu0 0.0
        %992 = vmatprep.subr.mxu0 0.0
        %993 = vmatpush1.msra.mxu0 0.0
        %994 = vmatprep.subr.mxu0 0.0
        %995 = vmatpush1.msra.mxu0 0.0
        %996 = vmatprep.subr.mxu0 0.0
        %997 = vmatpush1.msra.mxu0 0.0
        %998 = vmatprep.subr.mxu0 0.0
        %999 = vmatpush1.msra.mxu0 0.0
        %1000 = vmatprep.subr.mxu0 0.0
        %1001 = vmatpush1.msra.mxu0 0.0
        %1002 = vmatprep.subr.mxu0 0.0
        %1003 = vmatpush1.msra.mxu0 0.0
        %1004 = vmatprep.subr.mxu0 0.0
        %1005 = vmatpush1.msra.mxu0 0.0
        %1006 = vmatprep.subr.mxu0 0.0
        %1007 = vmatpush1.msra.mxu0 0.0
        %1008 = vmatprep.subr.mxu0 0.0
        %1009 = vmatpush1.msra.mxu0 0.0
        %1010 = vmatprep.subr.mxu0 0.0
        %1011 = vmatpush1.msra.mxu0 0.0
        %1012 = vmatprep.subr.mxu0 0.0
        %1013 = vmatpush1.msra.mxu0 0.0
        %1014 = vmatprep.subr.mxu0 0.0
        %1015 = vmatpush1.msra.mxu0 0.0
        %1016 = vmatprep.subr.mxu0 0.0
        %1017 = vmatpush1.msra.mxu0 0.0
        %1018 = vmatprep.subr.mxu0 0.0
        %1019 = vmatpush1.msra.mxu0 0.0
        %1020 = vmatprep.subr.mxu0 0.0
        %1021 = vmatpush1.msra.mxu0 0.0
        %1022 = vmatprep.subr.mxu0 0.0
        %1023 = vmatpush1.msra.mxu0 0.0
        %1024 = vmatprep.subr.mxu0 0.0
        %1025 = vmatpush1.msra.mxu0 0.0
        %1026 = vmatprep.subr.mxu0 0.0
        %1027 = vmatpush1.msra.mxu0 0.0
        %1028 = vmatprep.subr.mxu0 0.0
        %1029 = vmatpush1.msra.mxu0 0.0
        %1030 = vmatprep.subr.mxu0 0.0
        %1031 = vmatpush1.msra.mxu0 0.0
        %1032 = vmatprep.mubr.f32.mxu0 0.0
        %1033 = vmatmul.mubr.f32.gmra.mrb[0].mxu0 %v966
        %v1034 = vpop.f32.mrb[0].mxu0
        %v1035 = vadd.f32 0.0, %v1034
        %v1036 = vpop.f32.mrb[0].mxu0
        %1037 = vdwg.mxu0
        %1038 = vrot.lane.b32.xlu0 %v448, 64
        %v1039 = vpop.permute.xlu0 %1038
        %v1042 = vsel %vm451, %v789, 0
        %1044 = vmatprep.subr.mxu0 0.0
        %1045 = vmatpush1.msra.mxu0 %v1039
        %1046 = vmatprep.subr.mxu0 0.0
        %1047 = vmatpush1.msra.mxu0 0.0
        %1048 = vmatprep.subr.mxu0 0.0
        %1049 = vmatpush1.msra.mxu0 0.0
        %1050 = vmatprep.subr.mxu0 0.0
        %1051 = vmatpush1.msra.mxu0 0.0
        %1052 = vmatprep.subr.mxu0 0.0
        %1053 = vmatpush1.msra.mxu0 0.0
        %1054 = vmatprep.subr.mxu0 0.0
        %1055 = vmatpush1.msra.mxu0 0.0
        %1056 = vmatprep.subr.mxu0 0.0
        %1057 = vmatpush1.msra.mxu0 0.0
        %1058 = vmatprep.subr.mxu0 0.0
        %1059 = vmatpush1.msra.mxu0 0.0
        %1060 = vmatprep.subr.mxu0 0.0
        %1061 = vmatpush1.msra.mxu0 0.0
        %1062 = vmatprep.subr.mxu0 0.0
        %1063 = vmatpush1.msra.mxu0 0.0
        %1064 = vmatprep.subr.mxu0 0.0
        %1065 = vmatpush1.msra.mxu0 0.0
        %1066 = vmatprep.subr.mxu0 0.0
        %1067 = vmatpush1.msra.mxu0 0.0
        %1068 = vmatprep.subr.mxu0 0.0
        %1069 = vmatpush1.msra.mxu0 0.0
        %1070 = vmatprep.subr.mxu0 0.0
        %1071 = vmatpush1.msra.mxu0 0.0
        %1072 = vmatprep.subr.mxu0 0.0
        %1073 = vmatpush1.msra.mxu0 0.0
        %1074 = vmatprep.subr.mxu0 0.0
        %1075 = vmatpush1.msra.mxu0 0.0
        %1076 = vmatprep.subr.mxu0 0.0
        %1077 = vmatpush1.msra.mxu0 0.0
        %1078 = vmatprep.subr.mxu0 0.0
        %1079 = vmatpush1.msra.mxu0 0.0
        %1080 = vmatprep.subr.mxu0 0.0
        %1081 = vmatpush1.msra.mxu0 0.0
        %1082 = vmatprep.subr.mxu0 0.0
        %1083 = vmatpush1.msra.mxu0 0.0
        %1084 = vmatprep.subr.mxu0 0.0
        %1085 = vmatpush1.msra.mxu0 0.0
        %1086 = vmatprep.subr.mxu0 0.0
        %1087 = vmatpush1.msra.mxu0 0.0
        %1088 = vmatprep.subr.mxu0 0.0
        %1089 = vmatpush1.msra.mxu0 0.0
        %1090 = vmatprep.subr.mxu0 0.0
        %1091 = vmatpush1.msra.mxu0 0.0
        %1092 = vmatprep.subr.mxu0 0.0
        %1093 = vmatpush1.msra.mxu0 0.0
        %1094 = vmatprep.subr.mxu0 0.0
        %1095 = vmatpush1.msra.mxu0 0.0
        %1096 = vmatprep.subr.mxu0 0.0
        %1097 = vmatpush1.msra.mxu0 0.0
        %1098 = vmatprep.subr.mxu0 0.0
        %1099 = vmatpush1.msra.mxu0 0.0
        %1100 = vmatprep.subr.mxu0 0.0
        %1101 = vmatpush1.msra.mxu0 0.0
        %1102 = vmatprep.subr.mxu0 0.0
        %1103 = vmatpush1.msra.mxu0 0.0
        %1104 = vmatprep.subr.mxu0 0.0
        %1105 = vmatpush1.msra.mxu0 0.0
        %1106 = vmatprep.subr.mxu0 0.0
        %1107 = vmatpush1.msra.mxu0 0.0
        %1108 = vmatprep.mubr.f32.mxu0 0.0
        %1109 = vmatmul.mubr.f32.gmra.mrb[0].mxu0 %v1042
        %v1110 = vpop.f32.mrb[0].mxu0
        %v1111 = vadd.f32 0.0, %v1110
        %v1112 = vpop.f32.mrb[0].mxu0
        %1113 = vdwg.mxu0
        %v1114 = vadd.f32 %v790, %v883
        %v1115 = vadd.f32 %v791, %v959
        %v1116 = vadd.f32 %v792, %v1035
        %v1117 = vadd.f32 %v793, %v1111
        %v1118 = vrcp.pop %v806
        %v1119 = vrcp.pop %v807
        %v1120 = vrcp.pop %v808
        %v1121 = vrcp.pop %v809
        %v1122 = vmul.f32 %v1114, %v1118
        %v1123 = vmul.f32 %v1115, %v1119
        %v1124 = vmul.f32 %v1116, %v1120
        %v1125 = vmul.f32 %v1117, %v1121
        %1127 = vrot.lane.b32.xlu0 %v1123, 8
        %v1128 = vpop.permute.xlu0 %1127
        %1131 = vrot.lane.b32.xlu0 %v1124, 16
        %v1132 = vpop.permute.xlu0 %1131
        %1135 = vrot.lane.b32.xlu0 %v1125, 24
        %v1136 = vpop.permute.xlu0 %1135
        %v1138 = vsel %vm451, %v1122, %v1128
        %vm1139 = vcmask 130048
        %v1140 = vsel %vm1139, %v1138, %v1132
        %vm1141 = vcmask 195584
        %v1142 = vsel %vm1141, %v1140, %v1136
        %v1143 = vld [vmem:[%s3] sm:$0xff]
        %v1144 = vld [vmem:[%s3 + $0x8] sm:$0xff]
        %v1145 = vld [vmem:[%s3 + $0x10] sm:$0xff]
        %v1146 = vld [vmem:[%s3 + $0x18] sm:$0xff]
        %v1147 = vld [vmem:[%s4] sm:$0x1]
        %v1149 = vlaneseq
        %v1150 = vshrl.u32 %v1149, 7
        %v1151 = vsub.s32 0, %v1150
        %v1152 = vrot.slane %v1147, %v1151
        %v1155 = vsel %vm360, %v1142, 0
        %1157 = vmatprep.subr.mxu0 0.0
        %1158 = vmatpush1.msra.mxu0 %v1143
        %1159 = vmatprep.subr.mxu0 0.0
        %1160 = vmatpush1.msra.mxu0 %v1144
        %1161 = vmatprep.subr.mxu0 0.0
        %1162 = vmatpush1.msra.mxu0 %v1145
        %1163 = vmatprep.subr.mxu0 0.0
        %1164 = vmatpush1.msra.mxu0 %v1146
        %1165 = vmatprep.subr.mxu0 0.0
        %1166 = vmatpush1.msra.mxu0 0.0
        %1167 = vmatprep.subr.mxu0 0.0
        %1168 = vmatpush1.msra.mxu0 0.0
        %1169 = vmatprep.subr.mxu0 0.0
        %1170 = vmatpush1.msra.mxu0 0.0
        %1171 = vmatprep.subr.mxu0 0.0
        %1172 = vmatpush1.msra.mxu0 0.0
        %1173 = vmatprep.subr.mxu0 0.0
        %1174 = vmatpush1.msra.mxu0 0.0
        %1175 = vmatprep.subr.mxu0 0.0
        %1176 = vmatpush1.msra.mxu0 0.0
        %1177 = vmatprep.subr.mxu0 0.0
        %1178 = vmatpush1.msra.mxu0 0.0
        %1179 = vmatprep.subr.mxu0 0.0
        %1180 = vmatpush1.msra.mxu0 0.0
        %1181 = vmatprep.subr.mxu0 0.0
        %1182 = vmatpush1.msra.mxu0 0.0
        %1183 = vmatprep.subr.mxu0 0.0
        %1184 = vmatpush1.msra.mxu0 0.0
        %1185 = vmatprep.subr.mxu0 0.0
        %1186 = vmatpush1.msra.mxu0 0.0
        %1187 = vmatprep.subr.mxu0 0.0
        %1188 = vmatpush1.msra.mxu0 0.0
        %1189 = vmatprep.subr.mxu0 0.0
        %1190 = vmatpush1.msra.mxu0 0.0
        %1191 = vmatprep.subr.mxu0 0.0
        %1192 = vmatpush1.msra.mxu0 0.0
        %1193 = vmatprep.subr.mxu0 0.0
        %1194 = vmatpush1.msra.mxu0 0.0
        %1195 = vmatprep.subr.mxu0 0.0
        %1196 = vmatpush1.msra.mxu0 0.0
        %1197 = vmatprep.subr.mxu0 0.0
        %1198 = vmatpush1.msra.mxu0 0.0
        %1199 = vmatprep.subr.mxu0 0.0
        %1200 = vmatpush1.msra.mxu0 0.0
        %1201 = vmatprep.subr.mxu0 0.0
        %1202 = vmatpush1.msra.mxu0 0.0
        %1203 = vmatprep.subr.mxu0 0.0
        %1204 = vmatpush1.msra.mxu0 0.0
        %1205 = vmatprep.subr.mxu0 0.0
        %1206 = vmatpush1.msra.mxu0 0.0
        %1207 = vmatprep.subr.mxu0 0.0
        %1208 = vmatpush1.msra.mxu0 0.0
        %1209 = vmatprep.subr.mxu0 0.0
        %1210 = vmatpush1.msra.mxu0 0.0
        %1211 = vmatprep.subr.mxu0 0.0
        %1212 = vmatpush1.msra.mxu0 0.0
        %1213 = vmatprep.subr.mxu0 0.0
        %1214 = vmatpush1.msra.mxu0 0.0
        %1215 = vmatprep.subr.mxu0 0.0
        %1216 = vmatpush1.msra.mxu0 0.0
        %1217 = vmatprep.subr.mxu0 0.0
        %1218 = vmatpush1.msra.mxu0 0.0
        %1219 = vmatprep.subr.mxu0 0.0
        %1220 = vmatpush1.msra.mxu0 0.0
        %1221 = vmatprep.mubr.f32.mxu0 0.0
        %1222 = vmatmul.mubr.f32.gmra.mrb[0].mxu0 %v1155
        %v1223 = vpop.f32.mrb[0].mxu0
        %v1224 = vadd.f32 %v1152, %v1223
        %v1225 = vpop.f32.mrb[0].mxu0
        %1226 = vdwg.mxu0
        %v1227 = vadd.f32 %v348, %v1224
        %v1228 = vsel %vm360, %v1227, 0.0
        %1229 = vadd.xlane.f32.xlu0 %v1228
        %v1230 = vpop.xlane.xlu0 %1229
        %v1231 = vrot.slane %v1230, 4
        %v1232 = vadd.f32 %v1230, %v1231
        %v1233 = vrot.slane %v1232, 2
        %v1234 = vadd.f32 %v1232, %v1233
        %v1235 = vrot.slane %v1234, 1
        %v1236 = vadd.f32 %v1234, %v1235
        %s1237 = vtos %v1236
        %v1238 = vrcp.pop 256.0
        %s1239 = vtos %v1238
        %s1240 = smul.f32 %s1237, %s1239
        %v1241 = vstv %s1240
        %v1242 = vsub.f32 %v1227, %v1241
        %v1243 = vmul.f32 %v1242, %v1242
        %v1244 = vsel %vm360, %v1243, 0.0
        %1245 = vadd.xlane.f32.xlu0 %v1244
        %v1246 = vpop.xlane.xlu0 %1245
        %v1247 = vrot.slane %v1246, 4
        %v1248 = vadd.f32 %v1246, %v1247
        %v1249 = vrot.slane %v1248, 2
        %v1250 = vadd.f32 %v1248, %v1249
        %v1251 = vrot.slane %v1250, 1
        %v1252 = vadd.f32 %v1250, %v1251
        %s1253 = vtos %v1252
        %v1254 = vrcp.pop 256.0
        %s1255 = vtos %v1254
        %s1256 = smul.f32 %s1253, %s1255
        %s1257 = sadd.f32 %s1256, 1e-06
        %v1258 = vstv %s1257
        %v1259 = vrsqrt.pop %v1258
        %s1260 = vtos %v1259
        %v1261 = vstv %s1260
        %v1262 = vmul.f32 %v1242, %v1261
        %v1263 = vld [vmem:[%s5] sm:$0xff]
        %v1264 = vld [vmem:[%s5 + $0x8] sm:$0xff]
        %v1265 = vld [vmem:[%s5 + $0x10] sm:$0xff]
        %v1266 = vld [vmem:[%s5 + $0x18] sm:$0xff]
        %v1267 = vld [vmem:[%s6] sm:$0x1]
        %v1269 = vlaneseq
        %v1270 = vshrl.u32 %v1269, 7
        %v1271 = vsub.s32 0, %v1270
        %v1272 = vrot.slane %v1267, %v1271
        %v1275 = vsel %vm360, %v1262, 0
        %1277 = vmatprep.subr.mxu0 0.0
        %1278 = vmatpush1.msra.mxu0 %v1263
        %1279 = vmatprep.subr.mxu0 0.0
        %1280 = vmatpush1.msra.mxu0 %v1264
        %1281 = vmatprep.subr.mxu0 0.0
        %1282 = vmatpush1.msra.mxu0 %v1265
        %1283 = vmatprep.subr.mxu0 0.0
        %1284 = vmatpush1.msra.mxu0 %v1266
        %1285 = vmatprep.subr.mxu0 0.0
        %1286 = vmatpush1.msra.mxu0 0.0
        %1287 = vmatprep.subr.mxu0 0.0
        %1288 = vmatpush1.msra.mxu0 0.0
        %1289 = vmatprep.subr.mxu0 0.0
        %1290 = vmatpush1.msra.mxu0 0.0
        %1291 = vmatprep.subr.mxu0 0.0
        %1292 = vmatpush1.msra.mxu0 0.0
        %1293 = vmatprep.subr.mxu0 0.0
        %1294 = vmatpush1.msra.mxu0 0.0
        %1295 = vmatprep.subr.mxu0 0.0
        %1296 = vmatpush1.msra.mxu0 0.0
        %1297 = vmatprep.subr.mxu0 0.0
        %1298 = vmatpush1.msra.mxu0 0.0
        %1299 = vmatprep.subr.mxu0 0.0
        %1300 = vmatpush1.msra.mxu0 0.0
        %1301 = vmatprep.subr.mxu0 0.0
        %1302 = vmatpush1.msra.mxu0 0.0
        %1303 = vmatprep.subr.mxu0 0.0
        %1304 = vmatpush1.msra.mxu0 0.0
        %1305 = vmatprep.subr.mxu0 0.0
        %1306 = vmatpush1.msra.mxu0 0.0
        %1307 = vmatprep.subr.mxu0 0.0
        %1308 = vmatpush1.msra.mxu0 0.0
        %1309 = vmatprep.subr.mxu0 0.0
        %1310 = vmatpush1.msra.mxu0 0.0
        %1311 = vmatprep.subr.mxu0 0.0
        %1312 = vmatpush1.msra.mxu0 0.0
        %1313 = vmatprep.subr.mxu0 0.0
        %1314 = vmatpush1.msra.mxu0 0.0
        %1315 = vmatprep.subr.mxu0 0.0
        %1316 = vmatpush1.msra.mxu0 0.0
        %1317 = vmatprep.subr.mxu0 0.0
        %1318 = vmatpush1.msra.mxu0 0.0
        %1319 = vmatprep.subr.mxu0 0.0
        %1320 = vmatpush1.msra.mxu0 0.0
        %1321 = vmatprep.subr.mxu0 0.0
        %1322 = vmatpush1.msra.mxu0 0.0
        %1323 = vmatprep.subr.mxu0 0.0
        %1324 = vmatpush1.msra.mxu0 0.0
        %1325 = vmatprep.subr.mxu0 0.0
        %1326 = vmatpush1.msra.mxu0 0.0
        %1327 = vmatprep.subr.mxu0 0.0
        %1328 = vmatpush1.msra.mxu0 0.0
        %1329 = vmatprep.subr.mxu0 0.0
        %1330 = vmatpush1.msra.mxu0 0.0
        %1331 = vmatprep.subr.mxu0 0.0
        %1332 = vmatpush1.msra.mxu0 0.0
        %1333 = vmatprep.subr.mxu0 0.0
        %1334 = vmatpush1.msra.mxu0 0.0
        %1335 = vmatprep.subr.mxu0 0.0
        %1336 = vmatpush1.msra.mxu0 0.0
        %1337 = vmatprep.subr.mxu0 0.0
        %1338 = vmatpush1.msra.mxu0 0.0
        %1339 = vmatprep.subr.mxu0 0.0
        %1340 = vmatpush1.msra.mxu0 0.0
        %1341 = vmatprep.mubr.f32.mxu0 0.0
        %1342 = vmatmul.mubr.f32.gmra.mrb[0].mxu0 %v1275
        %v1343 = vpop.f32.mrb[0].mxu0
        %v1344 = vadd.f32 %v1272, %v1343
        %v1345 = vpop.f32.mrb[0].mxu0
        %1346 = vdwg.mxu0
        %v1347 = vmax.f32 %v1344, 0.0
        %v1348 = vld [vmem:[%s7] sm:$0xff]
        %v1349 = vld [vmem:[%s7 + $0x8] sm:$0xff]
        %v1350 = vld [vmem:[%s7 + $0x10] sm:$0xff]
        %v1351 = vld [vmem:[%s7 + $0x18] sm:$0xff]
        %v1352 = vld [vmem:[%s7 + $0x20] sm:$0xff]
        %v1353 = vld [vmem:[%s7 + $0x28] sm:$0xff]
        %v1354 = vld [vmem:[%s7 + $0x30] sm:$0xff]
        %v1355 = vld [vmem:[%s7 + $0x38] sm:$0xff]
        %v1356 = vld [vmem:[%s8] sm:$0x1]
        %v1358 = vlaneseq
        %v1359 = vshrl.u32 %v1358, 7
        %v1360 = vsub.s32 0, %v1359
        %v1361 = vrot.slane %v1356, %v1360
        %vm1363 = vcmask 523264
        %v1365 = vsel %vm1363, %v1347, 0
        %1367 = vmatprep.subr.mxu0 0.0
        %1368 = vmatpush1.msra.mxu0 %v1348
        %1369 = vmatprep.subr.mxu0 0.0
        %1370 = vmatpush1.msra.mxu0 %v1349
        %1371 = vmatprep.subr.mxu0 0.0
        %1372 = vmatpush1.msra.mxu0 %v1350
        %1373 = vmatprep.subr.mxu0 0.0
        %1374 = vmatpush1.msra.mxu0 %v1351
        %1375 = vmatprep.subr.mxu0 0.0
        %1376 = vmatpush1.msra.mxu0 %v1352
        %1377 = vmatprep.subr.mxu0 0.0
        %1378 = vmatpush1.msra.mxu0 %v1353
        %1379 = vmatprep.subr.mxu0 0.0
        %1380 = vmatpush1.msra.mxu0 %v1354
        %1381 = vmatprep.subr.mxu0 0.0
        %1382 = vmatpush1.msra.mxu0 %v1355
        %1383 = vmatprep.subr.mxu0 0.0
        %1384 = vmatpush1.msra.mxu0 0.0
        %1385 = vmatprep.subr.mxu0 0.0
        %1386 = vmatpush1.msra.mxu0 0.0
        %1387 = vmatprep.subr.mxu0 0.0
        %1388 = vmatpush1.msra.mxu0 0.0
        %1389 = vmatprep.subr.mxu0 0.0
        %1390 = vmatpush1.msra.mxu0 0.0
        %1391 = vmatprep.subr.mxu0 0.0
        %1392 = vmatpush1.msra.mxu0 0.0
        %1393 = vmatprep.subr.mxu0 0.0
        %1394 = vmatpush1.msra.mxu0 0.0
        %1395 = vmatprep.subr.mxu0 0.0
        %1396 = vmatpush1.msra.mxu0 0.0
        %1397 = vmatprep.subr.mxu0 0.0
        %1398 = vmatpush1.msra.mxu0 0.0
        %1399 = vmatprep.subr.mxu0 0.0
        %1400 = vmatpush1.msra.mxu0 0.0
        %1401 = vmatprep.subr.mxu0 0.0
        %1402 = vmatpush1.msra.mxu0 0.0
        %1403 = vmatprep.subr.mxu0 0.0
        %1404 = vmatpush1.msra.mxu0 0.0
        %1405 = vmatprep.subr.mxu0 0.0
        %1406 = vmatpush1.msra.mxu0 0.0
        %1407 = vmatprep.subr.mxu0 0.0
        %1408 = vmatpush1.msra.mxu0 0.0
        %1409 = vmatprep.subr.mxu0 0.0
        %1410 = vmatpush1.msra.mxu0 0.0
        %1411 = vmatprep.subr.mxu0 0.0
        %1412 = vmatpush1.msra.mxu0 0.0
        %1413 = vmatprep.subr.mxu0 0.0
        %1414 = vmatpush1.msra.mxu0 0.0
        %1415 = vmatprep.subr.mxu0 0.0
        %1416 = vmatpush1.msra.mxu0 0.0
        %1417 = vmatprep.subr.mxu0 0.0
        %1418 = vmatpush1.msra.mxu0 0.0
        %1419 = vmatprep.subr.mxu0 0.0
        %1420 = vmatpush1.msra.mxu0 0.0
        %1421 = vmatprep.subr.mxu0 0.0
        %1422 = vmatpush1.msra.mxu0 0.0
        %1423 = vmatprep.subr.mxu0 0.0
        %1424 = vmatpush1.msra.mxu0 0.0
        %1425 = vmatprep.subr.mxu0 0.0
        %1426 = vmatpush1.msra.mxu0 0.0
        %1427 = vmatprep.subr.mxu0 0.0
        %1428 = vmatpush1.msra.mxu0 0.0
        %1429 = vmatprep.subr.mxu0 0.0
        %1430 = vmatpush1.msra.mxu0 0.0
        %1431 = vmatprep.mubr.f32.mxu0 0.0
        %1432 = vmatmul.mubr.f32.gmra.mrb[0].mxu0 %v1365
        %v1433 = vpop.f32.mrb[0].mxu0
        %v1434 = vadd.f32 %v1361, %v1433
        %v1435 = vpop.f32.mrb[0].mxu0
        %1436 = vdwg.mxu0
        %v1437 = vadd.f32 %v1262, %v1434
        %v1438 = vsel %vm360, %v1437, 0.0
        %1439 = vadd.xlane.f32.xlu0 %v1438
        %v1440 = vpop.xlane.xlu0 %1439
        %v1441 = vrot.slane %v1440, 4
        %v1442 = vadd.f32 %v1440, %v1441
        %v1443 = vrot.slane %v1442, 2
        %v1444 = vadd.f32 %v1442, %v1443
        %v1445 = vrot.slane %v1444, 1
        %v1446 = vadd.f32 %v1444, %v1445
        %s1447 = vtos %v1446
        %v1448 = vrcp.pop 256.0
        %s1449 = vtos %v1448
        %s1450 = smul.f32 %s1447, %s1449
        %v1451 = vstv %s1450
        %v1452 = vsub.f32 %v1437, %v1451
        %v1453 = vmul.f32 %v1452, %v1452
        %v1454 = vsel %vm360, %v1453, 0.0
        %1455 = vadd.xlane.f32.xlu0 %v1454
        %v1456 = vpop.xlane.xlu0 %1455
        %v1457 = vrot.slane %v1456, 4
        %v1458 = vadd.f32 %v1456, %v1457
        %v1459 = vrot.slane %v1458, 2
        %v1460 = vadd.f32 %v1458, %v1459
        %v1461 = vrot.slane %v1460, 1
        %v1462 = vadd.f32 %v1460, %v1461
        %s1463 = vtos %v1462
        %v1464 = vrcp.pop 256.0
        %s1465 = vtos %v1464
        %s1466 = smul.f32 %s1463, %s1465
        %s1467 = sadd.f32 %s1466, 1e-06
        %v1468 = vstv %s1467
        %v1469 = vrsqrt.pop %v1468
        %s1470 = vtos %v1469
        %v1471 = vstv %s1470
        %v1472 = vmul.f32 %v1452, %v1471
        %1473 = vst.msk [vmem:[%s347] sm:$0xff] %vm360, %v1472
        %s1474 = sand.u32 %s228, 1
        %s1475 = scalar_lea.sflag [#allocation4], %s1474
        %s1476 = sand.u32 %s228, 1
        %s1477 = smul.addr %s1476, 8
        %s1478 = scalar_lea.vmem [#allocation5], %s1477
        // Predicated region
        $region61: #{tpu_custom_call.1} parent=55 // pred_check
          %p1479 = pneg %p238
        $region62: #{tpu_custom_call.1} parent=55 // pred_check_branch
          %1481 = sbr.rel (%p1479) target = $region64
        $region63: #{tpu_custom_call.1} parent=55 // pred_region
          %s1483 = ssub.s32 128, 128
          %1484 = vsyncadd %s1475, %s1483
          %s1485 = smul.addr %s26, 128
          %s1486 = scalar_lea.hbm %s9, %s1485
          %s1488 = sshll.u32 %s1478, 4
          %s1489 = int_to_ptr.vmem [resolvable:$true] %s1488
          %1491 = dma.vmem_to_hbm [thread:$0]  %s1489, 128, %s1486, %s1475
        $region64: #{tpu_custom_call.1} parent=55 // pred_fallthru
          _
      $region56: #{tpu_custom_call.1} parent=5 // pred_fallthru
        _
      %p1492 = scmp.le.s32.totalorder 2, %s21
      // Predicated region
      $region65: #{tpu_custom_call.1} parent=5 // pred_check
        %p1493 = pneg %p1492
      $region66: #{tpu_custom_call.1} parent=5 // pred_check_branch
        %1495 = sbr.rel (%p1493) target = $region68
      $region67: #{tpu_custom_call.1} parent=5 // pred_region
        %s1496 = ssub.s32 %s21, 2
        // Predicated region
        $region69: #{tpu_custom_call.1} parent=67 // pred_check
          %p1497 = pneg %p244
        $region70: #{tpu_custom_call.1} parent=67 // pred_check_branch
          %1499 = sbr.rel (%p1497) target = $region72
        $region71: #{tpu_custom_call.1} parent=67 // pred_region
          %s1500 = sand.u32 %s229, 1
          %s1501 = scalar_lea.sflag [#allocation4], %s1500
          %s1502 = sand.u32 %s229, 1
          %s1503 = smul.addr %s1502, 8
          %s1504 = scalar_lea.vmem [#allocation5], %s1503
          %1505 = dma.done %s1501, 128
        $region72: #{tpu_custom_call.1} parent=67 // pred_fallthru
          _
      $region68: #{tpu_custom_call.1} parent=5 // pred_fallthru
        _
    $region6: #{tpu_custom_call.1} parent=1 // loop_footer
      %s25 = sadd.s32 1, %s21
    $region7: #{tpu_custom_call.1} parent=1 // loop_footer_branch
      %20 = sbr.rel target = $region3
    $region8: #{tpu_custom_call.1} parent=1 // loop_exit
      _
    %1506 = vsyncpa [#allocation3], 1
    %s1507 = scalar_lea.sflag [#allocation3], 1
    %1508 = vsyncpa %s1507, 1
    %1509 = vsyncpa [#allocation4], 1
    %s1510 = scalar_lea.sflag [#allocation4], 1
    %1511 = vsyncpa %s1510, 1

// kernel: tpu_custom_call.1
$region0: #{tpu_custom_call.1}
  #allocation0 [shape = 'u32[]', space=smem, size = 0x4, offset = 0x4, fixed_abs, tag = 'smem constant byte address 0x4 - core index']
  #allocation1 [shape = 'u32[144,128]{1,0:T(1,128)}', space=vmem, size = 0x12000, scoped, tag = 'internal scratch']
  %s0 = inlined_call_operand.hbm [shape: f32[2,8,32], index: 0, kind: input, shape index: {}]
  %s1 = inlined_call_operand.vmem [shape: f32[32,96], index: 1, kind: input, shape index: {}]
  %s2 = inlined_call_operand.vmem [shape: f32[1,96], index: 2, kind: input, shape index: {}]
  %s3 = inlined_call_operand.vmem [shape: f32[32,32], index: 3, kind: input, shape index: {}]
  %s4 = inlined_call_operand.vmem [shape: f32[1,32], index: 4, kind: input, shape index: {}]
  %s5 = inlined_call_operand.vmem [shape: f32[32,64], index: 5, kind: input, shape index: {}]
  %s6 = inlined_call_operand.vmem [shape: f32[1,64], index: 6, kind: input, shape index: {}]
  %s7 = inlined_call_operand.vmem [shape: f32[64,32], index: 7, kind: input, shape index: {}]
  %s8 = inlined_call_operand.vmem [shape: f32[1,32], index: 8, kind: input, shape index: {}]
  %s9 = inlined_call_operand.hbm [shape: f32[2,8,32], index: 9, kind: output, shape index: {}]
  %s10 = sld [smem:[#allocation0]]
  $region73: #{tpu_custom_call.1} parent=0
    _
  %s12 = ssub.s32 1, %s10
  %s13 = scalar_select 0, %s12, %s10
  $region1: #{tpu_custom_call.1} parent=0
    #allocation2 [shape = 'u8[8192]{0}', space=vmem, size = 0x2000, scoped, tag = 'input window, operand 0']
    #allocation3 [shape = 's32[2]{0}', space=sflag, size = 0x8, scoped, tag = 'scoped memory for tpu_custom_call.1']
    #allocation4 [shape = 's32[2]{0}', space=sflag, size = 0x8, scoped, tag = 'scoped memory for tpu_custom_call.1']
    #allocation5 [shape = 'u8[8192]{0}', space=vmem, size = 0x2000, scoped, tag = 'output window, operand 0']
    %14 = vsyncpa [#allocation3], 0
    %s15 = scalar_lea.sflag [#allocation3], 1
    %16 = vsyncpa %s15, 0
    %17 = vsyncpa [#allocation4], 0
    %s18 = scalar_lea.sflag [#allocation4], 1
    %19 = vsyncpa %s18, 0
    loop: start=0, step=1, limit=4
    $region2: #{tpu_custom_call.1} parent=1 // loop_pre_header
      _
    $region3: #{tpu_custom_call.1} parent=1 // loop_header
      %s21 = sphi 0, %s25
      %p22 = scmp.ge.s32.totalorder %s21, 4
      %s31 = sphi 0, %s33
      %s34 = sphi 0, %s31
      %s35 = sphi 0, %s34
      %s51 = sphi 0, %s35
      %s55 = sphi 0, %s55
      %s57 = sphi 0, %s55
      %s58 = sphi 0, %s57
      %s72 = sphi 0, %s58
      %s76 = sphi 0, %s76
      %s78 = sphi 0, %s76
      %s79 = sphi 0, %s78
      %s93 = sphi 0, %s79
      %s97 = sphi 0, %s97
      %s99 = sphi 0, %s97
      %s100 = sphi 0, %s99
      %s114 = sphi 0, %s100
      %s118 = sphi 0, %s118
      %s120 = sphi 0, %s118
      %s121 = sphi 0, %s120
      %s135 = sphi 0, %s121
      %s139 = sphi 0, %s139
      %s141 = sphi 0, %s139
      %s142 = sphi 0, %s141
      %s156 = sphi 0, %s142
      %s160 = sphi 0, %s160
      %s162 = sphi 0, %s160
      %s163 = sphi 0, %s162
      %s177 = sphi 0, %s163
      %s181 = sphi 0, %s181
      %s183 = sphi 0, %s181
      %s184 = sphi 0, %s183
      %s198 = sphi 0, %s184
      %s202 = sphi 0, %s202
      %s204 = sphi 0, %s202
      %s205 = sphi 0, %s204
      %s219 = sphi 0, %s205
      %s225 = sphi 0, %s227
      %s228 = sphi 0, %s225
      %s229 = sphi 0, %s228
      %s245 = sphi 0, %s229
    $region4: #{tpu_custom_call.1} parent=1 // loop_header_branch
      %24 = sbr.rel (%p22) target = $region8
    $region5: #{tpu_custom_call.1} parent=1 // loop_body
      %s26 = ssub.s32 %s21, 1
      %s27 = ssub.s32 %s21, 2
      %s28 = sadd.s32 %s21, 1
      %s29 = ssub.s32 %s21, %s28
      %p30 = scmp.eq.s32.totalorder %s29, 0
      %s32 = sadd.s32 %s31, 1
      %s33 = scalar_select %p30, %s31, %s32
      %p36 = pneg %p30
      %p37 = scmp.eq.s32.totalorder %s21, 1
      %p38 = por %p36, %p37
      %p39 = scmp.ne.s32.totalorder %s31, %s34
      %p40 = scmp.eq.s32.totalorder %s21, 0
      %p41 = por %p39, %p40
      %p42 = scmp.ne.s32.totalorder %s31, %s34
      %p43 = scmp.eq.s32.totalorder %s26, 1
      %p44 = por %p42, %p43
      %p45 = scmp.ne.s32.totalorder %s34, %s35
      %p46 = scmp.eq.s32.totalorder %s26, 0
      %p47 = por %p45, %p46
      %p48 = scmp.ne.s32.totalorder %s34, %s35
      %p49 = scmp.eq.s32.totalorder %s27, 1
      %p50 = por %p48, %p49
      %p52 = scmp.ne.s32.totalorder %s35, %s51
      %p53 = scmp.eq.s32.totalorder %s27, 0
      %p54 = por %p52, %p53
      %s56 = sadd.s32 %s55, 1
      %p59 = scmp.eq.s32.totalorder %s21, 1
      %p60 = scmp.ne.s32.totalorder %s55, %s57
      %p61 = scmp.eq.s32.totalorder %s21, 0
      %p62 = por %p60, %p61
      %p63 = scmp.ne.s32.totalorder %s55, %s57
      %p64 = scmp.eq.s32.totalorder %s26, 1
      %p65 = por %p63, %p64
      %p66 = scmp.ne.s32.totalorder %s57, %s58
      %p67 = scmp.eq.s32.totalorder %s26, 0
      %p68 = por %p66, %p67
      %p69 = scmp.ne.s32.totalorder %s57, %s58
      %p70 = scmp.eq.s32.totalorder %s27, 1
      %p71 = por %p69, %p70
      %p73 = scmp.ne.s32.totalorder %s58, %s72
      %p74 = scmp.eq.s32.totalorder %s27, 0
      %p75 = por %p73, %p74
      %s77 = sadd.s32 %s76, 1
      %p80 = scmp.eq.s32.totalorder %s21, 1
      %p81 = scmp.ne.s32.totalorder %s76, %s78
      %p82 = scmp.eq.s32.totalorder %s21, 0
      %p83 = por %p81, %p82
      %p84 = scmp.ne.s32.totalorder %s76, %s78
      %p85 = scmp.eq.s32.totalorder %s26, 1
      %p86 = por %p84, %p85
      %p87 = scmp.ne.s32.totalorder %s78, %s79
      %p88 = scmp.eq.s32.totalorder %s26, 0
      %p89 = por %p87, %p88
      %p90 = scmp.ne.s32.totalorder %s78, %s79
      %p91 = scmp.eq.s32.totalorder %s27, 1
      %p92 = por %p90, %p91
      %p94 = scmp.ne.s32.totalorder %s79, %s93
      %p95 = scmp.eq.s32.totalorder %s27, 0
      %p96 = por %p94, %p95
      %s98 = sadd.s32 %s97, 1
      %p101 = scmp.eq.s32.totalorder %s21, 1
      %p102 = scmp.ne.s32.totalorder %s97, %s99
      %p103 = scmp.eq.s32.totalorder %s21, 0
      %p104 = por %p102, %p103
      %p105 = scmp.ne.s32.totalorder %s97, %s99
      %p106 = scmp.eq.s32.totalorder %s26, 1
      %p107 = por %p105, %p106
      %p108 = scmp.ne.s32.totalorder %s99, %s100
      %p109 = scmp.eq.s32.totalorder %s26, 0
      %p110 = por %p108, %p109
      %p111 = scmp.ne.s32.totalorder %s99, %s100
      %p112 = scmp.eq.s32.totalorder %s27, 1
      %p113 = por %p111, %p112
      %p115 = scmp.ne.s32.totalorder %s100, %s114
      %p116 = scmp.eq.s32.totalorder %s27, 0
      %p117 = por %p115, %p116
      %s119 = sadd.s32 %s118, 1
      %p122 = scmp.eq.s32.totalorder %s21, 1
      %p123 = scmp.ne.s32.totalorder %s118, %s120
      %p124 = scmp.eq.s32.totalorder %s21, 0
      %p125 = por %p123, %p124
      %p126 = scmp.ne.s32.totalorder %s118, %s120
      %p127 = scmp.eq.s32.totalorder %s26, 1
      %p128 = por %p126, %p127
      %p129 = scmp.ne.s32.totalorder %s120, %s121
      %p130 = scmp.eq.s32.totalorder %s26, 0
      %p131 = por %p129, %p130
      %p132 = scmp.ne.s32.totalorder %s120, %s121
      %p133 = scmp.eq.s32.totalorder %s27, 1
      %p134 = por %p132, %p133
      %p136 = scmp.ne.s32.totalorder %s121, %s135
      %p137 = scmp.eq.s32.totalorder %s27, 0
      %p138 = por %p136, %p137
      %s140 = sadd.s32 %s139, 1
      %p143 = scmp.eq.s32.totalorder %s21, 1
      %p144 = scmp.ne.s32.totalorder %s139, %s141
      %p145 = scmp.eq.s32.totalorder %s21, 0
      %p146 = por %p144, %p145
      %p147 = scmp.ne.s32.totalorder %s139, %s141
      %p148 = scmp.eq.s32.totalorder %s26, 1
      %p149 = por %p147, %p148
      %p150 = scmp.ne.s32.totalorder %s141, %s142
      %p151 = scmp.eq.s32.totalorder %s26, 0
      %p152 = por %p150, %p151
      %p153 = scmp.ne.s32.totalorder %s141, %s142
      %p154 = scmp.eq.s32.totalorder %s27, 1
      %p155 = por %p153, %p154
      %p157 = scmp.ne.s32.totalorder %s142, %s156
      %p158 = scmp.eq.s32.totalorder %s27, 0
      %p159 = por %p157, %p158
      %s161 = sadd.s32 %s160, 1
      %p164 = scmp.eq.s32.totalorder %s21, 1
      %p165 = scmp.ne.s32.totalorder %s160, %s162
      %p166 = scmp.eq.s32.totalorder %s21, 0
      %p167 = por %p165, %p166
      %p168 = scmp.ne.s32.totalorder %s160, %s162
      %p169 = scmp.eq.s32.totalorder %s26, 1
      %p170 = por %p168, %p169
      %p171 = scmp.ne.s32.totalorder %s162, %s163
      %p172 = scmp.eq.s32.totalorder %s26, 0
      %p173 = por %p171, %p172
      %p174 = scmp.ne.s32.totalorder %s162, %s163
      %p175 = scmp.eq.s32.totalorder %s27, 1
      %p176 = por %p174, %p175
      %p178 = scmp.ne.s32.totalorder %s163, %s177
      %p179 = scmp.eq.s32.totalorder %s27, 0
      %p180 = por %p178, %p179
      %s182 = sadd.s32 %s181, 1
      %p185 = scmp.eq.s32.totalorder %s21, 1
      %p186 = scmp.ne.s32.totalorder %s181, %s183
      %p187 = scmp.eq.s32.totalorder %s21, 0
      %p188 = por %p186, %p187
      %p189 = scmp.ne.s32.totalorder %s181, %s183
      %p190 = scmp.eq.s32.totalorder %s26, 1
      %p191 = por %p189, %p190
      %p192 = scmp.ne.s32.totalorder %s183, %s184
      %p193 = scmp.eq.s32.totalorder %s26, 0
      %p194 = por %p192, %p193
      %p195 = scmp.ne.s32.totalorder %s183, %s184
      %p196 = scmp.eq.s32.totalorder %s27, 1
      %p197 = por %p195, %p196
      %p199 = scmp.ne.s32.totalorder %s184, %s198
      %p200 = scmp.eq.s32.totalorder %s27, 0
      %p201 = por %p199, %p200
      %s203 = sadd.s32 %s202, 1
      %p206 = scmp.eq.s32.totalorder %s21, 1
      %p207 = scmp.ne.s32.totalorder %s202, %s204
      %p208 = scmp.eq.s32.totalorder %s21, 0
      %p209 = por %p207, %p208
      %p210 = scmp.ne.s32.totalorder %s202, %s204
      %p211 = scmp.eq.s32.totalorder %s26, 1
      %p212 = por %p210, %p211
      %p213 = scmp.ne.s32.totalorder %s204, %s205
      %p214 = scmp.eq.s32.totalorder %s26, 0
      %p215 = por %p213, %p214
      %p216 = scmp.ne.s32.totalorder %s204, %s205
      %p217 = scmp.eq.s32.totalorder %s27, 1
      %p218 = por %p216, %p217
      %p220 = scmp.ne.s32.totalorder %s205, %s219
      %p221 = scmp.eq.s32.totalorder %s27, 0
      %p222 = por %p220, %p221
      %s223 = ssub.s32 %s21, %s28
      %p224 = scmp.eq.s32.totalorder %s223, 0
      %s226 = sadd.s32 %s225, 1
      %s227 = scalar_select %p224, %s225, %s226
      %p230 = pneg %p224
      %p231 = scmp.eq.s32.totalorder %s21, 1
      %p232 = por %p230, %p231
      %p233 = scmp.ne.s32.totalorder %s225, %s228
      %p234 = scmp.eq.s32.totalorder %s21, 0
      %p235 = por %p233, %p234
      %p236 = scmp.ne.s32.totalorder %s225, %s228
      %p237 = scmp.eq.s32.totalorder %s26, 1
      %p238 = por %p236, %p237
      %p239 = scmp.ne.s32.totalorder %s228, %s229
      %p240 = scmp.eq.s32.totalorder %s26, 0
      %p241 = por %p239, %p240
      %p242 = scmp.ne.s32.totalorder %s228, %s229
      %p243 = scmp.eq.s32.totalorder %s27, 1
      %p244 = por %p242, %p243
      %p246 = scmp.ne.s32.totalorder %s229, %s245
      %p247 = scmp.eq.s32.totalorder %s27, 0
      %p248 = por %p246, %p247
      %p249 = scmp.le.s32.totalorder 1, %s21
      %p250 = scmp.lt.s32.totalorder %s21, 3
      %p251 = pnand %p249, %p250
      %p252 = pneg %p251
      // Predicated region
      $region9: #{tpu_custom_call.1} parent=5 // pred_check
        _
      $region10: #{tpu_custom_call.1} parent=5 // pred_check_branch
        %254 = sbr.rel (%p251) target = $region12
      $region11: #{tpu_custom_call.1} parent=5 // pred_region
        %s255 = ssub.s32 %s21, 1
        // Predicated region
        $region13: #{tpu_custom_call.1} parent=11 // pred_check
          %p256 = pneg %p68
        $region14: #{tpu_custom_call.1} parent=11 // pred_check_branch
          %258 = sbr.rel (%p256) target = $region16
        $region15: #{tpu_custom_call.1} parent=11 // pred_region
          _
        $region16: #{tpu_custom_call.1} parent=11 // pred_fallthru
          _
        // Predicated region
        $region17: #{tpu_custom_call.1} parent=11 // pred_check
          %p259 = pneg %p89
        $region18: #{tpu_custom_call.1} parent=11 // pred_check_branch
          %261 = sbr.rel (%p259) target = $region20
        $region19: #{tpu_custom_call.1} parent=11 // pred_region
          _
        $region20: #{tpu_custom_call.1} parent=11 // pred_fallthru
          _
        // Predicated region
        $region21: #{tpu_custom_call.1} parent=11 // pred_check
          %p262 = pneg %p110
        $region22: #{tpu_custom_call.1} parent=11 // pred_check_branch
          %264 = sbr.rel (%p262) target = $region24
        $region23: #{tpu_custom_call.1} parent=11 // pred_region
          _
        $region24: #{tpu_custom_call.1} parent=11 // pred_fallthru
          _
        // Predicated region
        $region25: #{tpu_custom_call.1} parent=11 // pred_check
          %p265 = pneg %p131
        $region26: #{tpu_custom_call.1} parent=11 // pred_check_branch
          %267 = sbr.rel (%p265) target = $region28
        $region27: #{tpu_custom_call.1} parent=11 // pred_region
          _
        $region28: #{tpu_custom_call.1} parent=11 // pred_fallthru
          _
        // Predicated region
        $region29: #{tpu_custom_call.1} parent=11 // pred_check
          %p268 = pneg %p152
        $region30: #{tpu_custom_call.1} parent=11 // pred_check_branch
          %270 = sbr.rel (%p268) target = $region32
        $region31: #{tpu_custom_call.1} parent=11 // pred_region
          _
        $region32: #{tpu_custom_call.1} parent=11 // pred_fallthru
          _
        // Predicated region
        $region33: #{tpu_custom_call.1} parent=11 // pred_check
          %p271 = pneg %p173
        $region34: #{tpu_custom_call.1} parent=11 // pred_check_branch
          %273 = sbr.rel (%p271) target = $region36
        $region35: #{tpu_custom_call.1} parent=11 // pred_region
          _
        $region36: #{tpu_custom_call.1} parent=11 // pred_fallthru
          _
        // Predicated region
        $region37: #{tpu_custom_call.1} parent=11 // pred_check
          %p274 = pneg %p194
        $region38: #{tpu_custom_call.1} parent=11 // pred_check_branch
          %276 = sbr.rel (%p274) target = $region40
        $region39: #{tpu_custom_call.1} parent=11 // pred_region
          _
        $region40: #{tpu_custom_call.1} parent=11 // pred_fallthru
          _
        // Predicated region
        $region41: #{tpu_custom_call.1} parent=11 // pred_check
          %p277 = pneg %p215
        $region42: #{tpu_custom_call.1} parent=11 // pred_check_branch
          %279 = sbr.rel (%p277) target = $region44
        $region43: #{tpu_custom_call.1} parent=11 // pred_region
          _
        $region44: #{tpu_custom_call.1} parent=11 // pred_fallthru
          _
      $region12: #{tpu_custom_call.1} parent=5 // pred_fallthru
        _
      %p280 = scmp.lt.s32.totalorder %s21, 2
      // Predicated region
      $region45: #{tpu_custom_call.1} parent=5 // pred_check
        %p281 = pneg %p280
      $region46: #{tpu_custom_call.1} parent=5 // pred_check_branch
        %283 = sbr.rel (%p281) target = $region48
      $region47: #{tpu_custom_call.1} parent=5 // pred_region
        // Predicated region
        $region49: #{tpu_custom_call.1} parent=47 // pred_check
          %p284 = pneg %p41
        $region50: #{tpu_custom_call.1} parent=47 // pred_check_branch
          %286 = sbr.rel (%p284) target = $region52
        $region51: #{tpu_custom_call.1} parent=47 // pred_region
          %s287 = sand.u32 %s31, 1
          %s288 = scalar_lea.sflag [#allocation3], %s287
          %s289 = sand.u32 %s31, 1
          %s290 = smul.addr %s289, 8
          %s291 = scalar_lea.vmem [#allocation2], %s290
          %s293 = ssub.s32 128, 128
          %294 = vsyncadd %s288, %s293
          %s295 = smul.addr %s21, 128
          %s296 = scalar_lea.hbm %s0, %s295
          %s298 = sshll.u32 %s291, 4
          %s299 = int_to_ptr.vmem [resolvable:$true] %s298
          %301 = dma.hbm_to_vmem [thread:$0]  %s296, 128, %s299, %s288
        $region52: #{tpu_custom_call.1} parent=47 // pred_fallthru
          _
      $region48: #{tpu_custom_call.1} parent=5 // pred_fallthru
        _
      %p302 = scmp.le.s32.totalorder 1, %s21
      %p303 = scmp.lt.s32.totalorder %s21, 3
      %p304 = pnand %p302, %p303
      %p305 = pneg %p304
      // Predicated region
      $region53: #{tpu_custom_call.1} parent=5 // pred_check
        _
      $region54: #{tpu_custom_call.1} parent=5 // pred_check_branch
        %307 = sbr.rel (%p304) target = $region56
      $region55: #{tpu_custom_call.1} parent=5 // pred_region
        %s308 = ssub.s32 %s21, 1
        %s309 = sand.u32 %s34, 1
        %s310 = scalar_lea.sflag [#allocation3], %s309
        %s311 = sand.u32 %s34, 1
        %s312 = smul.addr %s311, 8
        %s313 = scalar_lea.vmem [#allocation2], %s312
        // Predicated region
        $region57: #{tpu_custom_call.1} parent=55 // pred_check
          %p314 = pneg %p47
        $region58: #{tpu_custom_call.1} parent=55 // pred_check_branch
          %316 = sbr.rel (%p314) target = $region60
        $region59: #{tpu_custom_call.1} parent=55 // pred_region
          %317 = dma.done %s310, 128
        $region60: #{tpu_custom_call.1} parent=55 // pred_fallthru
          _
        %s318 = sand.u32 %s34, 1
        %s319 = scalar_lea.sflag [#allocation3], %s318
        %s320 = sand.u32 %s34, 1
        %s321 = smul.addr %s320, 8
        %s322 = scalar_lea.vmem [#allocation2], %s321
        %p323 = pneg %p47
        %p324 = pneg %p44
        %p325 = pneg %p68
        %p326 = pneg %p65
        %p327 = pneg %p89
        %p328 = pneg %p86
        %p329 = pneg %p110
        %p330 = pneg %p107
        %p331 = pneg %p131
        %p332 = pneg %p128
        %p333 = pneg %p152
        %p334 = pneg %p149
        %p335 = pneg %p173
        %p336 = pneg %p170
        %p337 = pneg %p194
        %p338 = pneg %p191
        %p339 = pneg %p215
        %p340 = pneg %p212
        %p341 = pneg %p241
        %p342 = pneg %p238
        %s343 = sand.u32 %s228, 1
        %s344 = scalar_lea.sflag [#allocation4], %s343
        %s345 = sand.u32 %s228, 1
        %s346 = smul.addr %s345, 8
        %s347 = scalar_lea.vmem [#allocation5], %s346
        %v348 = vld [vmem:[%s313] sm:$0xff]
        %v349 = vld [vmem:[%s1] sm:$0xff]
        %v350 = vld [vmem:[%s1 + $0x8] sm:$0xff]
        %v351 = vld [vmem:[%s1 + $0x10] sm:$0xff]
        %v352 = vld [vmem:[%s1 + $0x18] sm:$0xff]
        %v353 = vld [vmem:[%s2] sm:$0x1]
        %v355 = vlaneseq
        %v356 = vshrl.u32 %v355, 7
        %v357 = vsub.s32 0, %v356
        %v358 = vrot.slane %v353, %v357
        %vm360 = vcmask 261120
        %v362 = vsel %vm360, %v348, 0
        %364 = vmatprep.subr.mxu0 0.0
        %365 = vmatpush1.msra.mxu0 %v349
        %366 = vmatprep.subr.mxu0 0.0
        %367 = vmatpush1.msra.mxu0 %v350
        %368 = vmatprep.subr.mxu0 0.0
        %369 = vmatpush1.msra.mxu0 %v351
        %370 = vmatprep.subr.mxu0 0.0
        %371 = vmatpush1.msra.mxu0 %v352
        %372 = vmatprep.subr.mxu0 0.0
        %373 = vmatpush1.msra.mxu0 0.0
        %374 = vmatprep.subr.mxu0 0.0
        %375 = vmatpush1.msra.mxu0 0.0
        %376 = vmatprep.subr.mxu0 0.0
        %377 = vmatpush1.msra.mxu0 0.0
        %378 = vmatprep.subr.mxu0 0.0
        %379 = vmatpush1.msra.mxu0 0.0
        %380 = vmatprep.subr.mxu0 0.0
        %381 = vmatpush1.msra.mxu0 0.0
        %382 = vmatprep.subr.mxu0 0.0
        %383 = vmatpush1.msra.mxu0 0.0
        %384 = vmatprep.subr.mxu0 0.0
        %385 = vmatpush1.msra.mxu0 0.0
        %386 = vmatprep.subr.mxu0 0.0
        %387 = vmatpush1.msra.mxu0 0.0
        %388 = vmatprep.subr.mxu0 0.0
        %389 = vmatpush1.msra.mxu0 0.0
        %390 = vmatprep.subr.mxu0 0.0
        %391 = vmatpush1.msra.mxu0 0.0
        %392 = vmatprep.subr.mxu0 0.0
        %393 = vmatpush1.msra.mxu0 0.0
        %394 = vmatprep.subr.mxu0 0.0
        %395 = vmatpush1.msra.mxu0 0.0
        %396 = vmatprep.subr.mxu0 0.0
        %397 = vmatpush1.msra.mxu0 0.0
        %398 = vmatprep.subr.mxu0 0.0
        %399 = vmatpush1.msra.mxu0 0.0
        %400 = vmatprep.subr.mxu0 0.0
        %401 = vmatpush1.msra.mxu0 0.0
        %402 = vmatprep.subr.mxu0 0.0
        %403 = vmatpush1.msra.mxu0 0.0
        %404 = vmatprep.subr.mxu0 0.0
        %405 = vmatpush1.msra.mxu0 0.0
        %406 = vmatprep.subr.mxu0 0.0
        %407 = vmatpush1.msra.mxu0 0.0
        %408 = vmatprep.subr.mxu0 0.0
        %409 = vmatpush1.msra.mxu0 0.0
        %410 = vmatprep.subr.mxu0 0.0
        %411 = vmatpush1.msra.mxu0 0.0
        %412 = vmatprep.subr.mxu0 0.0
        %413 = vmatpush1.msra.mxu0 0.0
        %414 = vmatprep.subr.mxu0 0.0
        %415 = vmatpush1.msra.mxu0 0.0
        %416 = vmatprep.subr.mxu0 0.0
        %417 = vmatpush1.msra.mxu0 0.0
        %418 = vmatprep.subr.mxu0 0.0
        %419 = vmatpush1.msra.mxu0 0.0
        %420 = vmatprep.subr.mxu0 0.0
        %421 = vmatpush1.msra.mxu0 0.0
        %422 = vmatprep.subr.mxu0 0.0
        %423 = vmatpush1.msra.mxu0 0.0
        %424 = vmatprep.subr.mxu0 0.0
        %425 = vmatpush1.msra.mxu0 0.0
        %426 = vmatprep.subr.mxu0 0.0
        %427 = vmatpush1.msra.mxu0 0.0
        %428 = vmatprep.mubr.f32.mxu0 0.0
        %429 = vmatmul.mubr.f32.gmra.mrb[0].mxu0 %v362
        %v430 = vpop.f32.mrb[0].mxu0
        %v431 = vadd.f32 %v358, %v430
        %v432 = vpop.f32.mrb[0].mxu0
        %433 = vdwg.mxu0
        %v434 = vmul.f32 %v431, 0.35355338
        %436 = vrot.lane.b32.xlu0 %v434, 120
        %v437 = vpop.permute.xlu0 %436
        %438 = vrot.lane.b32.xlu0 %v434, 112
        %v439 = vpop.permute.xlu0 %438
        %440 = vrot.lane.b32.xlu0 %v434, 104
        %v441 = vpop.permute.xlu0 %440
        %443 = vrot.lane.b32.xlu0 %v431, 120
        %v444 = vpop.permute.xlu0 %443
        %445 = vrot.lane.b32.xlu0 %v431, 112
        %v446 = vpop.permute.xlu0 %445
        %447 = vrot.lane.b32.xlu0 %v431, 104
        %v448 = vpop.permute.xlu0 %447
        %449 = vrot.lane.b32.xlu0 %v431, 96
        %v450 = vpop.permute.xlu0 %449
        %vm451 = vcmask 64512
        %v452 = vsel %vm451, %v434, 0
        %v454 = vsel %vm451, %v450, 0
        %456 = vmatprep.subr.mxu0 0.0
        %457 = vmatpush1.xpose.msra.mxu0 %v454
        %458 = vmatprep.subr.mxu0 0.0
        %459 = vmatpush1.xpose.msra.mxu0 0.0
        %460 = vmatprep.subr.mxu0 0.0
        %461 = vmatpush1.xpose.msra.mxu0 0.0
        %462 = vmatprep.subr.mxu0 0.0
        %463 = vmatpush1.xpose.msra.mxu0 0.0
        %464 = vmatprep.subr.mxu0 0.0
        %465 = vmatpush1.xpose.msra.mxu0 0.0
        %466 = vmatprep.subr.mxu0 0.0
        %467 = vmatpush1.xpose.msra.mxu0 0.0
        %468 = vmatprep.subr.mxu0 0.0
        %469 = vmatpush1.xpose.msra.mxu0 0.0
        %470 = vmatprep.subr.mxu0 0.0
        %471 = vmatpush1.xpose.msra.mxu0 0.0
        %472 = vmatprep.subr.mxu0 0.0
        %473 = vmatpush1.xpose.msra.mxu0 0.0
        %474 = vmatprep.subr.mxu0 0.0
        %475 = vmatpush1.xpose.msra.mxu0 0.0
        %476 = vmatprep.subr.mxu0 0.0
        %477 = vmatpush1.xpose.msra.mxu0 0.0
        %478 = vmatprep.subr.mxu0 0.0
        %479 = vmatpush1.xpose.msra.mxu0 0.0
        %480 = vmatprep.subr.mxu0 0.0
        %481 = vmatpush1.xpose.msra.mxu0 0.0
        %482 = vmatprep.subr.mxu0 0.0
        %483 = vmatpush1.xpose.msra.mxu0 0.0
        %484 = vmatprep.subr.mxu0 0.0
        %485 = vmatpush1.xpose.msra.mxu0 0.0
        %486 = vmatprep.subr.mxu0 0.0
        %487 = vmatpush1.xpose.msra.mxu0 0.0
        %488 = vmatprep.subr.mxu0 0.0
        %489 = vmatpush1.xpose.msra.mxu0 0.0
        %490 = vmatprep.subr.mxu0 0.0
        %491 = vmatpush1.xpose.msra.mxu0 0.0
        %492 = vmatprep.subr.mxu0 0.0
        %493 = vmatpush1.xpose.msra.mxu0 0.0
        %494 = vmatprep.subr.mxu0 0.0
        %495 = vmatpush1.xpose.msra.mxu0 0.0
        %496 = vmatprep.subr.mxu0 0.0
        %497 = vmatpush1.xpose.msra.mxu0 0.0
        %498 = vmatprep.subr.mxu0 0.0
        %499 = vmatpush1.xpose.msra.mxu0 0.0
        %500 = vmatprep.subr.mxu0 0.0
        %501 = vmatpush1.xpose.msra.mxu0 0.0
        %502 = vmatprep.subr.mxu0 0.0
        %503 = vmatpush1.xpose.msra.mxu0 0.0
        %504 = vmatprep.subr.mxu0 0.0
        %505 = vmatpush1.xpose.msra.mxu0 0.0
        %506 = vmatprep.subr.mxu0 0.0
        %507 = vmatpush1.xpose.msra.mxu0 0.0
        %508 = vmatprep.subr.mxu0 0.0
        %509 = vmatpush1.xpose.msra.mxu0 0.0
        %510 = vmatprep.subr.mxu0 0.0
        %511 = vmatpush1.xpose.msra.mxu0 0.0
        %512 = vmatprep.subr.mxu0 0.0
        %513 = vmatpush1.xpose.msra.mxu0 0.0
        %514 = vmatprep.subr.mxu0 0.0
        %515 = vmatpush1.xpose.msra.mxu0 0.0
        %516 = vmatprep.subr.mxu0 0.0
        %517 = vmatpush1.xpose.msra.mxu0 0.0
        %518 = vmatprep.subr.mxu0 0.0
        %519 = vmatpush1.xpose.msra.mxu0 0.0
        %520 = vmatprep.mubr.f32.mxu0 0.0
        %521 = vmatmul.mubr.f32.gmra.mrb[0].mxu0 %v452
        %v522 = vpop.f32.mrb[0].mxu0
        %v523 = vadd.f32 0.0, %v522
        %v524 = vpop.f32.mrb[0].mxu0
        %525 = vdwg.mxu0
        %526 = vrot.lane.b32.xlu0 %v444, 96
        %v527 = vpop.permute.xlu0 %526
        %v528 = vsel %vm451, %v437, 0
        %v530 = vsel %vm451, %v527, 0
        %532 = vmatprep.subr.mxu0 0.0
        %533 = vmatpush1.xpose.msra.mxu0 %v530
        %534 = vmatprep.subr.mxu0 0.0
        %535 = vmatpush1.xpose.msra.mxu0 0.0
        %536 = vmatprep.subr.mxu0 0.0
        %537 = vmatpush1.xpose.msra.mxu0 0.0
        %538 = vmatprep.subr.mxu0 0.0
        %539 = vmatpush1.xpose.msra.mxu0 0.0
        %540 = vmatprep.subr.mxu0 0.0
        %541 = vmatpush1.xpose.msra.mxu0 0.0
        %542 = vmatprep.subr.mxu0 0.0
        %543 = vmatpush1.xpose.msra.mxu0 0.0
        %544 = vmatprep.subr.mxu0 0.0
        %545 = vmatpush1.xpose.msra.mxu0 0.0
        %546 = vmatprep.subr.mxu0 0.0
        %547 = vmatpush1.xpose.msra.mxu0 0.0
        %548 = vmatprep.subr.mxu0 0.0
        %549 = vmatpush1.xpose.msra.mxu0 0.0
        %550 = vmatprep.subr.mxu0 0.0
        %551 = vmatpush1.xpose.msra.mxu0 0.0
        %552 = vmatprep.subr.mxu0 0.0
        %553 = vmatpush1.xpose.msra.mxu0 0.0
        %554 = vmatprep.subr.mxu0 0.0
        %555 = vmatpush1.xpose.msra.mxu0 0.0
        %556 = vmatprep.subr.mxu0 0.0
        %557 = vmatpush1.xpose.msra.mxu0 0.0
        %558 = vmatprep.subr.mxu0 0.0
        %559 = vmatpush1.xpose.msra.mxu0 0.0
        %560 = vmatprep.subr.mxu0 0.0
        %561 = vmatpush1.xpose.msra.mxu0 0.0
        %562 = vmatprep.subr.mxu0 0.0
        %563 = vmatpush1.xpose.msra.mxu0 0.0
        %564 = vmatprep.subr.mxu0 0.0
        %565 = vmatpush1.xpose.msra.mxu0 0.0
        %566 = vmatprep.subr.mxu0 0.0
        %567 = vmatpush1.xpose.msra.mxu0 0.0
        %568 = vmatprep.subr.mxu0 0.0
        %569 = vmatpush1.xpose.msra.mxu0 0.0
        %570 = vmatprep.subr.mxu0 0.0
        %571 = vmatpush1.xpose.msra.mxu0 0.0
        %572 = vmatprep.subr.mxu0 0.0
        %573 = vmatpush1.xpose.msra.mxu0 0.0
        %574 = vmatprep.subr.mxu0 0.0
        %575 = vmatpush1.xpose.msra.mxu0 0.0
        %576 = vmatprep.subr.mxu0 0.0
        %577 = vmatpush1.xpose.msra.mxu0 0.0
        %578 = vmatprep.subr.mxu0 0.0
        %579 = vmatpush1.xpose.msra.mxu0 0.0
        %580 = vmatprep.subr.mxu0 0.0
        %581 = vmatpush1.xpose.msra.mxu0 0.0
        %582 = vmatprep.subr.mxu0 0.0
        %583 = vmatpush1.xpose.msra.mxu0 0.0
        %584 = vmatprep.subr.mxu0 0.0
        %585 = vmatpush1.xpose.msra.mxu0 0.0
        %586 = vmatprep.subr.mxu0 0.0
        %587 = vmatpush1.xpose.msra.mxu0 0.0
        %588 = vmatprep.subr.mxu0 0.0
        %589 = vmatpush1.xpose.msra.mxu0 0.0
        %590 = vmatprep.subr.mxu0 0.0
        %591 = vmatpush1.xpose.msra.mxu0 0.0
        %592 = vmatprep.subr.mxu0 0.0
        %593 = vmatpush1.xpose.msra.mxu0 0.0
        %594 = vmatprep.subr.mxu0 0.0
        %595 = vmatpush1.xpose.msra.mxu0 0.0
        %596 = vmatprep.mubr.f32.mxu0 0.0
        %597 = vmatmul.mubr.f32.gmra.mrb[0].mxu0 %v528
        %v598 = vpop.f32.mrb[0].mxu0
        %v599 = vadd.f32 0.0, %v598
        %v600 = vpop.f32.mrb[0].mxu0
        %601 = vdwg.mxu0
        %602 = vrot.lane.b32.xlu0 %v446, 96
        %v603 = vpop.permute.xlu0 %602
        %v604 = vsel %vm451, %v439, 0
        %v606 = vsel %vm451, %v603, 0
        %608 = vmatprep.subr.mxu0 0.0
        %609 = vmatpush1.xpose.msra.mxu0 %v606
        %610 = vmatprep.subr.mxu0 0.0
        %611 = vmatpush1.xpose.msra.mxu0 0.0
        %612 = vmatprep.subr.mxu0 0.0
        %613 = vmatpush1.xpose.msra.mxu0 0.0
        %614 = vmatprep.subr.mxu0 0.0
        %615 = vmatpush1.xpose.msra.mxu0 0.0
        %616 = vmatprep.subr.mxu0 0.0
        %617 = vmatpush1.xpose.msra.mxu0 0.0
        %618 = vmatprep.subr.mxu0 0.0
        %619 = vmatpush1.xpose.msra.mxu0 0.0
        %620 = vmatprep.subr.mxu0 0.0
        %621 = vmatpush1.xpose.msra.mxu0 0.0
        %622 = vmatprep.subr.mxu0 0.0
        %623 = vmatpush1.xpose.msra.mxu0 0.0
        %624 = vmatprep.subr.mxu0 0.0
        %625 = vmatpush1.xpose.msra.mxu0 0.0
        %626 = vmatprep.subr.mxu0 0.0
        %627 = vmatpush1.xpose.msra.mxu0 0.0
        %628 = vmatprep.subr.mxu0 0.0
        %629 = vmatpush1.xpose.msra.mxu0 0.0
        %630 = vmatprep.subr.mxu0 0.0
        %631 = vmatpush1.xpose.msra.mxu0 0.0
        %632 = vmatprep.subr.mxu0 0.0
        %633 = vmatpush1.xpose.msra.mxu0 0.0
        %634 = vmatprep.subr.mxu0 0.0
        %635 = vmatpush1.xpose.msra.mxu0 0.0
        %636 = vmatprep.subr.mxu0 0.0
        %637 = vmatpush1.xpose.msra.mxu0 0.0
        %638 = vmatprep.subr.mxu0 0.0
        %639 = vmatpush1.xpose.msra.mxu0 0.0
        %640 = vmatprep.subr.mxu0 0.0
        %641 = vmatpush1.xpose.msra.mxu0 0.0
        %642 = vmatprep.subr.mxu0 0.0
        %643 = vmatpush1.xpose.msra.mxu0 0.0
        %644 = vmatprep.subr.mxu0 0.0
        %645 = vmatpush1.xpose.msra.mxu0 0.0
        %646 = vmatprep.subr.mxu0 0.0
        %647 = vmatpush1.xpose.msra.mxu0 0.0
        %648 = vmatprep.subr.mxu0 0.0
        %649 = vmatpush1.xpose.msra.mxu0 0.0
        %650 = vmatprep.subr.mxu0 0.0
        %651 = vmatpush1.xpose.msra.mxu0 0.0
        %652 = vmatprep.subr.mxu0 0.0
        %653 = vmatpush1.xpose.msra.mxu0 0.0
        %654 = vmatprep.subr.mxu0 0.0
        %655 = vmatpush1.xpose.msra.mxu0 0.0
        %656 = vmatprep.subr.mxu0 0.0
        %657 = vmatpush1.xpose.msra.mxu0 0.0
        %658 = vmatprep.subr.mxu0 0.0
        %659 = vmatpush1.xpose.msra.mxu0 0.0
        %660 = vmatprep.subr.mxu0 0.0
        %661 = vmatpush1.xpose.msra.mxu0 0.0
        %662 = vmatprep.subr.mxu0 0.0
        %663 = vmatpush1.xpose.msra.mxu0 0.0
        %664 = vmatprep.subr.mxu0 0.0
        %665 = vmatpush1.xpose.msra.mxu0 0.0
        %666 = vmatprep.subr.mxu0 0.0
        %667 = vmatpush1.xpose.msra.mxu0 0.0
        %668 = vmatprep.subr.mxu0 0.0
        %669 = vmatpush1.xpose.msra.mxu0 0.0
        %670 = vmatprep.subr.mxu0 0.0
        %671 = vmatpush1.xpose.msra.mxu0 0.0
        %672 = vmatprep.mubr.f32.mxu0 0.0
        %673 = vmatmul.mubr.f32.gmra.mrb[0].mxu0 %v604
        %v674 = vpop.f32.mrb[0].mxu0
        %v675 = vadd.f32 0.0, %v674
        %v676 = vpop.f32.mrb[0].mxu0
        %677 = vdwg.mxu0
        %678 = vrot.lane.b32.xlu0 %v448, 96
        %v679 = vpop.permute.xlu0 %678
        %v680 = vsel %vm451, %v441, 0
        %v682 = vsel %vm451, %v679, 0
        %684 = vmatprep.subr.mxu0 0.0
        %685 = vmatpush1.xpose.msra.mxu0 %v682
        %686 = vmatprep.subr.mxu0 0.0
        %687 = vmatpush1.xpose.msra.mxu0 0.0
        %688 = vmatprep.subr.mxu0 0.0
        %689 = vmatpush1.xpose.msra.mxu0 0.0
        %690 = vmatprep.subr.mxu0 0.0
        %691 = vmatpush1.xpose.msra.mxu0 0.0
        %692 = vmatprep.subr.mxu0 0.0
        %693 = vmatpush1.xpose.msra.mxu0 0.0
        %694 = vmatprep.subr.mxu0 0.0
        %695 = vmatpush1.xpose.msra.mxu0 0.0
        %696 = vmatprep.subr.mxu0 0.0
        %697 = vmatpush1.xpose.msra.mxu0 0.0
        %698 = vmatprep.subr.mxu0 0.0
        %699 = vmatpush1.xpose.msra.mxu0 0.0
        %700 = vmatprep.subr.mxu0 0.0
        %701 = vmatpush1.xpose.msra.mxu0 0.0
        %702 = vmatprep.subr.mxu0 0.0
        %703 = vmatpush1.xpose.msra.mxu0 0.0
        %704 = vmatprep.subr.mxu0 0.0
        %705 = vmatpush1.xpose.msra.mxu0 0.0
        %706 = vmatprep.subr.mxu0 0.0
        %707 = vmatpush1.xpose.msra.mxu0 0.0
        %708 = vmatprep.subr.mxu0 0.0
        %709 = vmatpush1.xpose.msra.mxu0 0.0
        %710 = vmatprep.subr.mxu0 0.0
        %711 = vmatpush1.xpose.msra.mxu0 0.0
        %712 = vmatprep.subr.mxu0 0.0
        %713 = vmatpush1.xpose.msra.mxu0 0.0
        %714 = vmatprep.subr.mxu0 0.0
        %715 = vmatpush1.xpose.msra.mxu0 0.0
        %716 = vmatprep.subr.mxu0 0.0
        %717 = vmatpush1.xpose.msra.mxu0 0.0
        %718 = vmatprep.subr.mxu0 0.0
        %719 = vmatpush1.xpose.msra.mxu0 0.0
        %720 = vmatprep.subr.mxu0 0.0
        %721 = vmatpush1.xpose.msra.mxu0 0.0
        %722 = vmatprep.subr.mxu0 0.0
        %723 = vmatpush1.xpose.msra.mxu0 0.0
        %724 = vmatprep.subr.mxu0 0.0
        %725 = vmatpush1.xpose.msra.mxu0 0.0
        %726 = vmatprep.subr.mxu0 0.0
        %727 = vmatpush1.xpose.msra.mxu0 0.0
        %728 = vmatprep.subr.mxu0 0.0
        %729 = vmatpush1.xpose.msra.mxu0 0.0
        %730 = vmatprep.subr.mxu0 0.0
        %731 = vmatpush1.xpose.msra.mxu0 0.0
        %732 = vmatprep.subr.mxu0 0.0
        %733 = vmatpush1.xpose.msra.mxu0 0.0
        %734 = vmatprep.subr.mxu0 0.0
        %735 = vmatpush1.xpose.msra.mxu0 0.0
        %736 = vmatprep.subr.mxu0 0.0
        %737 = vmatpush1.xpose.msra.mxu0 0.0
        %738 = vmatprep.subr.mxu0 0.0
        %739 = vmatpush1.xpose.msra.mxu0 0.0
        %740 = vmatprep.subr.mxu0 0.0
        %741 = vmatpush1.xpose.msra.mxu0 0.0
        %742 = vmatprep.subr.mxu0 0.0
        %743 = vmatpush1.xpose.msra.mxu0 0.0
        %744 = vmatprep.subr.mxu0 0.0
        %745 = vmatpush1.xpose.msra.mxu0 0.0
        %746 = vmatprep.subr.mxu0 0.0
        %747 = vmatpush1.xpose.msra.mxu0 0.0
        %748 = vmatprep.mubr.f32.mxu0 0.0
        %749 = vmatmul.mubr.f32.gmra.mrb[0].mxu0 %v680
        %v750 = vpop.f32.mrb[0].mxu0
        %v751 = vadd.f32 0.0, %v750
        %v752 = vpop.f32.mrb[0].mxu0
        %753 = vdwg.mxu0
        %v754 = vsel %vm451, %v523, -inf
        %755 = vmax.xlane.f32.xlu0 %v754
        %v756 = vpop.xlane.xlu0 %755
        %v757 = vsel %vm451, %v599, -inf
        %758 = vmax.xlane.f32.xlu0 %v757
        %v759 = vpop.xlane.xlu0 %758
        %v760 = vsel %vm451, %v675, -inf
        %761 = vmax.xlane.f32.xlu0 %v760
        %v762 = vpop.xlane.xlu0 %761
        %v763 = vsel %vm451, %v751, -inf
        %764 = vmax.xlane.f32.xlu0 %v763
        %v765 = vpop.xlane.xlu0 %764
        %v766 = vsub.f32 -inf, %v756
        %v767 = vsub.f32 -inf, %v759
        %v768 = vsub.f32 -inf, %v762
        %v769 = vsub.f32 -inf, %v765
        %v770 = vmul.f32 %v766, 1.442695
        %v771 = vpow.pop %v770
        %v772 = vmul.f32 %v767, 1.442695
        %v773 = vpow.pop %v772
        %v774 = vmul.f32 %v768, 1.442695
        %v775 = vpow.pop %v774
        %v776 = vmul.f32 %v769, 1.442695
        %v777 = vpow.pop %v776
        %v778 = vsub.f32 %v523, %v756
        %v779 = vsub.f32 %v599, %v759
        %v780 = vsub.f32 %v675, %v762
        %v781 = vsub.f32 %v751, %v765
        %v782 = vmul.f32 %v778, 1.442695
        %v783 = vpow.pop %v782
        %v784 = vmul.f32 %v779, 1.442695
        %v785 = vpow.pop %v784
        %v786 = vmul.f32 %v780, 1.442695
        %v787 = vpow.pop %v786
        %v788 = vmul.f32 %v781, 1.442695
        %v789 = vpow.pop %v788
        %v790 = vmul.f32 %v771, 0.0
        %v791 = vmul.f32 %v773, 0.0
        %v792 = vmul.f32 %v775, 0.0
        %v793 = vmul.f32 %v777, 0.0
        %v794 = vsel %vm451, %v783, 0.0
        %795 = vadd.xlane.f32.xlu0 %v794
        %v796 = vpop.xlane.xlu0 %795
        %v797 = vsel %vm451, %v785, 0.0
        %798 = vadd.xlane.f32.xlu0 %v797
        %v799 = vpop.xlane.xlu0 %798
        %v800 = vsel %vm451, %v787, 0.0
        %801 = vadd.xlane.f32.xlu0 %v800
        %v802 = vpop.xlane.xlu0 %801
        %v803 = vsel %vm451, %v789, 0.0
        %804 = vadd.xlane.f32.xlu0 %v803
        %v805 = vpop.xlane.xlu0 %804
        %v806 = vadd.f32 %v790, %v796
        %v807 = vadd.f32 %v791, %v799
        %v808 = vadd.f32 %v792, %v802
        %v809 = vadd.f32 %v793, %v805
        %810 = vrot.lane.b32.xlu0 %v431, 64
        %v811 = vpop.permute.xlu0 %810
        %v814 = vsel %vm451, %v783, 0
        %816 = vmatprep.subr.mxu0 0.0
        %817 = vmatpush1.msra.mxu0 %v811
        %818 = vmatprep.subr.mxu0 0.0
        %819 = vmatpush1.msra.mxu0 0.0
        %820 = vmatprep.subr.mxu0 0.0
        %821 = vmatpush1.msra.mxu0 0.0
        %822 = vmatprep.subr.mxu0 0.0
        %823 = vmatpush1.msra.mxu0 0.0
        %824 = vmatprep.subr.mxu0 0.0
        %825 = vmatpush1.msra.mxu0 0.0
        %826 = vmatprep.subr.mxu0 0.0
        %827 = vmatpush1.msra.mxu0 0.0
        %828 = vmatprep.subr.mxu0 0.0
        %829 = vmatpush1.msra.mxu0 0.0
        %830 = vmatprep.subr.mxu0 0.0
        %831 = vmatpush1.msra.mxu0 0.0
        %832 = vmatprep.subr.mxu0 0.0
        %833 = vmatpush1.msra.mxu0 0.0
        %834 = vmatprep.subr.mxu0 0.0
        %835 = vmatpush1.msra.mxu0 0.0
        %836 = vmatprep.subr.mxu0 0.0
        %837 = vmatpush1.msra.mxu0 0.0
        %838 = vmatprep.subr.mxu0 0.0
        %839 = vmatpush1.msra.mxu0 0.0
        %840 = vmatprep.subr.mxu0 0.0
        %841 = vmatpush1.msra.mxu0 0.0
        %842 = vmatprep.subr.mxu0 0.0
        %843 = vmatpush1.msra.mxu0 0.0
        %844 = vmatprep.subr.mxu0 0.0
        %845 = vmatpush1.msra.mxu0 0.0
        %846 = vmatprep.subr.mxu0 0.0
        %847 = vmatpush1.msra.mxu0 0.0
        %848 = vmatprep.subr.mxu0 0.0
        %849 = vmatpush1.msra.mxu0 0.0
        %850 = vmatprep.subr.mxu0 0.0
        %851 = vmatpush1.msra.mxu0 0.0
        %852 = vmatprep.subr.mxu0 0.0
        %853 = vmatpush1.msra.mxu0 0.0
        %854 = vmatprep.subr.mxu0 0.0
        %855 = vmatpush1.msra.mxu0 0.0
        %856 = vmatprep.subr.mxu0 0.0
        %857 = vmatpush1.msra.mxu0 0.0
        %858 = vmatprep.subr.mxu0 0.0
        %859 = vmatpush1.msra.mxu0 0.0
        %860 = vmatprep.subr.mxu0 0.0
        %861 = vmatpush1.msra.mxu0 0.0
        %862 = vmatprep.subr.mxu0 0.0
        %863 = vmatpush1.msra.mxu0 0.0
        %864 = vmatprep.subr.mxu0 0.0
        %865 = vmatpush1.msra.mxu0 0.0
        %866 = vmatprep.subr.mxu0 0.0
        %867 = vmatpush1.msra.mxu0 0.0
        %868 = vmatprep.subr.mxu0 0.0
        %869 = vmatpush1.msra.mxu0 0.0
        %870 = vmatprep.subr.mxu0 0.0
        %871 = vmatpush1.msra.mxu0 0.0
        %872 = vmatprep.subr.mxu0 0.0
        %873 = vmatpush1.msra.mxu0 0.0
        %874 = vmatprep.subr.mxu0 0.0
        %875 = vmatpush1.msra.mxu0 0.0
        %876 = vmatprep.subr.mxu0 0.0
        %877 = vmatpush1.msra.mxu0 0.0
        %878 = vmatprep.subr.mxu0 0.0
        %879 = vmatpush1.msra.mxu0 0.0
        %880 = vmatprep.mubr.f32.mxu0 0.0
        %881 = vmatmul.mubr.f32.gmra.mrb[0].mxu0 %v814
        %v882 = vpop.f32.mrb[0].mxu0
        %v883 = vadd.f32 0.0, %v882
        %v884 = vpop.f32.mrb[0].mxu0
        %885 = vdwg.mxu0
        %886 = vrot.lane.b32.xlu0 %v444, 64
        %v887 = vpop.permute.xlu0 %886
        %v890 = vsel %vm451, %v785, 0
        %892 = vmatprep.subr.mxu0 0.0
        %893 = vmatpush1.msra.mxu0 %v887
        %894 = vmatprep.subr.mxu0 0.0
        %895 = vmatpush1.msra.mxu0 0.0
        %896 = vmatprep.subr.mxu0 0.0
        %897 = vmatpush1.msra.mxu0 0.0
        %898 = vmatprep.subr.mxu0 0.0
        %899 = vmatpush1.msra.mxu0 0.0
        %900 = vmatprep.subr.mxu0 0.0
        %901 = vmatpush1.msra.mxu0 0.0
        %902 = vmatprep.subr.mxu0 0.0
        %903 = vmatpush1.msra.mxu0 0.0
        %904 = vmatprep.subr.mxu0 0.0
        %905 = vmatpush1.msra.mxu0 0.0
        %906 = vmatprep.subr.mxu0 0.0
        %907 = vmatpush1.msra.mxu0 0.0
        %908 = vmatprep.subr.mxu0 0.0
        %909 = vmatpush1.msra.mxu0 0.0
        %910 = vmatprep.subr.mxu0 0.0
        %911 = vmatpush1.msra.mxu0 0.0
        %912 = vmatprep.subr.mxu0 0.0
        %913 = vmatpush1.msra.mxu0 0.0
        %914 = vmatprep.subr.mxu0 0.0
        %915 = vmatpush1.msra.mxu0 0.0
        %916 = vmatprep.subr.mxu0 0.0
        %917 = vmatpush1.msra.mxu0 0.0
        %918 = vmatprep.subr.mxu0 0.0
        %919 = vmatpush1.msra.mxu0 0.0
        %920 = vmatprep.subr.mxu0 0.0
        %921 = vmatpush1.msra.mxu0 0.0
        %922 = vmatprep.subr.mxu0 0.0
        %923 = vmatpush1.msra.mxu0 0.0
        %924 = vmatprep.subr.mxu0 0.0
        %925 = vmatpush1.msra.mxu0 0.0
        %926 = vmatprep.subr.mxu0 0.0
        %927 = vmatpush1.msra.mxu0 0.0
        %928 = vmatprep.subr.mxu0 0.0
        %929 = vmatpush1.msra.mxu0 0.0
        %930 = vmatprep.subr.mxu0 0.0
        %931 = vmatpush1.msra.mxu0 0.0
        %932 = vmatprep.subr.mxu0 0.0
        %933 = vmatpush1.msra.mxu0 0.0
        %934 = vmatprep.subr.mxu0 0.0
        %935 = vmatpush1.msra.mxu0 0.0
        %936 = vmatprep.subr.mxu0 0.0
        %937 = vmatpush1.msra.mxu0 0.0
        %938 = vmatprep.subr.mxu0 0.0
        %939 = vmatpush1.msra.mxu0 0.0
        %940 = vmatprep.subr.mxu0 0.0
        %941 = vmatpush1.msra.mxu0 0.0
        %942 = vmatprep.subr.mxu0 0.0
        %943 = vmatpush1.msra.mxu0 0.0
        %944 = vmatprep.subr.mxu0 0.0
        %945 = vmatpush1.msra.mxu0 0.0
        %946 = vmatprep.subr.mxu0 0.0
        %947 = vmatpush1.msra.mxu0 0.0
        %948 = vmatprep.subr.mxu0 0.0
        %949 = vmatpush1.msra.mxu0 0.0
        %950 = vmatprep.subr.mxu0 0.0
        %951 = vmatpush1.msra.mxu0 0.0
        %952 = vmatprep.subr.mxu0 0.0
        %953 = vmatpush1.msra.mxu0 0.0
        %954 = vmatprep.subr.mxu0 0.0
        %955 = vmatpush1.msra.mxu0 0.0
        %956 = vmatprep.mubr.f32.mxu0 0.0
        %957 = vmatmul.mubr.f32.gmra.mrb[0].mxu0 %v890
        %v958 = vpop.f32.mrb[0].mxu0
        %v959 = vadd.f32 0.0, %v958
        %v960 = vpop.f32.mrb[0].mxu0
        %961 = vdwg.mxu0
        %962 = vrot.lane.b32.xlu0 %v446, 64
        %v963 = vpop.permute.xlu0 %962
        %v966 = vsel %vm451, %v787, 0
        %968 = vmatprep.subr.mxu0 0.0
        %969 = vmatpush1.msra.mxu0 %v963
        %970 = vmatprep.subr.mxu0 0.0
        %971 = vmatpush1.msra.mxu0 0.0
        %972 = vmatprep.subr.mxu0 0.0
        %973 = vmatpush1.msra.mxu0 0.0
        %974 = vmatprep.subr.mxu0 0.0
        %975 = vmatpush1.msra.mxu0 0.0
        %976 = vmatprep.subr.mxu0 0.0
        %977 = vmatpush1.msra.mxu0 0.0
        %978 = vmatprep.subr.mxu0 0.0
        %979 = vmatpush1.msra.mxu0 0.0
        %980 = vmatprep.subr.mxu0 0.0
        %981 = vmatpush1.msra.mxu0 0.0
        %982 = vmatprep.subr.mxu0 0.0
        %983 = vmatpush1.msra.mxu0 0.0
        %984 = vmatprep.subr.mxu0 0.0
        %985 = vmatpush1.msra.mxu0 0.0
        %986 = vmatprep.subr.mxu0 0.0
        %987 = vmatpush1.msra.mxu0 0.0
        %988 = vmatprep.subr.mxu0 0.0
        %989 = vmatpush1.msra.mxu0 0.0
        %990 = vmatprep.subr.mxu0 0.0
        %991 = vmatpush1.msra.mxu0 0.0
        %992 = vmatprep.subr.mxu0 0.0
        %993 = vmatpush1.msra.mxu0 0.0
        %994 = vmatprep.subr.mxu0 0.0
        %995 = vmatpush1.msra.mxu0 0.0
        %996 = vmatprep.subr.mxu0 0.0
        %997 = vmatpush1.msra.mxu0 0.0
        %998 = vmatprep.subr.mxu0 0.0
        %999 = vmatpush1.msra.mxu0 0.0
        %1000 = vmatprep.subr.mxu0 0.0
        %1001 = vmatpush1.msra.mxu0 0.0
        %1002 = vmatprep.subr.mxu0 0.0
        %1003 = vmatpush1.msra.mxu0 0.0
        %1004 = vmatprep.subr.mxu0 0.0
        %1005 = vmatpush1.msra.mxu0 0.0
        %1006 = vmatprep.subr.mxu0 0.0
        %1007 = vmatpush1.msra.mxu0 0.0
        %1008 = vmatprep.subr.mxu0 0.0
        %1009 = vmatpush1.msra.mxu0 0.0
        %1010 = vmatprep.subr.mxu0 0.0
        %1011 = vmatpush1.msra.mxu0 0.0
        %1012 = vmatprep.subr.mxu0 0.0
        %1013 = vmatpush1.msra.mxu0 0.0
        %1014 = vmatprep.subr.mxu0 0.0
        %1015 = vmatpush1.msra.mxu0 0.0
        %1016 = vmatprep.subr.mxu0 0.0
        %1017 = vmatpush1.msra.mxu0 0.0
        %1018 = vmatprep.subr.mxu0 0.0
        %1019 = vmatpush1.msra.mxu0 0.0
        %1020 = vmatprep.subr.mxu0 0.0
        %1021 = vmatpush1.msra.mxu0 0.0
        %1022 = vmatprep.subr.mxu0 0.0
        %1023 = vmatpush1.msra.mxu0 0.0
        %1024 = vmatprep.subr.mxu0 0.0
        %1025 = vmatpush1.msra.mxu0 0.0
        %1026 = vmatprep.subr.mxu0 0.0
        %1027 = vmatpush1.msra.mxu0 0.0
        %1028 = vmatprep.subr.mxu0 0.0
        %1029 = vmatpush1.msra.mxu0 0.0
        %1030 = vmatprep.subr.mxu0 0.0
        %1031 = vmatpush1.msra.mxu0 0.0
        %1032 = vmatprep.mubr.f32.mxu0 0.0
        %1033 = vmatmul.mubr.f32.gmra.mrb[0].mxu0 %v966
        %v1034 = vpop.f32.mrb[0].mxu0
        %v1035 = vadd.f32 0.0, %v1034
        %v1036 = vpop.f32.mrb[0].mxu0
        %1037 = vdwg.mxu0
        %1038 = vrot.lane.b32.xlu0 %v448, 64
        %v1039 = vpop.permute.xlu0 %1038
        %v1042 = vsel %vm451, %v789, 0
        %1044 = vmatprep.subr.mxu0 0.0
        %1045 = vmatpush1.msra.mxu0 %v1039
        %1046 = vmatprep.subr.mxu0 0.0
        %1047 = vmatpush1.msra.mxu0 0.0
        %1048 = vmatprep.subr.mxu0 0.0
        %1049 = vmatpush1.msra.mxu0 0.0
        %1050 = vmatprep.subr.mxu0 0.0
        %1051 = vmatpush1.msra.mxu0 0.0
        %1052 = vmatprep.subr.mxu0 0.0
        %1053 = vmatpush1.msra.mxu0 0.0
        %1054 = vmatprep.subr.mxu0 0.0
        %1055 = vmatpush1.msra.mxu0 0.0
        %1056 = vmatprep.subr.mxu0 0.0
        %1057 = vmatpush1.msra.mxu0 0.0
        %1058 = vmatprep.subr.mxu0 0.0
        %1059 = vmatpush1.msra.mxu0 0.0
        %1060 = vmatprep.subr.mxu0 0.0
        %1061 = vmatpush1.msra.mxu0 0.0
        %1062 = vmatprep.subr.mxu0 0.0
        %1063 = vmatpush1.msra.mxu0 0.0
        %1064 = vmatprep.subr.mxu0 0.0
        %1065 = vmatpush1.msra.mxu0 0.0
        %1066 = vmatprep.subr.mxu0 0.0
        %1067 = vmatpush1.msra.mxu0 0.0
        %1068 = vmatprep.subr.mxu0 0.0
        %1069 = vmatpush1.msra.mxu0 0.0
        %1070 = vmatprep.subr.mxu0 0.0
        %1071 = vmatpush1.msra.mxu0 0.0
        %1072 = vmatprep.subr.mxu0 0.0
        %1073 = vmatpush1.msra.mxu0 0.0
        %1074 = vmatprep.subr.mxu0 0.0
        %1075 = vmatpush1.msra.mxu0 0.0
        %1076 = vmatprep.subr.mxu0 0.0
        %1077 = vmatpush1.msra.mxu0 0.0
        %1078 = vmatprep.subr.mxu0 0.0
        %1079 = vmatpush1.msra.mxu0 0.0
        %1080 = vmatprep.subr.mxu0 0.0
        %1081 = vmatpush1.msra.mxu0 0.0
        %1082 = vmatprep.subr.mxu0 0.0
        %1083 = vmatpush1.msra.mxu0 0.0
        %1084 = vmatprep.subr.mxu0 0.0
        %1085 = vmatpush1.msra.mxu0 0.0
        %1086 = vmatprep.subr.mxu0 0.0
        %1087 = vmatpush1.msra.mxu0 0.0
        %1088 = vmatprep.subr.mxu0 0.0
        %1089 = vmatpush1.msra.mxu0 0.0
        %1090 = vmatprep.subr.mxu0 0.0
        %1091 = vmatpush1.msra.mxu0 0.0
        %1092 = vmatprep.subr.mxu0 0.0
        %1093 = vmatpush1.msra.mxu0 0.0
        %1094 = vmatprep.subr.mxu0 0.0
        %1095 = vmatpush1.msra.mxu0 0.0
        %1096 = vmatprep.subr.mxu0 0.0
        %1097 = vmatpush1.msra.mxu0 0.0
        %1098 = vmatprep.subr.mxu0 0.0
        %1099 = vmatpush1.msra.mxu0 0.0
        %1100 = vmatprep.subr.mxu0 0.0
        %1101 = vmatpush1.msra.mxu0 0.0
        %1102 = vmatprep.subr.mxu0 0.0
        %1103 = vmatpush1.msra.mxu0 0.0
        %1104 = vmatprep.subr.mxu0 0.0
        %1105 = vmatpush1.msra.mxu0 0.0
        %1106 = vmatprep.subr.mxu0 0.0
        %1107 = vmatpush1.msra.mxu0 0.0
        %1108 = vmatprep.mubr.f32.mxu0 0.0
        %1109 = vmatmul.mubr.f32.gmra.mrb[0].mxu0 %v1042
        %v1110 = vpop.f32.mrb[0].mxu0
        %v1111 = vadd.f32 0.0, %v1110
        %v1112 = vpop.f32.mrb[0].mxu0
        %1113 = vdwg.mxu0
        %v1114 = vadd.f32 %v790, %v883
        %v1115 = vadd.f32 %v791, %v959
        %v1116 = vadd.f32 %v792, %v1035
        %v1117 = vadd.f32 %v793, %v1111
        %v1118 = vrcp.pop %v806
        %v1119 = vrcp.pop %v807
        %v1120 = vrcp.pop %v808
        %v1121 = vrcp.pop %v809
        %v1122 = vmul.f32 %v1114, %v1118
        %v1123 = vmul.f32 %v1115, %v1119
        %v1124 = vmul.f32 %v1116, %v1120
        %v1125 = vmul.f32 %v1117, %v1121
        %1127 = vrot.lane.b32.xlu0 %v1123, 8
        %v1128 = vpop.permute.xlu0 %1127
        %1131 = vrot.lane.b32.xlu0 %v1124, 16
        %v1132 = vpop.permute.xlu0 %1131
        %1135 = vrot.lane.b32.xlu0 %v1125, 24
        %v1136 = vpop.permute.xlu0 %1135
        %v1138 = vsel %vm451, %v1122, %v1128
        %vm1139 = vcmask 130048
        %v1140 = vsel %vm1139, %v1138, %v1132
        %vm1141 = vcmask 195584
        %v1142 = vsel %vm1141, %v1140, %v1136
        %v1143 = vld [vmem:[%s3] sm:$0xff]
        %v1144 = vld [vmem:[%s3 + $0x8] sm:$0xff]
        %v1145 = vld [vmem:[%s3 + $0x10] sm:$0xff]
        %v1146 = vld [vmem:[%s3 + $0x18] sm:$0xff]
        %v1147 = vld [vmem:[%s4] sm:$0x1]
        %v1149 = vlaneseq
        %v1150 = vshrl.u32 %v1149, 7
        %v1151 = vsub.s32 0, %v1150
        %v1152 = vrot.slane %v1147, %v1151
        %v1155 = vsel %vm360, %v1142, 0
        %1157 = vmatprep.subr.mxu0 0.0
        %1158 = vmatpush1.msra.mxu0 %v1143
        %1159 = vmatprep.subr.mxu0 0.0
        %1160 = vmatpush1.msra.mxu0 %v1144
        %1161 = vmatprep.subr.mxu0 0.0
        %1162 = vmatpush1.msra.mxu0 %v1145
        %1163 = vmatprep.subr.mxu0 0.0
        %1164 = vmatpush1.msra.mxu0 %v1146
        %1165 = vmatprep.subr.mxu0 0.0
        %1166 = vmatpush1.msra.mxu0 0.0
        %1167 = vmatprep.subr.mxu0 0.0
        %1168 = vmatpush1.msra.mxu0 0.0
        %1169 = vmatprep.subr.mxu0 0.0
        %1170 = vmatpush1.msra.mxu0 0.0
        %1171 = vmatprep.subr.mxu0 0.0
        %1172 = vmatpush1.msra.mxu0 0.0
        %1173 = vmatprep.subr.mxu0 0.0
        %1174 = vmatpush1.msra.mxu0 0.0
        %1175 = vmatprep.subr.mxu0 0.0
        %1176 = vmatpush1.msra.mxu0 0.0
        %1177 = vmatprep.subr.mxu0 0.0
        %1178 = vmatpush1.msra.mxu0 0.0
        %1179 = vmatprep.subr.mxu0 0.0
        %1180 = vmatpush1.msra.mxu0 0.0
        %1181 = vmatprep.subr.mxu0 0.0
        %1182 = vmatpush1.msra.mxu0 0.0
        %1183 = vmatprep.subr.mxu0 0.0
        %1184 = vmatpush1.msra.mxu0 0.0
        %1185 = vmatprep.subr.mxu0 0.0
        %1186 = vmatpush1.msra.mxu0 0.0
        %1187 = vmatprep.subr.mxu0 0.0
        %1188 = vmatpush1.msra.mxu0 0.0
        %1189 = vmatprep.subr.mxu0 0.0
        %1190 = vmatpush1.msra.mxu0 0.0
        %1191 = vmatprep.subr.mxu0 0.0
        %1192 = vmatpush1.msra.mxu0 0.0
        %1193 = vmatprep.subr.mxu0 0.0
        %1194 = vmatpush1.msra.mxu0 0.0
        %1195 = vmatprep.subr.mxu0 0.0
        %1196 = vmatpush1.msra.mxu0 0.0
        %1197 = vmatprep.subr.mxu0 0.0
        %1198 = vmatpush1.msra.mxu0 0.0
        %1199 = vmatprep.subr.mxu0 0.0
        %1200 = vmatpush1.msra.mxu0 0.0
        %1201 = vmatprep.subr.mxu0 0.0
        %1202 = vmatpush1.msra.mxu0 0.0
        %1203 = vmatprep.subr.mxu0 0.0
        %1204 = vmatpush1.msra.mxu0 0.0
        %1205 = vmatprep.subr.mxu0 0.0
        %1206 = vmatpush1.msra.mxu0 0.0
        %1207 = vmatprep.subr.mxu0 0.0
        %1208 = vmatpush1.msra.mxu0 0.0
        %1209 = vmatprep.subr.mxu0 0.0
        %1210 = vmatpush1.msra.mxu0 0.0
        %1211 = vmatprep.subr.mxu0 0.0
        %1212 = vmatpush1.msra.mxu0 0.0
        %1213 = vmatprep.subr.mxu0 0.0
        %1214 = vmatpush1.msra.mxu0 0.0
        %1215 = vmatprep.subr.mxu0 0.0
        %1216 = vmatpush1.msra.mxu0 0.0
        %1217 = vmatprep.subr.mxu0 0.0
        %1218 = vmatpush1.msra.mxu0 0.0
        %1219 = vmatprep.subr.mxu0 0.0
        %1220 = vmatpush1.msra.mxu0 0.0
        %1221 = vmatprep.mubr.f32.mxu0 0.0
        %1222 = vmatmul.mubr.f32.gmra.mrb[0].mxu0 %v1155
        %v1223 = vpop.f32.mrb[0].mxu0
        %v1224 = vadd.f32 %v1152, %v1223
        %v1225 = vpop.f32.mrb[0].mxu0
        %1226 = vdwg.mxu0
        %v1227 = vadd.f32 %v348, %v1224
        %v1228 = vsel %vm360, %v1227, 0.0
        %1229 = vadd.xlane.f32.xlu0 %v1228
        %v1230 = vpop.xlane.xlu0 %1229
        %v1231 = vrot.slane %v1230, 4
        %v1232 = vadd.f32 %v1230, %v1231
        %v1233 = vrot.slane %v1232, 2
        %v1234 = vadd.f32 %v1232, %v1233
        %v1235 = vrot.slane %v1234, 1
        %v1236 = vadd.f32 %v1234, %v1235
        %s1237 = vtos %v1236
        %v1238 = vrcp.pop 256.0
        %s1239 = vtos %v1238
        %s1240 = smul.f32 %s1237, %s1239
        %v1241 = vstv %s1240
        %v1242 = vsub.f32 %v1227, %v1241
        %v1243 = vmul.f32 %v1242, %v1242
        %v1244 = vsel %vm360, %v1243, 0.0
        %1245 = vadd.xlane.f32.xlu0 %v1244
        %v1246 = vpop.xlane.xlu0 %1245
        %v1247 = vrot.slane %v1246, 4
        %v1248 = vadd.f32 %v1246, %v1247
        %v1249 = vrot.slane %v1248, 2
        %v1250 = vadd.f32 %v1248, %v1249
        %v1251 = vrot.slane %v1250, 1
        %v1252 = vadd.f32 %v1250, %v1251
        %s1253 = vtos %v1252
        %v1254 = vrcp.pop 256.0
        %s1255 = vtos %v1254
        %s1256 = smul.f32 %s1253, %s1255
        %s1257 = sadd.f32 %s1256, 1e-06
        %v1258 = vstv %s1257
        %v1259 = vrsqrt.pop %v1258
        %s1260 = vtos %v1259
        %v1261 = vstv %s1260
        %v1262 = vmul.f32 %v1242, %v1261
        %v1263 = vld [vmem:[%s5] sm:$0xff]
        %v1264 = vld [vmem:[%s5 + $0x8] sm:$0xff]
        %v1265 = vld [vmem:[%s5 + $0x10] sm:$0xff]
        %v1266 = vld [vmem:[%s5 + $0x18] sm:$0xff]
        %v1267 = vld [vmem:[%s6] sm:$0x1]
        %v1269 = vlaneseq
        %v1270 = vshrl.u32 %v1269, 7
        %v1271 = vsub.s32 0, %v1270
        %v1272 = vrot.slane %v1267, %v1271
        %v1275 = vsel %vm360, %v1262, 0
        %1277 = vmatprep.subr.mxu0 0.0
        %1278 = vmatpush1.msra.mxu0 %v1263
        %1279 = vmatprep.subr.mxu0 0.0
        %1280 = vmatpush1.msra.mxu0 %v1264
        %1281 = vmatprep.subr.mxu0 0.0
        %1282 = vmatpush1.msra.mxu0 %v1265
        %1283 = vmatprep.subr.mxu0 0.0
        %1284 = vmatpush1.msra.mxu0 %v1266
        %1285 = vmatprep.subr.mxu0 0.0
        %1286 = vmatpush1.msra.mxu0 0.0
        %1287 = vmatprep.subr.mxu0 0.0
        %1288 = vmatpush1.msra.mxu0 0.0
        %1289 = vmatprep.subr.mxu0 0.0
        %1290 = vmatpush1.msra.mxu0 0.0
        %1291 = vmatprep.subr.mxu0 0.0
        %1292 = vmatpush1.msra.mxu0 0.0
        %1293 = vmatprep.subr.mxu0 0.0
        %1294 = vmatpush1.msra.mxu0 0.0
        %1295 = vmatprep.subr.mxu0 0.0
        %1296 = vmatpush1.msra.mxu0 0.0
        %1297 = vmatprep.subr.mxu0 0.0
        %1298 = vmatpush1.msra.mxu0 0.0
        %1299 = vmatprep.subr.mxu0 0.0
        %1300 = vmatpush1.msra.mxu0 0.0
        %1301 = vmatprep.subr.mxu0 0.0
        %1302 = vmatpush1.msra.mxu0 0.0
        %1303 = vmatprep.subr.mxu0 0.0
        %1304 = vmatpush1.msra.mxu0 0.0
        %1305 = vmatprep.subr.mxu0 0.0
        %1306 = vmatpush1.msra.mxu0 0.0
        %1307 = vmatprep.subr.mxu0 0.0
        %1308 = vmatpush1.msra.mxu0 0.0
        %1309 = vmatprep.subr.mxu0 0.0
        %1310 = vmatpush1.msra.mxu0 0.0
        %1311 = vmatprep.subr.mxu0 0.0
        %1312 = vmatpush1.msra.mxu0 0.0
        %1313 = vmatprep.subr.mxu0 0.0
        %1314 = vmatpush1.msra.mxu0 0.0
        %1315 = vmatprep.subr.mxu0 0.0
        %1316 = vmatpush1.msra.mxu0 0.0
        %1317 = vmatprep.subr.mxu0 0.0
        %1318 = vmatpush1.msra.mxu0 0.0
        %1319 = vmatprep.subr.mxu0 0.0
        %1320 = vmatpush1.msra.mxu0 0.0
        %1321 = vmatprep.subr.mxu0 0.0
        %1322 = vmatpush1.msra.mxu0 0.0
        %1323 = vmatprep.subr.mxu0 0.0
        %1324 = vmatpush1.msra.mxu0 0.0
        %1325 = vmatprep.subr.mxu0 0.0
        %1326 = vmatpush1.msra.mxu0 0.0
        %1327 = vmatprep.subr.mxu0 0.0
        %1328 = vmatpush1.msra.mxu0 0.0
        %1329 = vmatprep.subr.mxu0 0.0
        %1330 = vmatpush1.msra.mxu0 0.0
        %1331 = vmatprep.subr.mxu0 0.0
        %1332 = vmatpush1.msra.mxu0 0.0
        %1333 = vmatprep.subr.mxu0 0.0
        %1334 = vmatpush1.msra.mxu0 0.0
        %1335 = vmatprep.subr.mxu0 0.0
        %1336 = vmatpush1.msra.mxu0 0.0
        %1337 = vmatprep.subr.mxu0 0.0
        %1338 = vmatpush1.msra.mxu0 0.0
        %1339 = vmatprep.subr.mxu0 0.0
        %1340 = vmatpush1.msra.mxu0 0.0
        %1341 = vmatprep.mubr.f32.mxu0 0.0
        %1342 = vmatmul.mubr.f32.gmra.mrb[0].mxu0 %v1275
        %v1343 = vpop.f32.mrb[0].mxu0
        %v1344 = vadd.f32 %v1272, %v1343
        %v1345 = vpop.f32.mrb[0].mxu0
        %1346 = vdwg.mxu0
        %v1347 = vmax.f32 %v1344, 0.0
        %v1348 = vld [vmem:[%s7] sm:$0xff]
        %v1349 = vld [vmem:[%s7 + $0x8] sm:$0xff]
        %v1350 = vld [vmem:[%s7 + $0x10] sm:$0xff]
        %v1351 = vld [vmem:[%s7 + $0x18] sm:$0xff]
        %v1352 = vld [vmem:[%s7 + $0x20] sm:$0xff]
        %v1353 = vld [vmem:[%s7 + $0x28] sm:$0xff]
        %v1354 = vld [vmem:[%s7 + $0x30] sm:$0xff]
        %v1355 = vld [vmem:[%s7 + $0x38] sm:$0xff]
        %v1356 = vld [vmem:[%s8] sm:$0x1]
        %v1358 = vlaneseq
        %v1359 = vshrl.u32 %v1358, 7
        %v1360 = vsub.s32 0, %v1359
        %v1361 = vrot.slane %v1356, %v1360
        %vm1363 = vcmask 523264
        %v1365 = vsel %vm1363, %v1347, 0
        %1367 = vmatprep.subr.mxu0 0.0
        %1368 = vmatpush1.msra.mxu0 %v1348
        %1369 = vmatprep.subr.mxu0 0.0
        %1370 = vmatpush1.msra.mxu0 %v1349
        %1371 = vmatprep.subr.mxu0 0.0
        %1372 = vmatpush1.msra.mxu0 %v1350
        %1373 = vmatprep.subr.mxu0 0.0
        %1374 = vmatpush1.msra.mxu0 %v1351
        %1375 = vmatprep.subr.mxu0 0.0
        %1376 = vmatpush1.msra.mxu0 %v1352
        %1377 = vmatprep.subr.mxu0 0.0
        %1378 = vmatpush1.msra.mxu0 %v1353
        %1379 = vmatprep.subr.mxu0 0.0
        %1380 = vmatpush1.msra.mxu0 %v1354
        %1381 = vmatprep.subr.mxu0 0.0
        %1382 = vmatpush1.msra.mxu0 %v1355
        %1383 = vmatprep.subr.mxu0 0.0
        %1384 = vmatpush1.msra.mxu0 0.0
        %1385 = vmatprep.subr.mxu0 0.0
        %1386 = vmatpush1.msra.mxu0 0.0
        %1387 = vmatprep.subr.mxu0 0.0
        %1388 = vmatpush1.msra.mxu0 0.0
        %1389 = vmatprep.subr.mxu0 0.0
        %1390 = vmatpush1.msra.mxu0 0.0
        %1391 = vmatprep.subr.mxu0 0.0
        %1392 = vmatpush1.msra.mxu0 0.0
        %1393 = vmatprep.subr.mxu0 0.0
        %1394 = vmatpush1.msra.mxu0 0.0
        %1395 = vmatprep.subr.mxu0 0.0
        %1396 = vmatpush1.msra.mxu0 0.0
        %1397 = vmatprep.subr.mxu0 0.0
        %1398 = vmatpush1.msra.mxu0 0.0
        %1399 = vmatprep.subr.mxu0 0.0
        %1400 = vmatpush1.msra.mxu0 0.0
        %1401 = vmatprep.subr.mxu0 0.0
        %1402 = vmatpush1.msra.mxu0 0.0
        %1403 = vmatprep.subr.mxu0 0.0
        %1404 = vmatpush1.msra.mxu0 0.0
        %1405 = vmatprep.subr.mxu0 0.0
        %1406 = vmatpush1.msra.mxu0 0.0
        %1407 = vmatprep.subr.mxu0 0.0
        %1408 = vmatpush1.msra.mxu0 0.0
        %1409 = vmatprep.subr.mxu0 0.0
        %1410 = vmatpush1.msra.mxu0 0.0
        %1411 = vmatprep.subr.mxu0 0.0
        %1412 = vmatpush1.msra.mxu0 0.0
        %1413 = vmatprep.subr.mxu0 0.0
        %1414 = vmatpush1.msra.mxu0 0.0
        %1415 = vmatprep.subr.mxu0 0.0
        %1416 = vmatpush1.msra.mxu0 0.0
        %1417 = vmatprep.subr.mxu0 0.0
        %1418 = vmatpush1.msra.mxu0 0.0
        %1419 = vmatprep.subr.mxu0 0.0
        %1420 = vmatpush1.msra.mxu0 0.0
        %1421 = vmatprep.subr.mxu0 0.0
        %1422 = vmatpush1.msra.mxu0 0.0
        %1423 = vmatprep.subr.mxu0 0.0
        %1424 = vmatpush1.msra.mxu0 0.0
        %1425 = vmatprep.subr.mxu0 0.0
        %1426 = vmatpush1.msra.mxu0 0.0
        %1427 = vmatprep.subr.mxu0 0.0
        %1428 = vmatpush1.msra.mxu0 0.0
        %1429 = vmatprep.subr.mxu0 0.0
        %1430 = vmatpush1.msra.mxu0 0.0
        %1431 = vmatprep.mubr.f32.mxu0 0.0
        %1432 = vmatmul.mubr.f32.gmra.mrb[0].mxu0 %v1365
        %v1433 = vpop.f32.mrb[0].mxu0
        %v1434 = vadd.f32 %v1361, %v1433
        %v1435 = vpop.f32.mrb[0].mxu0
        %1436 = vdwg.mxu0
        %v1437 = vadd.f32 %v1262, %v1434
        %v1438 = vsel %vm360, %v1437, 0.0
        %1439 = vadd.xlane.f32.xlu0 %v1438
        %v1440 = vpop.xlane.xlu0 %1439
        %v1441 = vrot.slane %v1440, 4
        %v1442 = vadd.f32 %v1440, %v1441
        %v1443 = vrot.slane %v1442, 2
        %v1444 = vadd.f32 %v1442, %v1443
        %v1445 = vrot.slane %v1444, 1
        %v1446 = vadd.f32 %v1444, %v1445
        %s1447 = vtos %v1446
        %v1448 = vrcp.pop 256.0
        %s1449 = vtos %v1448
        %s1450 = smul.f32 %s1447, %s1449
        %v1451 = vstv %s1450
        %v1452 = vsub.f32 %v1437, %v1451
        %v1453 = vmul.f32 %v1452, %v1452
        %v1454 = vsel %vm360, %v1453, 0.0
        %1455 = vadd.xlane.f32.xlu0 %v1454
        %v1456 = vpop.xlane.xlu0 %1455
        %v1457 = vrot.slane %v1456, 4
        %v1458 = vadd.f32 %v1456, %v1457
        %v1459 = vrot.slane %v1458, 2
        %v1460 = vadd.f32 %v1458, %v1459
        %v1461 = vrot.slane %v1460, 1
        %v1462 = vadd.f32 %v1460, %v1461
        %s1463 = vtos %v1462
        %v1464 = vrcp.pop 256.0
        %s1465 = vtos %v1464
        %s1466 = smul.f32 %s1463, %s1465
        %s1467 = sadd.f32 %s1466, 1e-06
        %v1468 = vstv %s1467
        %v1469 = vrsqrt.pop %v1468
        %s1470 = vtos %v1469
        %v1471 = vstv %s1470
        %v1472 = vmul.f32 %v1452, %v1471
        %1473 = vst.msk [vmem:[%s347] sm:$0xff] %vm360, %v1472
        %s1474 = sand.u32 %s228, 1
        %s1475 = scalar_lea.sflag [#allocation4], %s1474
        %s1476 = sand.u32 %s228, 1
        %s1477 = smul.addr %s1476, 8
        %s1478 = scalar_lea.vmem [#allocation5], %s1477
        // Predicated region
        $region61: #{tpu_custom_call.1} parent=55 // pred_check
          %p1479 = pneg %p238
        $region62: #{tpu_custom_call.1} parent=55 // pred_check_branch
          %1481 = sbr.rel (%p1479) target = $region64
        $region63: #{tpu_custom_call.1} parent=55 // pred_region
          %s1483 = ssub.s32 128, 128
          %1484 = vsyncadd %s1475, %s1483
          %s1485 = smul.addr %s26, 128
          %s1486 = scalar_lea.hbm %s9, %s1485
          %s1488 = sshll.u32 %s1478, 4
          %s1489 = int_to_ptr.vmem [resolvable:$true] %s1488
          %1491 = dma.vmem_to_hbm [thread:$0]  %s1489, 128, %s1486, %s1475
        $region64: #{tpu_custom_call.1} parent=55 // pred_fallthru
          _
      $region56: #{tpu_custom_call.1} parent=5 // pred_fallthru
        _
      %p1492 = scmp.le.s32.totalorder 2, %s21
      // Predicated region
      $region65: #{tpu_custom_call.1} parent=5 // pred_check
        %p1493 = pneg %p1492
      $region66: #{tpu_custom_call.1} parent=5 // pred_check_branch
        %1495 = sbr.rel (%p1493) target = $region68
      $region67: #{tpu_custom_call.1} parent=5 // pred_region
        %s1496 = ssub.s32 %s21, 2
        // Predicated region
        $region69: #{tpu_custom_call.1} parent=67 // pred_check
          %p1497 = pneg %p244
        $region70: #{tpu_custom_call.1} parent=67 // pred_check_branch
          %1499 = sbr.rel (%p1497) target = $region72
        $region71: #{tpu_custom_call.1} parent=67 // pred_region
          %s1500 = sand.u32 %s229, 1
          %s1501 = scalar_lea.sflag [#allocation4], %s1500
          %s1502 = sand.u32 %s229, 1
          %s1503 = smul.addr %s1502, 8
          %s1504 = scalar_lea.vmem [#allocation5], %s1503
          %1505 = dma.done %s1501, 128
        $region72: #{tpu_custom_call.1} parent=67 // pred_fallthru
          _
      $region68: #{tpu_custom_call.1} parent=5 // pred_fallthru
        _
    $region6: #{tpu_custom_call.1} parent=1 // loop_footer
      %s25 = sadd.s32 1, %s21
    $region7: #{tpu_custom_call.1} parent=1 // loop_footer_branch
      %20 = sbr.rel target = $region3
    $region8: #{tpu_custom_call.1} parent=1 // loop_exit
      _
    %1506 = vsyncpa [#allocation3], 1
    %s1507 = scalar_lea.sflag [#allocation3], 1
    %1508 = vsyncpa %s1507, 1
    %1509 = vsyncpa [#allocation4], 1
    %s1510 = scalar_lea.sflag [#allocation4], 1
    %1511 = vsyncpa %s1510, 1

</llo_original>
